<compile_context>
chip_gen: v5e
topology: v5e:2x2
jax: 0.10.0
libtpu: 0.0.40
codegen_flags: <defaults>
</compile_context>

<pallas_src>
import functools

import jax
import jax.numpy as jnp
from jax.experimental import pallas as pl
from jax.experimental.pallas import tpu as pltpu


def _round_up(x, m):
    return ((x + m - 1) // m) * m


def _vmem_limit_bytes():
    # v5e/v6e have 128 MiB physical VMEM -> allow up to 64 MiB scoped;
    # v7x has 64 MiB -> cap around 40 MiB to leave headroom.
    try:
        cap = int(pltpu.get_tpu_info().vmem_capacity_bytes)
    except Exception:
        cap = 128 * 1024 * 1024
    return min(64 * 1024 * 1024, (cap * 5) // 8)


_VMEM_LIMIT = _vmem_limit_bytes()
_DM_EDGE_TILE = 8  # edges per DistMult grid step (sublane-aligned output)


def _pick_node_tile(n):
    # Larger adj tiles push the HBM-bound N^2 bf16 adj stream toward the
    # roofline and amortize per-grid-step overhead, but keep >= 2 row tiles
    # (so v7x's 2 TensorCores both get work) and bound zero-padding waste.
    for t in (512, 256):
        if n >= 2 * t and _round_up(n, t) <= (5 * n) // 4:
            return t
    return 128


def _pick_k_tile(fin_pad):
    if fin_pad <= 512:
        return fin_pad
    for t in (512, 256, 128):
        if fin_pad % t == 0:
            return t
    return 128  # unreachable: fin_pad is always a multiple of 128


# ---------------------------------------------------------------------------
# Feature transform:  S = x @ W   (computed ONCE, bf16 output for the MXU)
# ---------------------------------------------------------------------------
def _xw_kernel(x_ref, w_ref, s_ref, acc_ref):
    k = pl.program_id(1)

    @pl.when(k == 0)
    def _():
        acc_ref[...] = jnp.zeros_like(acc_ref)

    acc_ref[...] += jnp.dot(x_ref[...], w_ref[...],
                            preferred_element_type=jnp.float32)

    @pl.when(k == pl.num_programs(1) - 1)
    def _():
        s_ref[...] = acc_ref[...].astype(s_ref.dtype)


def _feature_transform(x_b, w_b, *, tile_m):
    m_pad, fin_pad = x_b.shape
    fout_pad = w_b.shape[1]
    tile_k = _pick_k_tile(fin_pad)
    grid_m = m_pad // tile_m
    grid_k = fin_pad // tile_k

    cost = pl.CostEstimate(
        flops=2 * m_pad * fin_pad * fout_pad,
        transcendentals=0,
        bytes_accessed=(m_pad * fin_pad * 2
                        + grid_m * fin_pad * fout_pad * 2
                        + m_pad * fout_pad * 2))

    return pl.pallas_call(
        _xw_kernel,
        out_shape=jax.ShapeDtypeStruct((m_pad, fout_pad), jnp.bfloat16),
        grid=(grid_m, grid_k),
        in_specs=[
            pl.BlockSpec((tile_m, tile_k), lambda i, k: (i, k)),
            pl.BlockSpec((tile_k, fout_pad), lambda i, k: (k, 0)),
        ],
        out_specs=pl.BlockSpec((tile_m, fout_pad), lambda i, k: (i, 0)),
        scratch_shapes=[pltpu.VMEM((tile_m, fout_pad), jnp.float32)],
        compiler_params=pltpu.CompilerParams(
            dimension_semantics=("parallel", "arbitrary"),
            vmem_limit_bytes=_VMEM_LIMIT),
        cost_estimate=cost,
    )(x_b, w_b)


# ---------------------------------------------------------------------------
# Aggregation:  out = maybe_relu(adj @ S + b)
# ---------------------------------------------------------------------------
def _agg_kernel_bf16(adj_ref, s_ref, b_ref, out_ref, acc_ref, *, apply_relu):
    # bf16 output path: f32 scratch accumulator, epilogue on last k step.
    k = pl.program_id(1)

    @pl.when(k == 0)
    def _():
        acc_ref[...] = jnp.zeros_like(acc_ref)

    acc_ref[...] += jnp.dot(adj_ref[...], s_ref[...],
                            preferred_element_type=jnp.float32)

    @pl.when(k == pl.num_programs(1) - 1)
    def _():
        r = acc_ref[...] + b_ref[...]
        if apply_relu:
            r = jnp.maximum(r, 0.0)
        out_ref[...] = r.astype(out_ref.dtype)


def _agg_kernel_f32(adj_ref, s_ref, b_ref, out_ref, *, apply_relu):
    # f32 output path: accumulate directly into the resident output block
    # (its index_map ignores k), initialized with the bias -> no scratch,
    # no final copy.
    k = pl.program_id(1)

    @pl.when(k == 0)
    def _():
        out_ref[...] = jnp.broadcast_to(b_ref[...], out_ref.shape)

    out_ref[...] += jnp.dot(adj_ref[...], s_ref[...],
                            preferred_element_type=jnp.float32)

    if apply_relu:
        @pl.when(k == pl.num_programs(1) - 1)
        def _():
            out_ref[...] = jnp.maximum(out_ref[...], 0.0)


def _gcn_aggregate(adj_b, s_b, b_f32, *, tile, apply_relu, out_dtype):
    n_pad = adj_b.shape[0]
    fout_pad = s_b.shape[1]
    grid_m = n_pad // tile
    grid_k = n_pad // tile
    out_elem_bytes = 2 if out_dtype == jnp.bfloat16 else 4

    cost = pl.CostEstimate(
        flops=2 * n_pad * n_pad * fout_pad,
        transcendentals=0,
        bytes_accessed=(n_pad * n_pad * 2                    # adj (bf16)
                        + grid_m * n_pad * fout_pad * 2      # S re-stream
                        + fout_pad * 4                       # bias
                        + n_pad * fout_pad * out_elem_bytes))

    common = dict(
        out_shape=jax.ShapeDtypeStruct((n_pad, fout_pad), out_dtype),
        grid=(grid_m, grid_k),
        in_specs=[
            pl.BlockSpec((tile, tile), lambda i, k: (i, k)),        # adj tile
            pl.BlockSpec((tile, fout_pad), lambda i, k: (k, 0)),    # S rows k
            pl.BlockSpec((1, fout_pad), lambda i, k: (0, 0)),       # bias
        ],
        out_specs=pl.BlockSpec((tile, fout_pad), lambda i, k: (i, 0)),
        compiler_params=pltpu.CompilerParams(
            dimension_semantics=("parallel", "arbitrary"),
            vmem_limit_bytes=_VMEM_LIMIT),
        cost_estimate=cost,
    )

    if out_dtype == jnp.float32:
        return pl.pallas_call(
            functools.partial(_agg_kernel_f32, apply_relu=apply_relu),
            **common,
        )(adj_b, s_b, b_f32)

    return pl.pallas_call(
        functools.partial(_agg_kernel_bf16, apply_relu=apply_relu),
        scratch_shapes=[pltpu.VMEM((tile, fout_pad), jnp.float32)],
        **common,
    )(adj_b, s_b, b_f32)


# ---------------------------------------------------------------------------
# DistMult scoring: score[e] = sum_f emb[src_e, f] * dm[f] * emb[dst_e, f]
# Scalar-prefetched indices + manual DMA row gather (no O(E*N*F) matmul).
# ---------------------------------------------------------------------------
def _distmult_kernel(tp_ref, dm_ref, emb_hbm, out_ref, src_buf, dst_buf, sem):
    et = pl.program_id(0)
    base = et * _DM_EDGE_TILE

    # Issue all row-gather DMAs for this edge tile (src + dst).
    for j in range(_DM_EDGE_TILE):
        s = tp_ref[base + j, 0]
        d = tp_ref[base + j, 1]
        pltpu.make_async_copy(emb_hbm.at[pl.ds(s, 1)],
                              src_buf.at[pl.ds(j, 1)], sem.at[0, j]).start()
        pltpu.make_async_copy(emb_hbm.at[pl.ds(d, 1)],
                              dst_buf.at[pl.ds(j, 1)], sem.at[1, j]).start()
    for j in range(_DM_EDGE_TILE):
        pltpu.make_async_copy(emb_hbm.at[pl.ds(0, 1)],
                              src_buf.at[pl.ds(j, 1)], sem.at[0, j]).wait()
        pltpu.make_async_copy(emb_hbm.at[pl.ds(0, 1)],
                              dst_buf.at[pl.ds(j, 1)], sem.at[1, j]).wait()

    prod = src_buf[...] * dm_ref[...] * dst_buf[...]       # (TE, F) f32
    scores = jnp.sum(prod, axis=1, keepdims=True)          # (TE, 1)
    # Lane-dense, unmasked store (broadcast across the 128-lane axis);
    # the wrapper keeps lane 0.
    out_ref[...] = jnp.broadcast_to(scores, out_ref.shape)


def _distmult_scores(emb, dm_p, tp_p):
    n_pad, nout_p = emb.shape
    e_pad = tp_p.shape[0]
    grid_e = e_pad // _DM_EDGE_TILE

    cost = pl.CostEstimate(
        flops=3 * e_pad * nout_p,
        transcendentals=0,
        bytes_accessed=(2 * e_pad * nout_p * 4 + nout_p * 4
                        + e_pad * 2 * 4 + e_pad * 128 * 4))

    return pl.pallas_call(
        _distmult_kernel,
        out_shape=jax.ShapeDtypeStruct((e_pad, 128), jnp.float32),
        grid_spec=pltpu.PrefetchScalarGridSpec(
            num_scalar_prefetch=1,                 # to_pred -> SMEM
            grid=(grid_e,),
            in_specs=[
                pl.BlockSpec((1, nout_p), lambda et, tp: (0, 0)),   # distmult
                pl.BlockSpec(memory_space=pl.ANY),                  # emb (HBM)
            ],
            out_specs=pl.BlockSpec((_DM_EDGE_TILE, 128),
                                   lambda et, tp: (et, 0)),
            scratch_shapes=[
                pltpu.VMEM((_DM_EDGE_TILE, nout_p), jnp.float32),   # src rows
                pltpu.VMEM((_DM_EDGE_TILE, nout_p), jnp.float32),   # dst rows
                pltpu.SemaphoreType.DMA((2, _DM_EDGE_TILE)),
            ]),
        compiler_params=pltpu.CompilerParams(
            dimension_semantics=("parallel",),
            vmem_limit_bytes=_VMEM_LIMIT),
        cost_estimate=cost,
    )(tp_p, dm_p, emb)


# ---------------------------------------------------------------------------
# Wrapper
# ---------------------------------------------------------------------------
def gcnlink_forward(x, adj, to_pred, params):
    """x: (N, nfeat) f32, adj: (N, N) f32, to_pred: (E, 2) int32 -> (E,) f32."""
    w1, b1, w2, b2, dm = params
    n, nfeat = x.shape
    nhid = w1.shape[1]
    nout = w2.shape[1]
    e = to_pred.shape[0]

    tile = _pick_node_tile(n)
    n_pad = _round_up(n, tile)
    nfeat_p = _round_up(nfeat, 128)
    nhid_p = _round_up(nhid, 128)
    nout_p = _round_up(nout, 128)
    e_pad = _round_up(e, _DM_EDGE_TILE)

    def pad2(a, rows, cols):
        return jnp.pad(a, ((0, rows - a.shape[0]), (0, cols - a.shape[1])))

    adj_b = pad2(adj, n_pad, n_pad).astype(jnp.bfloat16)
    x_b = pad2(x, n_pad, nfeat_p).astype(jnp.bfloat16)
    w1_b = pad2(w1, nfeat_p, nhid_p).astype(jnp.bfloat16)
    w2_b = pad2(w2, nhid_p, nout_p).astype(jnp.bfloat16)
    b1_p = jnp.pad(b1, (0, nhid_p - nhid)).reshape(1, nhid_p).astype(jnp.float32)
    b2_p = jnp.pad(b2, (0, nout_p - nout)).reshape(1, nout_p).astype(jnp.float32)
    dm_p = jnp.pad(dm, (0, nout_p - nout)).reshape(1, nout_p).astype(jnp.float32)
    tp_p = jnp.pad(to_pred, ((0, e_pad - e), (0, 0))).astype(jnp.int32)

    # Layer 1: S1 = x @ W1 hoisted (computed once), then
    # h = relu(adj @ S1 + b1), kept bf16 for the next MXU pass.
    s1 = _feature_transform(x_b, w1_b, tile_m=tile)
    h = _gcn_aggregate(adj_b, s1, b1_p, tile=tile, apply_relu=True,
                       out_dtype=jnp.bfloat16)
    # Dropout: identity in eval mode.
    # Layer 2: S2 = h @ W2 hoisted, then emb = adj @ S2 + b2 in f32.
    s2 = _feature_transform(h, w2_b, tile_m=tile)
    emb = _gcn_aggregate(adj_b, s2, b2_p, tile=tile, apply_relu=False,
                         out_dtype=jnp.float32)

    scores = _distmult_scores(emb, dm_p, tp_p)
    return scores[:e, 0]


def reference_forward(x, adj, to_pred, params):
    """Pure-JAX reference mirroring the kernel's bf16-matmul / f32-accumulate
    dtype strategy (the original torch module is f32 end to end)."""
    w1, b1, w2, b2, dm = params
    bf, f32 = jnp.bfloat16, jnp.float32
    adj_b = adj.astype(bf)
    s1 = jnp.dot(x.astype(bf), w1.astype(bf), preferred_element_type=f32)
    h = jnp.maximum(jnp.dot(adj_b, s1.astype(bf), preferred_element_type=f32)
                    + b1, 0.0)
    s2 = jnp.dot(h.astype(bf), w2.astype(bf), preferred_element_type=f32)
    emb = jnp.dot(adj_b, s2.astype(bf), preferred_element_type=f32) + b2
    src = emb[to_pred[:, 0]]
    dst = emb[to_pred[:, 1]]
    return jnp.sum(src * dm * dst, axis=1)


if __name__ == "__main__":
    # Small shapes consistent with the module: N nodes, nfeat -> nhid -> nout.
    N, nfeat, nhid, nout, E = 16, 8, 32, 16, 8

    key = jax.random.PRNGKey(0)
    k_x, k_adj, k_w1, k_b1, k_w2, k_b2, k_dm, k_tp = jax.random.split(key, 8)

    x = jax.random.normal(k_x, (N, nfeat), dtype=jnp.float32)

    # Symmetric row-normalized dense adjacency (deterministic).
    a = (jax.random.uniform(k_adj, (N, N)) > 0.7).astype(jnp.float32)
    a = jnp.maximum(a, a.T) + jnp.eye(N, dtype=jnp.float32)
    adj = a / jnp.sum(a, axis=1, keepdims=True)

    def unif(k, shape, scale):
        return jax.random.uniform(k, shape, minval=-scale, maxval=scale,
                                  dtype=jnp.float32)

    w1 = unif(k_w1, (nfeat, nhid), 1.0 / jnp.sqrt(nhid))
    b1 = unif(k_b1, (nhid,), 1.0 / jnp.sqrt(nhid))
    w2 = unif(k_w2, (nhid, nout), 1.0 / jnp.sqrt(nout))
    b2 = unif(k_b2, (nout,), 1.0 / jnp.sqrt(nout))
    dm = jax.random.uniform(k_dm, (nout,), dtype=jnp.float32)  # torch.rand(nout)
    params = (w1, b1, w2, b2, dm)

    to_pred = jax.random.randint(k_tp, (E, 2), 0, N, dtype=jnp.int32)

    out = jax.block_until_ready(jax.jit(gcnlink_forward)(x, adj, to_pred, params))
    ref = jax.block_until_ready(reference_forward(x, adj, to_pred, params))

    assert out.shape == (E,)
    assert jnp.allclose(out, ref, atol=1e-2, rtol=1e-2), (out, ref)

    print("KERNEL_OK")
</pallas_src>

<mosaic_0001>
module attributes {stable_mosaic.version = 11 : i64} {
  func.func @_agg_kernel_bf16(%arg0: i32, %arg1: i32, %arg2: memref<128x128xbf16, #tpu.memory_space<vmem>>, %arg3: memref<128x128xbf16, #tpu.memory_space<vmem>>, %arg4: memref<1x128xf32, #tpu.memory_space<vmem>>, %arg5: memref<128x128xbf16, #tpu.memory_space<vmem>>, %arg6: memref<128x128xf32, #tpu.memory_space<vmem>>) attributes {dimension_semantics = [#tpu.dimension_semantics<parallel>, #tpu.dimension_semantics<arbitrary>], iteration_bounds = array<i64: 1, 1>, scalar_prefetch = 0 : i64, scratch_operands = 1 : i64, tpu.core_type = #tpu.core_type<tc>, window_params = [{transform_indices = @transform_0, window_bounds = array<i64: 128, 128>}, {transform_indices = @transform_1, window_bounds = array<i64: 128, 128>}, {pipeline_mode = #tpu.pipeline_mode<synchronous>, transform_indices = @transform_2, window_bounds = array<i64: 1, 128>}, {transform_indices = @transform_3, window_bounds = array<i64: 128, 128>}]} {
    %c0_i32 = arith.constant 0 : i32
    %0 = arith.cmpi eq, %arg1, %c0_i32 : i32
    %1 = arith.extui %0 : i1 to i32
    %c0_i32_0 = arith.constant 0 : i32
    %2 = arith.cmpi ne, %1, %c0_i32_0 : i32
    scf.if %2 {
      %cst_10 = arith.constant 0.000000e+00 : f32
      %12 = vector.broadcast %cst_10 : f32 to vector<128x128xf32>
      %c0_11 = arith.constant 0 : index
      %c0_12 = arith.constant 0 : index
      %13 = vector.load %arg6[%c0_11, %c0_12] : memref<128x128xf32, #tpu.memory_space<vmem>>, vector<128x128xf32>
      tpu.vector_store %arg6[%c0_11, %c0_12], %12 {strides = array<i32>} : memref<128x128xf32, #tpu.memory_space<vmem>>, vector<128x128xf32>,
    } else {
    }
    %c0 = arith.constant 0 : index
    %c0_1 = arith.constant 0 : index
    %3 = vector.load %arg6[%c0, %c0_1] : memref<128x128xf32, #tpu.memory_space<vmem>>, vector<128x128xf32>
    %c0_2 = arith.constant 0 : index
    %c0_3 = arith.constant 0 : index
    %4 = vector.load %arg2[%c0_2, %c0_3] : memref<128x128xbf16, #tpu.memory_space<vmem>>, vector<128x128xbf16>
    %c0_4 = arith.constant 0 : index
    %c0_5 = arith.constant 0 : index
    %5 = vector.load %arg3[%c0_4, %c0_5] : memref<128x128xbf16, #tpu.memory_space<vmem>>, vector<128x128xbf16>
    %cst = arith.constant dense<0.000000e+00> : vector<128x128xf32>
    %6 = tpu.matmul %4, %5, %cst {dimension_numbers = #tpu.dot_dimension_numbers<[1], [0], [0], [1], [0, 0, 1, 1], [], []>} : vector<128x128xbf16>, vector<128x128xbf16>, vector<128x128xf32> -> vector<128x128xf32>
    %7 = arith.addf %3, %6 : vector<128x128xf32>
    %c0_6 = arith.constant 0 : index
    %c0_7 = arith.constant 0 : index
    %8 = vector.load %arg6[%c0_6, %c0_7] : memref<128x128xf32, #tpu.memory_space<vmem>>, vector<128x128xf32>
    tpu.vector_store %arg6[%c0_6, %c0_7], %7 {strides = array<i32>} : memref<128x128xf32, #tpu.memory_space<vmem>>, vector<128x128xf32>,
    %c0_i32_8 = arith.constant 0 : i32
    %9 = arith.cmpi eq, %arg1, %c0_i32_8 : i32
    %10 = arith.extui %9 : i1 to i32
    %c0_i32_9 = arith.constant 0 : i32
    %11 = arith.cmpi ne, %10, %c0_i32_9 : i32
    scf.if %11 {
      %c0_10 = arith.constant 0 : index
      %c0_11 = arith.constant 0 : index
      %12 = vector.load %arg6[%c0_10, %c0_11] : memref<128x128xf32, #tpu.memory_space<vmem>>, vector<128x128xf32>
      %c0_12 = arith.constant 0 : index
      %c0_13 = arith.constant 0 : index
      %13 = vector.load %arg4[%c0_12, %c0_13] : memref<1x128xf32, #tpu.memory_space<vmem>>, vector<1x128xf32>
      %14 = vector.broadcast %13 : vector<1x128xf32> to vector<128x128xf32>
      %15 = arith.addf %12, %14 : vector<128x128xf32>
      %cst_14 = arith.constant 0.000000e+00 : f32
      %16 = vector.broadcast %cst_14 : f32 to vector<128x128xf32>
      %17 = arith.maximumf %15, %16 : vector<128x128xf32>
      %18 = arith.truncf %17 : vector<128x128xf32> to vector<128x128xbf16>
      %c0_15 = arith.constant 0 : index
      %c0_16 = arith.constant 0 : index
      %19 = vector.load %arg5[%c0_15, %c0_16] : memref<128x128xbf16, #tpu.memory_space<vmem>>, vector<128x128xbf16>
      tpu.vector_store %arg5[%c0_15, %c0_16], %18 {strides = array<i32>} : memref<128x128xbf16, #tpu.memory_space<vmem>>, vector<128x128xbf16>,
    } else {
    }
    return
  }
  func.func @transform_0(%arg0: i32, %arg1: i32) -> (i32, i32) {
    %c0_i32 = arith.constant 0 : i32
    return %arg0, %arg1 : i32, i32
  }
  func.func @transform_1(%arg0: i32, %arg1: i32) -> (i32, i32) {
    %c0_i32 = arith.constant 0 : i32
    %c0_i32_0 = arith.constant 0 : i32
    return %arg1, %c0_i32 : i32, i32
  }
  func.func @transform_2(%arg0: i32, %arg1: i32) -> (i32, i32) {
    %c0_i32 = arith.constant 0 : i32
    %c0_i32_0 = arith.constant 0 : i32
    %c0_i32_1 = arith.constant 0 : i32
    return %c0_i32, %c0_i32_0 : i32, i32
  }
  func.func @transform_3(%arg0: i32, %arg1: i32) -> (i32, i32) {
    %c0_i32 = arith.constant 0 : i32
    %c0_i32_0 = arith.constant 0 : i32
    return %arg0, %c0_i32 : i32, i32
  }
}

module attributes {stable_mosaic.version = 11 : i64} {
  func.func @_xw_kernel(%arg0: i32, %arg1: i32, %arg2: memref<128x128xbf16, #tpu.memory_space<vmem>>, %arg3: memref<128x128xbf16, #tpu.memory_space<vmem>>, %arg4: memref<128x128xbf16, #tpu.memory_space<vmem>>, %arg5: memref<128x128xf32, #tpu.memory_space<vmem>>) attributes {dimension_semantics = [#tpu.dimension_semantics<parallel>, #tpu.dimension_semantics<arbitrary>], iteration_bounds = array<i64: 1, 1>, scalar_prefetch = 0 : i64, scratch_operands = 1 : i64, tpu.core_type = #tpu.core_type<tc>, window_params = [{transform_indices = @transform_0, window_bounds = array<i64: 128, 128>}, {transform_indices = @transform_1, window_bounds = array<i64: 128, 128>}, {transform_indices = @transform_2, window_bounds = array<i64: 128, 128>}]} {
    %c0_i32 = arith.constant 0 : i32
    %0 = arith.cmpi eq, %arg1, %c0_i32 : i32
    %1 = arith.extui %0 : i1 to i32
    %c0_i32_0 = arith.constant 0 : i32
    %2 = arith.cmpi ne, %1, %c0_i32_0 : i32
    scf.if %2 {
      %cst_10 = arith.constant 0.000000e+00 : f32
      %12 = vector.broadcast %cst_10 : f32 to vector<128x128xf32>
      %c0_11 = arith.constant 0 : index
      %c0_12 = arith.constant 0 : index
      %13 = vector.load %arg5[%c0_11, %c0_12] : memref<128x128xf32, #tpu.memory_space<vmem>>, vector<128x128xf32>
      tpu.vector_store %arg5[%c0_11, %c0_12], %12 {strides = array<i32>} : memref<128x128xf32, #tpu.memory_space<vmem>>, vector<128x128xf32>,
    } else {
    }
    %c0 = arith.constant 0 : index
    %c0_1 = arith.constant 0 : index
    %3 = vector.load %arg5[%c0, %c0_1] : memref<128x128xf32, #tpu.memory_space<vmem>>, vector<128x128xf32>
    %c0_2 = arith.constant 0 : index
    %c0_3 = arith.constant 0 : index
    %4 = vector.load %arg2[%c0_2, %c0_3] : memref<128x128xbf16, #tpu.memory_space<vmem>>, vector<128x128xbf16>
    %c0_4 = arith.constant 0 : index
    %c0_5 = arith.constant 0 : index
    %5 = vector.load %arg3[%c0_4, %c0_5] : memref<128x128xbf16, #tpu.memory_space<vmem>>, vector<128x128xbf16>
    %cst = arith.constant dense<0.000000e+00> : vector<128x128xf32>
    %6 = tpu.matmul %4, %5, %cst {dimension_numbers = #tpu.dot_dimension_numbers<[1], [0], [0], [1], [0, 0, 1, 1], [], []>} : vector<128x128xbf16>, vector<128x128xbf16>, vector<128x128xf32> -> vector<128x128xf32>
    %7 = arith.addf %3, %6 : vector<128x128xf32>
    %c0_6 = arith.constant 0 : index
    %c0_7 = arith.constant 0 : index
    %8 = vector.load %arg5[%c0_6, %c0_7] : memref<128x128xf32, #tpu.memory_space<vmem>>, vector<128x128xf32>
    tpu.vector_store %arg5[%c0_6, %c0_7], %7 {strides = array<i32>} : memref<128x128xf32, #tpu.memory_space<vmem>>, vector<128x128xf32>,
    %c0_i32_8 = arith.constant 0 : i32
    %9 = arith.cmpi eq, %arg1, %c0_i32_8 : i32
    %10 = arith.extui %9 : i1 to i32
    %c0_i32_9 = arith.constant 0 : i32
    %11 = arith.cmpi ne, %10, %c0_i32_9 : i32
    scf.if %11 {
      %c0_10 = arith.constant 0 : index
      %c0_11 = arith.constant 0 : index
      %12 = vector.load %arg5[%c0_10, %c0_11] : memref<128x128xf32, #tpu.memory_space<vmem>>, vector<128x128xf32>
      %13 = arith.truncf %12 : vector<128x128xf32> to vector<128x128xbf16>
      %c0_12 = arith.constant 0 : index
      %c0_13 = arith.constant 0 : index
      %14 = vector.load %arg4[%c0_12, %c0_13] : memref<128x128xbf16, #tpu.memory_space<vmem>>, vector<128x128xbf16>
      tpu.vector_store %arg4[%c0_12, %c0_13], %13 {strides = array<i32>} : memref<128x128xbf16, #tpu.memory_space<vmem>>, vector<128x128xbf16>,
    } else {
    }
    return
  }
  func.func @transform_0(%arg0: i32, %arg1: i32) -> (i32, i32) {
    %c0_i32 = arith.constant 0 : i32
    return %arg0, %arg1 : i32, i32
  }
  func.func @transform_1(%arg0: i32, %arg1: i32) -> (i32, i32) {
    %c0_i32 = arith.constant 0 : i32
    %c0_i32_0 = arith.constant 0 : i32
    return %arg1, %c0_i32 : i32, i32
  }
  func.func @transform_2(%arg0: i32, %arg1: i32) -> (i32, i32) {
    %c0_i32 = arith.constant 0 : i32
    %c0_i32_0 = arith.constant 0 : i32
    return %arg0, %c0_i32 : i32, i32
  }
}

module attributes {stable_mosaic.version = 11 : i64} {
  func.func @_agg_kernel_f32(%arg0: i32, %arg1: i32, %arg2: memref<128x128xbf16, #tpu.memory_space<vmem>>, %arg3: memref<128x128xbf16, #tpu.memory_space<vmem>>, %arg4: memref<1x128xf32, #tpu.memory_space<vmem>>, %arg5: memref<128x128xf32, #tpu.memory_space<vmem>>) attributes {dimension_semantics = [#tpu.dimension_semantics<parallel>, #tpu.dimension_semantics<arbitrary>], iteration_bounds = array<i64: 1, 1>, scalar_prefetch = 0 : i64, scratch_operands = 0 : i64, tpu.core_type = #tpu.core_type<tc>, window_params = [{transform_indices = @transform_0, window_bounds = array<i64: 128, 128>}, {transform_indices = @transform_1, window_bounds = array<i64: 128, 128>}, {pipeline_mode = #tpu.pipeline_mode<synchronous>, transform_indices = @transform_2, window_bounds = array<i64: 1, 128>}, {transform_indices = @transform_3, window_bounds = array<i64: 128, 128>}]} {
    %c0_i32 = arith.constant 0 : i32
    %0 = arith.cmpi eq, %arg1, %c0_i32 : i32
    %1 = arith.extui %0 : i1 to i32
    %c0_i32_0 = arith.constant 0 : i32
    %2 = arith.cmpi ne, %1, %c0_i32_0 : i32
    scf.if %2 {
      %c0_8 = arith.constant 0 : index
      %c0_9 = arith.constant 0 : index
      %9 = vector.load %arg4[%c0_8, %c0_9] : memref<1x128xf32, #tpu.memory_space<vmem>>, vector<1x128xf32>
      %10 = vector.shape_cast %9 : vector<1x128xf32> to vector<1x128xf32>
      %11 = vector.broadcast %10 : vector<1x128xf32> to vector<128x128xf32>
      %c0_10 = arith.constant 0 : index
      %c0_11 = arith.constant 0 : index
      %12 = vector.load %arg5[%c0_10, %c0_11] : memref<128x128xf32, #tpu.memory_space<vmem>>, vector<128x128xf32>
      tpu.vector_store %arg5[%c0_10, %c0_11], %11 {strides = array<i32>} : memref<128x128xf32, #tpu.memory_space<vmem>>, vector<128x128xf32>,
    } else {
    }
    %c0 = arith.constant 0 : index
    %c0_1 = arith.constant 0 : index
    %3 = vector.load %arg5[%c0, %c0_1] : memref<128x128xf32, #tpu.memory_space<vmem>>, vector<128x128xf32>
    %c0_2 = arith.constant 0 : index
    %c0_3 = arith.constant 0 : index
    %4 = vector.load %arg2[%c0_2, %c0_3] : memref<128x128xbf16, #tpu.memory_space<vmem>>, vector<128x128xbf16>
    %c0_4 = arith.constant 0 : index
    %c0_5 = arith.constant 0 : index
    %5 = vector.load %arg3[%c0_4, %c0_5] : memref<128x128xbf16, #tpu.memory_space<vmem>>, vector<128x128xbf16>
    %cst = arith.constant dense<0.000000e+00> : vector<128x128xf32>
    %6 = tpu.matmul %4, %5, %cst {dimension_numbers = #tpu.dot_dimension_numbers<[1], [0], [0], [1], [0, 0, 1, 1], [], []>} : vector<128x128xbf16>, vector<128x128xbf16>, vector<128x128xf32> -> vector<128x128xf32>
    %7 = arith.addf %3, %6 : vector<128x128xf32>
    %c0_6 = arith.constant 0 : index
    %c0_7 = arith.constant 0 : index
    %8 = vector.load %arg5[%c0_6, %c0_7] : memref<128x128xf32, #tpu.memory_space<vmem>>, vector<128x128xf32>
    tpu.vector_store %arg5[%c0_6, %c0_7], %7 {strides = array<i32>} : memref<128x128xf32, #tpu.memory_space<vmem>>, vector<128x128xf32>,
    return
  }
  func.func @transform_0(%arg0: i32, %arg1: i32) -> (i32, i32) {
    %c0_i32 = arith.constant 0 : i32
    return %arg0, %arg1 : i32, i32
  }
  func.func @transform_1(%arg0: i32, %arg1: i32) -> (i32, i32) {
    %c0_i32 = arith.constant 0 : i32
    %c0_i32_0 = arith.constant 0 : i32
    return %arg1, %c0_i32 : i32, i32
  }
  func.func @transform_2(%arg0: i32, %arg1: i32) -> (i32, i32) {
    %c0_i32 = arith.constant 0 : i32
    %c0_i32_0 = arith.constant 0 : i32
    %c0_i32_1 = arith.constant 0 : i32
    return %c0_i32, %c0_i32_0 : i32, i32
  }
  func.func @transform_3(%arg0: i32, %arg1: i32) -> (i32, i32) {
    %c0_i32 = arith.constant 0 : i32
    %c0_i32_0 = arith.constant 0 : i32
    return %arg0, %c0_i32 : i32, i32
  }
}

module attributes {stable_mosaic.version = 11 : i64} {
  func.func @_distmult_kernel(%arg0: i32, %arg1: memref<8x2xi32, #tpu.memory_space<smem>>, %arg2: memref<1x128xf32, #tpu.memory_space<vmem>>, %arg3: memref<128x128xf32, #tpu.memory_space<any>>, %arg4: memref<8x128xf32, #tpu.memory_space<vmem>>, %arg5: memref<8x128xf32, #tpu.memory_space<vmem>>, %arg6: memref<8x128xf32, #tpu.memory_space<vmem>>, %arg7: memref<2x8x!tpu.dma_semaphore, #tpu.memory_space<semaphore_mem>>) attributes {dimension_semantics = [#tpu.dimension_semantics<parallel>], iteration_bounds = array<i64: 1>, scalar_prefetch = 1 : i64, scratch_operands = 3 : i64, tpu.core_type = #tpu.core_type<tc>, window_params = [{pipeline_mode = #tpu.pipeline_mode<synchronous>, transform_indices = @transform_0, window_bounds = array<i64: 1, 128>}, {}, {transform_indices = @transform_2, window_bounds = array<i64: 8, 128>}]} {
    %c8_i32 = arith.constant 8 : i32
    %0 = arith.muli %arg0, %c8_i32 : i32
    %c0_i32 = arith.constant 0 : i32
    %1 = arith.addi %0, %c0_i32 : i32
    %2 = arith.index_cast %1 : i32 to index
    %c0 = arith.constant 0 : index
    %3 = memref.load %arg1[%2, %c0] : memref<8x2xi32, #tpu.memory_space<smem>>
    %c0_i32_0 = arith.constant 0 : i32
    %4 = arith.addi %0, %c0_i32_0 : i32
    %5 = arith.index_cast %4 : i32 to index
    %c1 = arith.constant 1 : index
    %6 = memref.load %arg1[%5, %c1] : memref<8x2xi32, #tpu.memory_space<smem>>
    %c0_i32_1 = arith.constant 0 : i32
    %c0_i32_2 = arith.constant 0 : i32
    %c0_i32_3 = arith.constant 0 : i32
    %7 = tpu.memref_slice %arg3[%3, %c0_i32_3] : memref<128x128xf32, #tpu.memory_space<any>> -> memref<1x128xf32, #tpu.memory_space<any>>
    %c0_i32_4 = arith.constant 0 : i32
    %c0_i32_5 = arith.constant 0 : i32
    %8 = tpu.memref_slice %arg5[%c0_i32_4, %c0_i32_5] : memref<8x128xf32, #tpu.memory_space<vmem>> -> memref<1x128xf32, #tpu.memory_space<vmem>>
    %9 = tpu.memref_slice %arg7[%c0_i32_1, %c0_i32_2] : memref<2x8x!tpu.dma_semaphore, #tpu.memory_space<semaphore_mem>> -> memref<1x1x!tpu.dma_semaphore, #tpu.memory_space<semaphore_mem>>
    %10 = tpu.memref_squeeze %9 : memref<1x1x!tpu.dma_semaphore, #tpu.memory_space<semaphore_mem>> -> memref<!tpu.dma_semaphore, #tpu.memory_space<semaphore_mem>>
    tpu.enqueue_dma source(%7 : memref<1x128xf32, #tpu.memory_space<any>>) target(%8 : memref<1x128xf32, #tpu.memory_space<vmem>>) target_semaphore(%10 : memref<!tpu.dma_semaphore, #tpu.memory_space<semaphore_mem>>)
    %c1_i32 = arith.constant 1 : i32
    %c0_i32_6 = arith.constant 0 : i32
    %c0_i32_7 = arith.constant 0 : i32
    %11 = tpu.memref_slice %arg3[%6, %c0_i32_7] : memref<128x128xf32, #tpu.memory_space<any>> -> memref<1x128xf32, #tpu.memory_space<any>>
    %c0_i32_8 = arith.constant 0 : i32
    %c0_i32_9 = arith.constant 0 : i32
    %12 = tpu.memref_slice %arg6[%c0_i32_8, %c0_i32_9] : memref<8x128xf32, #tpu.memory_space<vmem>> -> memref<1x128xf32, #tpu.memory_space<vmem>>
    %13 = tpu.memref_slice %arg7[%c1_i32, %c0_i32_6] : memref<2x8x!tpu.dma_semaphore, #tpu.memory_space<semaphore_mem>> -> memref<1x1x!tpu.dma_semaphore, #tpu.memory_space<semaphore_mem>>
    %14 = tpu.memref_squeeze %13 : memref<1x1x!tpu.dma_semaphore, #tpu.memory_space<semaphore_mem>> -> memref<!tpu.dma_semaphore, #tpu.memory_space<semaphore_mem>>
    tpu.enqueue_dma source(%11 : memref<1x128xf32, #tpu.memory_space<any>>) target(%12 : memref<1x128xf32, #tpu.memory_space<vmem>>) target_semaphore(%14 : memref<!tpu.dma_semaphore, #tpu.memory_space<semaphore_mem>>)
    %c1_i32_10 = arith.constant 1 : i32
    %15 = arith.addi %0, %c1_i32_10 : i32
    %16 = arith.index_cast %15 : i32 to index
    %c0_11 = arith.constant 0 : index
    %17 = memref.load %arg1[%16, %c0_11] : memref<8x2xi32, #tpu.memory_space<smem>>
    %c1_i32_12 = arith.constant 1 : i32
    %18 = arith.addi %0, %c1_i32_12 : i32
    %19 = arith.index_cast %18 : i32 to index
    %c1_13 = arith.constant 1 : index
    %20 = memref.load %arg1[%19, %c1_13] : memref<8x2xi32, #tpu.memory_space<smem>>
    %c0_i32_14 = arith.constant 0 : i32
    %c1_i32_15 = arith.constant 1 : i32
    %c0_i32_16 = arith.constant 0 : i32
    %21 = tpu.memref_slice %arg3[%17, %c0_i32_16] : memref<128x128xf32, #tpu.memory_space<any>> -> memref<1x128xf32, #tpu.memory_space<any>>
    %c1_i32_17 = arith.constant 1 : i32
    %c0_i32_18 = arith.constant 0 : i32
    %22 = tpu.memref_slice %arg5[%c1_i32_17, %c0_i32_18] : memref<8x128xf32, #tpu.memory_space<vmem>> -> memref<1x128xf32, #tpu.memory_space<vmem>>
    %23 = tpu.memref_slice %arg7[%c0_i32_14, %c1_i32_15] : memref<2x8x!tpu.dma_semaphore, #tpu.memory_space<semaphore_mem>> -> memref<1x1x!tpu.dma_semaphore, #tpu.memory_space<semaphore_mem>>
    %24 = tpu.memref_squeeze %23 : memref<1x1x!tpu.dma_semaphore, #tpu.memory_space<semaphore_mem>> -> memref<!tpu.dma_semaphore, #tpu.memory_space<semaphore_mem>>
    tpu.enqueue_dma source(%21 : memref<1x128xf32, #tpu.memory_space<any>>) target(%22 : memref<1x128xf32, #tpu.memory_space<vmem>>) target_semaphore(%24 : memref<!tpu.dma_semaphore, #tpu.memory_space<semaphore_mem>>)
    %c1_i32_19 = arith.constant 1 : i32
    %c1_i32_20 = arith.constant 1 : i32
    %c0_i32_21 = arith.constant 0 : i32
    %25 = tpu.memref_slice %arg3[%20, %c0_i32_21] : memref<128x128xf32, #tpu.memory_space<any>> -> memref<1x128xf32, #tpu.memory_space<any>>
    %c1_i32_22 = arith.constant 1 : i32
    %c0_i32_23 = arith.constant 0 : i32
    %26 = tpu.memref_slice %arg6[%c1_i32_22, %c0_i32_23] : memref<8x128xf32, #tpu.memory_space<vmem>> -> memref<1x128xf32, #tpu.memory_space<vmem>>
    %27 = tpu.memref_slice %arg7[%c1_i32_19, %c1_i32_20] : memref<2x8x!tpu.dma_semaphore, #tpu.memory_space<semaphore_mem>> -> memref<1x1x!tpu.dma_semaphore, #tpu.memory_space<semaphore_mem>>
    %28 = tpu.memref_squeeze %27 : memref<1x1x!tpu.dma_semaphore, #tpu.memory_space<semaphore_mem>> -> memref<!tpu.dma_semaphore, #tpu.memory_space<semaphore_mem>>
    tpu.enqueue_dma source(%25 : memref<1x128xf32, #tpu.memory_space<any>>) target(%26 : memref<1x128xf32, #tpu.memory_space<vmem>>) target_semaphore(%28 : memref<!tpu.dma_semaphore, #tpu.memory_space<semaphore_mem>>)
    %c2_i32 = arith.constant 2 : i32
    %29 = arith.addi %0, %c2_i32 : i32
    %30 = arith.index_cast %29 : i32 to index
    %c0_24 = arith.constant 0 : index
    %31 = memref.load %arg1[%30, %c0_24] : memref<8x2xi32, #tpu.memory_space<smem>>
    %c2_i32_25 = arith.constant 2 : i32
    %32 = arith.addi %0, %c2_i32_25 : i32
    %33 = arith.index_cast %32 : i32 to index
    %c1_26 = arith.constant 1 : index
    %34 = memref.load %arg1[%33, %c1_26] : memref<8x2xi32, #tpu.memory_space<smem>>
    %c0_i32_27 = arith.constant 0 : i32
    %c2_i32_28 = arith.constant 2 : i32
    %c0_i32_29 = arith.constant 0 : i32
    %35 = tpu.memref_slice %arg3[%31, %c0_i32_29] : memref<128x128xf32, #tpu.memory_space<any>> -> memref<1x128xf32, #tpu.memory_space<any>>
    %c2_i32_30 = arith.constant 2 : i32
    %c0_i32_31 = arith.constant 0 : i32
    %36 = tpu.memref_slice %arg5[%c2_i32_30, %c0_i32_31] : memref<8x128xf32, #tpu.memory_space<vmem>> -> memref<1x128xf32, #tpu.memory_space<vmem>>
    %37 = tpu.memref_slice %arg7[%c0_i32_27, %c2_i32_28] : memref<2x8x!tpu.dma_semaphore, #tpu.memory_space<semaphore_mem>> -> memref<1x1x!tpu.dma_semaphore, #tpu.memory_space<semaphore_mem>>
    %38 = tpu.memref_squeeze %37 : memref<1x1x!tpu.dma_semaphore, #tpu.memory_space<semaphore_mem>> -> memref<!tpu.dma_semaphore, #tpu.memory_space<semaphore_mem>>
    tpu.enqueue_dma source(%35 : memref<1x128xf32, #tpu.memory_space<any>>) target(%36 : memref<1x128xf32, #tpu.memory_space<vmem>>) target_semaphore(%38 : memref<!tpu.dma_semaphore, #tpu.memory_space<semaphore_mem>>)
    %c1_i32_32 = arith.constant 1 : i32
    %c2_i32_33 = arith.constant 2 : i32
    %c0_i32_34 = arith.constant 0 : i32
    %39 = tpu.memref_slice %arg3[%34, %c0_i32_34] : memref<128x128xf32, #tpu.memory_space<any>> -> memref<1x128xf32, #tpu.memory_space<any>>
    %c2_i32_35 = arith.constant 2 : i32
    %c0_i32_36 = arith.constant 0 : i32
    %40 = tpu.memref_slice %arg6[%c2_i32_35, %c0_i32_36] : memref<8x128xf32, #tpu.memory_space<vmem>> -> memref<1x128xf32, #tpu.memory_space<vmem>>
    %41 = tpu.memref_slice %arg7[%c1_i32_32, %c2_i32_33] : memref<2x8x!tpu.dma_semaphore, #tpu.memory_space<semaphore_mem>> -> memref<1x1x!tpu.dma_semaphore, #tpu.memory_space<semaphore_mem>>
    %42 = tpu.memref_squeeze %41 : memref<1x1x!tpu.dma_semaphore, #tpu.memory_space<semaphore_mem>> -> memref<!tpu.dma_semaphore, #tpu.memory_space<semaphore_mem>>
    tpu.enqueue_dma source(%39 : memref<1x128xf32, #tpu.memory_space<any>>) target(%40 : memref<1x128xf32, #tpu.memory_space<vmem>>) target_semaphore(%42 : memref<!tpu.dma_semaphore, #tpu.memory_space<semaphore_mem>>)
    %c3_i32 = arith.constant 3 : i32
    %43 = arith.addi %0, %c3_i32 : i32
    %44 = arith.index_cast %43 : i32 to index
    %c0_37 = arith.constant 0 : index
    %45 = memref.load %arg1[%44, %c0_37] : memref<8x2xi32, #tpu.memory_space<smem>>
    %c3_i32_38 = arith.constant 3 : i32
    %46 = arith.addi %0, %c3_i32_38 : i32
    %47 = arith.index_cast %46 : i32 to index
    %c1_39 = arith.constant 1 : index
    %48 = memref.load %arg1[%47, %c1_39] : memref<8x2xi32, #tpu.memory_space<smem>>
    %c0_i32_40 = arith.constant 0 : i32
    %c3_i32_41 = arith.constant 3 : i32
    %c0_i32_42 = arith.constant 0 : i32
    %49 = tpu.memref_slice %arg3[%45, %c0_i32_42] : memref<128x128xf32, #tpu.memory_space<any>> -> memref<1x128xf32, #tpu.memory_space<any>>
    %c3_i32_43 = arith.constant 3 : i32
    %c0_i32_44 = arith.constant 0 : i32
    %50 = tpu.memref_slice %arg5[%c3_i32_43, %c0_i32_44] : memref<8x128xf32, #tpu.memory_space<vmem>> -> memref<1x128xf32, #tpu.memory_space<vmem>>
    %51 = tpu.memref_slice %arg7[%c0_i32_40, %c3_i32_41] : memref<2x8x!tpu.dma_semaphore, #tpu.memory_space<semaphore_mem>> -> memref<1x1x!tpu.dma_semaphore, #tpu.memory_space<semaphore_mem>>
    %52 = tpu.memref_squeeze %51 : memref<1x1x!tpu.dma_semaphore, #tpu.memory_space<semaphore_mem>> -> memref<!tpu.dma_semaphore, #tpu.memory_space<semaphore_mem>>
    tpu.enqueue_dma source(%49 : memref<1x128xf32, #tpu.memory_space<any>>) target(%50 : memref<1x128xf32, #tpu.memory_space<vmem>>) target_semaphore(%52 : memref<!tpu.dma_semaphore, #tpu.memory_space<semaphore_mem>>)
    %c1_i32_45 = arith.constant 1 : i32
    %c3_i32_46 = arith.constant 3 : i32
    %c0_i32_47 = arith.constant 0 : i32
    %53 = tpu.memref_slice %arg3[%48, %c0_i32_47] : memref<128x128xf32, #tpu.memory_space<any>> -> memref<1x128xf32, #tpu.memory_space<any>>
    %c3_i32_48 = arith.constant 3 : i32
    %c0_i32_49 = arith.constant 0 : i32
    %54 = tpu.memref_slice %arg6[%c3_i32_48, %c0_i32_49] : memref<8x128xf32, #tpu.memory_space<vmem>> -> memref<1x128xf32, #tpu.memory_space<vmem>>
    %55 = tpu.memref_slice %arg7[%c1_i32_45, %c3_i32_46] : memref<2x8x!tpu.dma_semaphore, #tpu.memory_space<semaphore_mem>> -> memref<1x1x!tpu.dma_semaphore, #tpu.memory_space<semaphore_mem>>
    %56 = tpu.memref_squeeze %55 : memref<1x1x!tpu.dma_semaphore, #tpu.memory_space<semaphore_mem>> -> memref<!tpu.dma_semaphore, #tpu.memory_space<semaphore_mem>>
    tpu.enqueue_dma source(%53 : memref<1x128xf32, #tpu.memory_space<any>>) target(%54 : memref<1x128xf32, #tpu.memory_space<vmem>>) target_semaphore(%56 : memref<!tpu.dma_semaphore, #tpu.memory_space<semaphore_mem>>)
    %c4_i32 = arith.constant 4 : i32
    %57 = arith.addi %0, %c4_i32 : i32
    %58 = arith.index_cast %57 : i32 to index
    %c0_50 = arith.constant 0 : index
    %59 = memref.load %arg1[%58, %c0_50] : memref<8x2xi32, #tpu.memory_space<smem>>
    %c4_i32_51 = arith.constant 4 : i32
    %60 = arith.addi %0, %c4_i32_51 : i32
    %61 = arith.index_cast %60 : i32 to index
    %c1_52 = arith.constant 1 : index
    %62 = memref.load %arg1[%61, %c1_52] : memref<8x2xi32, #tpu.memory_space<smem>>
    %c0_i32_53 = arith.constant 0 : i32
    %c4_i32_54 = arith.constant 4 : i32
    %c0_i32_55 = arith.constant 0 : i32
    %63 = tpu.memref_slice %arg3[%59, %c0_i32_55] : memref<128x128xf32, #tpu.memory_space<any>> -> memref<1x128xf32, #tpu.memory_space<any>>
    %c4_i32_56 = arith.constant 4 : i32
    %c0_i32_57 = arith.constant 0 : i32
    %64 = tpu.memref_slice %arg5[%c4_i32_56, %c0_i32_57] : memref<8x128xf32, #tpu.memory_space<vmem>> -> memref<1x128xf32, #tpu.memory_space<vmem>>
    %65 = tpu.memref_slice %arg7[%c0_i32_53, %c4_i32_54] : memref<2x8x!tpu.dma_semaphore, #tpu.memory_space<semaphore_mem>> -> memref<1x1x!tpu.dma_semaphore, #tpu.memory_space<semaphore_mem>>
    %66 = tpu.memref_squeeze %65 : memref<1x1x!tpu.dma_semaphore, #tpu.memory_space<semaphore_mem>> -> memref<!tpu.dma_semaphore, #tpu.memory_space<semaphore_mem>>
    tpu.enqueue_dma source(%63 : memref<1x128xf32, #tpu.memory_space<any>>) target(%64 : memref<1x128xf32, #tpu.memory_space<vmem>>) target_semaphore(%66 : memref<!tpu.dma_semaphore, #tpu.memory_space<semaphore_mem>>)
    %c1_i32_58 = arith.constant 1 : i32
    %c4_i32_59 = arith.constant 4 : i32
    %c0_i32_60 = arith.constant 0 : i32
    %67 = tpu.memref_slice %arg3[%62, %c0_i32_60] : memref<128x128xf32, #tpu.memory_space<any>> -> memref<1x128xf32, #tpu.memory_space<any>>
    %c4_i32_61 = arith.constant 4 : i32
    %c0_i32_62 = arith.constant 0 : i32
    %68 = tpu.memref_slice %arg6[%c4_i32_61, %c0_i32_62] : memref<8x128xf32, #tpu.memory_space<vmem>> -> memref<1x128xf32, #tpu.memory_space<vmem>>
    %69 = tpu.memref_slice %arg7[%c1_i32_58, %c4_i32_59] : memref<2x8x!tpu.dma_semaphore, #tpu.memory_space<semaphore_mem>> -> memref<1x1x!tpu.dma_semaphore, #tpu.memory_space<semaphore_mem>>
    %70 = tpu.memref_squeeze %69 : memref<1x1x!tpu.dma_semaphore, #tpu.memory_space<semaphore_mem>> -> memref<!tpu.dma_semaphore, #tpu.memory_space<semaphore_mem>>
    tpu.enqueue_dma source(%67 : memref<1x128xf32, #tpu.memory_space<any>>) target(%68 : memref<1x128xf32, #tpu.memory_space<vmem>>) target_semaphore(%70 : memref<!tpu.dma_semaphore, #tpu.memory_space<semaphore_mem>>)
    %c5_i32 = arith.constant 5 : i32
    %71 = arith.addi %0, %c5_i32 : i32
    %72 = arith.index_cast %71 : i32 to index
    %c0_63 = arith.constant 0 : index
    %73 = memref.load %arg1[%72, %c0_63] : memref<8x2xi32, #tpu.memory_space<smem>>
    %c5_i32_64 = arith.constant 5 : i32
    %74 = arith.addi %0, %c5_i32_64 : i32
    %75 = arith.index_cast %74 : i32 to index
    %c1_65 = arith.constant 1 : index
    %76 = memref.load %arg1[%75, %c1_65] : memref<8x2xi32, #tpu.memory_space<smem>>
    %c0_i32_66 = arith.constant 0 : i32
    %c5_i32_67 = arith.constant 5 : i32
    %c0_i32_68 = arith.constant 0 : i32
    %77 = tpu.memref_slice %arg3[%73, %c0_i32_68] : memref<128x128xf32, #tpu.memory_space<any>> -> memref<1x128xf32, #tpu.memory_space<any>>
    %c5_i32_69 = arith.constant 5 : i32
    %c0_i32_70 = arith.constant 0 : i32
    %78 = tpu.memref_slice %arg5[%c5_i32_69, %c0_i32_70] : memref<8x128xf32, #tpu.memory_space<vmem>> -> memref<1x128xf32, #tpu.memory_space<vmem>>
    %79 = tpu.memref_slice %arg7[%c0_i32_66, %c5_i32_67] : memref<2x8x!tpu.dma_semaphore, #tpu.memory_space<semaphore_mem>> -> memref<1x1x!tpu.dma_semaphore, #tpu.memory_space<semaphore_mem>>
    %80 = tpu.memref_squeeze %79 : memref<1x1x!tpu.dma_semaphore, #tpu.memory_space<semaphore_mem>> -> memref<!tpu.dma_semaphore, #tpu.memory_space<semaphore_mem>>
    tpu.enqueue_dma source(%77 : memref<1x128xf32, #tpu.memory_space<any>>) target(%78 : memref<1x128xf32, #tpu.memory_space<vmem>>) target_semaphore(%80 : memref<!tpu.dma_semaphore, #tpu.memory_space<semaphore_mem>>)
    %c1_i32_71 = arith.constant 1 : i32
    %c5_i32_72 = arith.constant 5 : i32
    %c0_i32_73 = arith.constant 0 : i32
    %81 = tpu.memref_slice %arg3[%76, %c0_i32_73] : memref<128x128xf32, #tpu.memory_space<any>> -> memref<1x128xf32, #tpu.memory_space<any>>
    %c5_i32_74 = arith.constant 5 : i32
    %c0_i32_75 = arith.constant 0 : i32
    %82 = tpu.memref_slice %arg6[%c5_i32_74, %c0_i32_75] : memref<8x128xf32, #tpu.memory_space<vmem>> -> memref<1x128xf32, #tpu.memory_space<vmem>>
    %83 = tpu.memref_slice %arg7[%c1_i32_71, %c5_i32_72] : memref<2x8x!tpu.dma_semaphore, #tpu.memory_space<semaphore_mem>> -> memref<1x1x!tpu.dma_semaphore, #tpu.memory_space<semaphore_mem>>
    %84 = tpu.memref_squeeze %83 : memref<1x1x!tpu.dma_semaphore, #tpu.memory_space<semaphore_mem>> -> memref<!tpu.dma_semaphore, #tpu.memory_space<semaphore_mem>>
    tpu.enqueue_dma source(%81 : memref<1x128xf32, #tpu.memory_space<any>>) target(%82 : memref<1x128xf32, #tpu.memory_space<vmem>>) target_semaphore(%84 : memref<!tpu.dma_semaphore, #tpu.memory_space<semaphore_mem>>)
    %c6_i32 = arith.constant 6 : i32
    %85 = arith.addi %0, %c6_i32 : i32
    %86 = arith.index_cast %85 : i32 to index
    %c0_76 = arith.constant 0 : index
    %87 = memref.load %arg1[%86, %c0_76] : memref<8x2xi32, #tpu.memory_space<smem>>
    %c6_i32_77 = arith.constant 6 : i32
    %88 = arith.addi %0, %c6_i32_77 : i32
    %89 = arith.index_cast %88 : i32 to index
    %c1_78 = arith.constant 1 : index
    %90 = memref.load %arg1[%89, %c1_78] : memref<8x2xi32, #tpu.memory_space<smem>>
    %c0_i32_79 = arith.constant 0 : i32
    %c6_i32_80 = arith.constant 6 : i32
    %c0_i32_81 = arith.constant 0 : i32
    %91 = tpu.memref_slice %arg3[%87, %c0_i32_81] : memref<128x128xf32, #tpu.memory_space<any>> -> memref<1x128xf32, #tpu.memory_space<any>>
    %c6_i32_82 = arith.constant 6 : i32
    %c0_i32_83 = arith.constant 0 : i32
    %92 = tpu.memref_slice %arg5[%c6_i32_82, %c0_i32_83] : memref<8x128xf32, #tpu.memory_space<vmem>> -> memref<1x128xf32, #tpu.memory_space<vmem>>
    %93 = tpu.memref_slice %arg7[%c0_i32_79, %c6_i32_80] : memref<2x8x!tpu.dma_semaphore, #tpu.memory_space<semaphore_mem>> -> memref<1x1x!tpu.dma_semaphore, #tpu.memory_space<semaphore_mem>>
    %94 = tpu.memref_squeeze %93 : memref<1x1x!tpu.dma_semaphore, #tpu.memory_space<semaphore_mem>> -> memref<!tpu.dma_semaphore, #tpu.memory_space<semaphore_mem>>
    tpu.enqueue_dma source(%91 : memref<1x128xf32, #tpu.memory_space<any>>) target(%92 : memref<1x128xf32, #tpu.memory_space<vmem>>) target_semaphore(%94 : memref<!tpu.dma_semaphore, #tpu.memory_space<semaphore_mem>>)
    %c1_i32_84 = arith.constant 1 : i32
    %c6_i32_85 = arith.constant 6 : i32
    %c0_i32_86 = arith.constant 0 : i32
    %95 = tpu.memref_slice %arg3[%90, %c0_i32_86] : memref<128x128xf32, #tpu.memory_space<any>> -> memref<1x128xf32, #tpu.memory_space<any>>
    %c6_i32_87 = arith.constant 6 : i32
    %c0_i32_88 = arith.constant 0 : i32
    %96 = tpu.memref_slice %arg6[%c6_i32_87, %c0_i32_88] : memref<8x128xf32, #tpu.memory_space<vmem>> -> memref<1x128xf32, #tpu.memory_space<vmem>>
    %97 = tpu.memref_slice %arg7[%c1_i32_84, %c6_i32_85] : memref<2x8x!tpu.dma_semaphore, #tpu.memory_space<semaphore_mem>> -> memref<1x1x!tpu.dma_semaphore, #tpu.memory_space<semaphore_mem>>
    %98 = tpu.memref_squeeze %97 : memref<1x1x!tpu.dma_semaphore, #tpu.memory_space<semaphore_mem>> -> memref<!tpu.dma_semaphore, #tpu.memory_space<semaphore_mem>>
    tpu.enqueue_dma source(%95 : memref<1x128xf32, #tpu.memory_space<any>>) target(%96 : memref<1x128xf32, #tpu.memory_space<vmem>>) target_semaphore(%98 : memref<!tpu.dma_semaphore, #tpu.memory_space<semaphore_mem>>)
    %c7_i32 = arith.constant 7 : i32
    %99 = arith.addi %0, %c7_i32 : i32
    %100 = arith.index_cast %99 : i32 to index
    %c0_89 = arith.constant 0 : index
    %101 = memref.load %arg1[%100, %c0_89] : memref<8x2xi32, #tpu.memory_space<smem>>
    %c7_i32_90 = arith.constant 7 : i32
    %102 = arith.addi %0, %c7_i32_90 : i32
    %103 = arith.index_cast %102 : i32 to index
    %c1_91 = arith.constant 1 : index
    %104 = memref.load %arg1[%103, %c1_91] : memref<8x2xi32, #tpu.memory_space<smem>>
    %c0_i32_92 = arith.constant 0 : i32
    %c7_i32_93 = arith.constant 7 : i32
    %c0_i32_94 = arith.constant 0 : i32
    %105 = tpu.memref_slice %arg3[%101, %c0_i32_94] : memref<128x128xf32, #tpu.memory_space<any>> -> memref<1x128xf32, #tpu.memory_space<any>>
    %c7_i32_95 = arith.constant 7 : i32
    %c0_i32_96 = arith.constant 0 : i32
    %106 = tpu.memref_slice %arg5[%c7_i32_95, %c0_i32_96] : memref<8x128xf32, #tpu.memory_space<vmem>> -> memref<1x128xf32, #tpu.memory_space<vmem>>
    %107 = tpu.memref_slice %arg7[%c0_i32_92, %c7_i32_93] : memref<2x8x!tpu.dma_semaphore, #tpu.memory_space<semaphore_mem>> -> memref<1x1x!tpu.dma_semaphore, #tpu.memory_space<semaphore_mem>>
    %108 = tpu.memref_squeeze %107 : memref<1x1x!tpu.dma_semaphore, #tpu.memory_space<semaphore_mem>> -> memref<!tpu.dma_semaphore, #tpu.memory_space<semaphore_mem>>
    tpu.enqueue_dma source(%105 : memref<1x128xf32, #tpu.memory_space<any>>) target(%106 : memref<1x128xf32, #tpu.memory_space<vmem>>) target_semaphore(%108 : memref<!tpu.dma_semaphore, #tpu.memory_space<semaphore_mem>>)
    %c1_i32_97 = arith.constant 1 : i32
    %c7_i32_98 = arith.constant 7 : i32
    %c0_i32_99 = arith.constant 0 : i32
    %109 = tpu.memref_slice %arg3[%104, %c0_i32_99] : memref<128x128xf32, #tpu.memory_space<any>> -> memref<1x128xf32, #tpu.memory_space<any>>
    %c7_i32_100 = arith.constant 7 : i32
    %c0_i32_101 = arith.constant 0 : i32
    %110 = tpu.memref_slice %arg6[%c7_i32_100, %c0_i32_101] : memref<8x128xf32, #tpu.memory_space<vmem>> -> memref<1x128xf32, #tpu.memory_space<vmem>>
    %111 = tpu.memref_slice %arg7[%c1_i32_97, %c7_i32_98] : memref<2x8x!tpu.dma_semaphore, #tpu.memory_space<semaphore_mem>> -> memref<1x1x!tpu.dma_semaphore, #tpu.memory_space<semaphore_mem>>
    %112 = tpu.memref_squeeze %111 : memref<1x1x!tpu.dma_semaphore, #tpu.memory_space<semaphore_mem>> -> memref<!tpu.dma_semaphore, #tpu.memory_space<semaphore_mem>>
    tpu.enqueue_dma source(%109 : memref<1x128xf32, #tpu.memory_space<any>>) target(%110 : memref<1x128xf32, #tpu.memory_space<vmem>>) target_semaphore(%112 : memref<!tpu.dma_semaphore, #tpu.memory_space<semaphore_mem>>)
    %c0_i32_102 = arith.constant 0 : i32
    %c0_i32_103 = arith.constant 0 : i32
    %c0_i32_104 = arith.constant 0 : i32
    %c0_i32_105 = arith.constant 0 : i32
    %113 = tpu.memref_slice %arg3[%c0_i32_104, %c0_i32_105] : memref<128x128xf32, #tpu.memory_space<any>> -> memref<1x128xf32, #tpu.memory_space<any>>
    %c0_i32_106 = arith.constant 0 : i32
    %c0_i32_107 = arith.constant 0 : i32
    %114 = tpu.memref_slice %arg5[%c0_i32_106, %c0_i32_107] : memref<8x128xf32, #tpu.memory_space<vmem>> -> memref<1x128xf32, #tpu.memory_space<vmem>>
    %115 = tpu.memref_slice %arg7[%c0_i32_102, %c0_i32_103] : memref<2x8x!tpu.dma_semaphore, #tpu.memory_space<semaphore_mem>> -> memref<1x1x!tpu.dma_semaphore, #tpu.memory_space<semaphore_mem>>
    %116 = tpu.memref_squeeze %115 : memref<1x1x!tpu.dma_semaphore, #tpu.memory_space<semaphore_mem>> -> memref<!tpu.dma_semaphore, #tpu.memory_space<semaphore_mem>>
    tpu.wait_dma2 semaphore(%116 : memref<!tpu.dma_semaphore, #tpu.memory_space<semaphore_mem>>) src(%113 : memref<1x128xf32, #tpu.memory_space<any>>) dst(%114 : memref<1x128xf32, #tpu.memory_space<vmem>>)
    %c1_i32_108 = arith.constant 1 : i32
    %c0_i32_109 = arith.constant 0 : i32
    %c0_i32_110 = arith.constant 0 : i32
    %c0_i32_111 = arith.constant 0 : i32
    %117 = tpu.memref_slice %arg3[%c0_i32_110, %c0_i32_111] : memref<128x128xf32, #tpu.memory_space<any>> -> memref<1x128xf32, #tpu.memory_space<any>>
    %c0_i32_112 = arith.constant 0 : i32
    %c0_i32_113 = arith.constant 0 : i32
    %118 = tpu.memref_slice %arg6[%c0_i32_112, %c0_i32_113] : memref<8x128xf32, #tpu.memory_space<vmem>> -> memref<1x128xf32, #tpu.memory_space<vmem>>
    %119 = tpu.memref_slice %arg7[%c1_i32_108, %c0_i32_109] : memref<2x8x!tpu.dma_semaphore, #tpu.memory_space<semaphore_mem>> -> memref<1x1x!tpu.dma_semaphore, #tpu.memory_space<semaphore_mem>>
    %120 = tpu.memref_squeeze %119 : memref<1x1x!tpu.dma_semaphore, #tpu.memory_space<semaphore_mem>> -> memref<!tpu.dma_semaphore, #tpu.memory_space<semaphore_mem>>
    tpu.wait_dma2 semaphore(%120 : memref<!tpu.dma_semaphore, #tpu.memory_space<semaphore_mem>>) src(%117 : memref<1x128xf32, #tpu.memory_space<any>>) dst(%118 : memref<1x128xf32, #tpu.memory_space<vmem>>)
    %c0_i32_114 = arith.constant 0 : i32
    %c1_i32_115 = arith.constant 1 : i32
    %c0_i32_116 = arith.constant 0 : i32
    %c0_i32_117 = arith.constant 0 : i32
    %121 = tpu.memref_slice %arg3[%c0_i32_116, %c0_i32_117] : memref<128x128xf32, #tpu.memory_space<any>> -> memref<1x128xf32, #tpu.memory_space<any>>
    %c1_i32_118 = arith.constant 1 : i32
    %c0_i32_119 = arith.constant 0 : i32
    %122 = tpu.memref_slice %arg5[%c1_i32_118, %c0_i32_119] : memref<8x128xf32, #tpu.memory_space<vmem>> -> memref<1x128xf32, #tpu.memory_space<vmem>>
    %123 = tpu.memref_slice %arg7[%c0_i32_114, %c1_i32_115] : memref<2x8x!tpu.dma_semaphore, #tpu.memory_space<semaphore_mem>> -> memref<1x1x!tpu.dma_semaphore, #tpu.memory_space<semaphore_mem>>
    %124 = tpu.memref_squeeze %123 : memref<1x1x!tpu.dma_semaphore, #tpu.memory_space<semaphore_mem>> -> memref<!tpu.dma_semaphore, #tpu.memory_space<semaphore_mem>>
    tpu.wait_dma2 semaphore(%124 : memref<!tpu.dma_semaphore, #tpu.memory_space<semaphore_mem>>) src(%121 : memref<1x128xf32, #tpu.memory_space<any>>) dst(%122 : memref<1x128xf32, #tpu.memory_space<vmem>>)
    %c1_i32_120 = arith.constant 1 : i32
    %c1_i32_121 = arith.constant 1 : i32
    %c0_i32_122 = arith.constant 0 : i32
    %c0_i32_123 = arith.constant 0 : i32
    %125 = tpu.memref_slice %arg3[%c0_i32_122, %c0_i32_123] : memref<128x128xf32, #tpu.memory_space<any>> -> memref<1x128xf32, #tpu.memory_space<any>>
    %c1_i32_124 = arith.constant 1 : i32
    %c0_i32_125 = arith.constant 0 : i32
    %126 = tpu.memref_slice %arg6[%c1_i32_124, %c0_i32_125] : memref<8x128xf32, #tpu.memory_space<vmem>> -> memref<1x128xf32, #tpu.memory_space<vmem>>
    %127 = tpu.memref_slice %arg7[%c1_i32_120, %c1_i32_121] : memref<2x8x!tpu.dma_semaphore, #tpu.memory_space<semaphore_mem>> -> memref<1x1x!tpu.dma_semaphore, #tpu.memory_space<semaphore_mem>>
    %128 = tpu.memref_squeeze %127 : memref<1x1x!tpu.dma_semaphore, #tpu.memory_space<semaphore_mem>> -> memref<!tpu.dma_semaphore, #tpu.memory_space<semaphore_mem>>
    tpu.wait_dma2 semaphore(%128 : memref<!tpu.dma_semaphore, #tpu.memory_space<semaphore_mem>>) src(%125 : memref<1x128xf32, #tpu.memory_space<any>>) dst(%126 : memref<1x128xf32, #tpu.memory_space<vmem>>)
    %c0_i32_126 = arith.constant 0 : i32
    %c2_i32_127 = arith.constant 2 : i32
    %c0_i32_128 = arith.constant 0 : i32
    %c0_i32_129 = arith.constant 0 : i32
    %129 = tpu.memref_slice %arg3[%c0_i32_128, %c0_i32_129] : memref<128x128xf32, #tpu.memory_space<any>> -> memref<1x128xf32, #tpu.memory_space<any>>
    %c2_i32_130 = arith.constant 2 : i32
    %c0_i32_131 = arith.constant 0 : i32
    %130 = tpu.memref_slice %arg5[%c2_i32_130, %c0_i32_131] : memref<8x128xf32, #tpu.memory_space<vmem>> -> memref<1x128xf32, #tpu.memory_space<vmem>>
    %131 = tpu.memref_slice %arg7[%c0_i32_126, %c2_i32_127] : memref<2x8x!tpu.dma_semaphore, #tpu.memory_space<semaphore_mem>> -> memref<1x1x!tpu.dma_semaphore, #tpu.memory_space<semaphore_mem>>
    %132 = tpu.memref_squeeze %131 : memref<1x1x!tpu.dma_semaphore, #tpu.memory_space<semaphore_mem>> -> memref<!tpu.dma_semaphore, #tpu.memory_space<semaphore_mem>>
    tpu.wait_dma2 semaphore(%132 : memref<!tpu.dma_semaphore, #tpu.memory_space<semaphore_mem>>) src(%129 : memref<1x128xf32, #tpu.memory_space<any>>) dst(%130 : memref<1x128xf32, #tpu.memory_space<vmem>>)
    %c1_i32_132 = arith.constant 1 : i32
    %c2_i32_133 = arith.constant 2 : i32
    %c0_i32_134 = arith.constant 0 : i32
    %c0_i32_135 = arith.constant 0 : i32
    %133 = tpu.memref_slice %arg3[%c0_i32_134, %c0_i32_135] : memref<128x128xf32, #tpu.memory_space<any>> -> memref<1x128xf32, #tpu.memory_space<any>>
    %c2_i32_136 = arith.constant 2 : i32
    %c0_i32_137 = arith.constant 0 : i32
    %134 = tpu.memref_slice %arg6[%c2_i32_136, %c0_i32_137] : memref<8x128xf32, #tpu.memory_space<vmem>> -> memref<1x128xf32, #tpu.memory_space<vmem>>
    %135 = tpu.memref_slice %arg7[%c1_i32_132, %c2_i32_133] : memref<2x8x!tpu.dma_semaphore, #tpu.memory_space<semaphore_mem>> -> memref<1x1x!tpu.dma_semaphore, #tpu.memory_space<semaphore_mem>>
    %136 = tpu.memref_squeeze %135 : memref<1x1x!tpu.dma_semaphore, #tpu.memory_space<semaphore_mem>> -> memref<!tpu.dma_semaphore, #tpu.memory_space<semaphore_mem>>
    tpu.wait_dma2 semaphore(%136 : memref<!tpu.dma_semaphore, #tpu.memory_space<semaphore_mem>>) src(%133 : memref<1x128xf32, #tpu.memory_space<any>>) dst(%134 : memref<1x128xf32, #tpu.memory_space<vmem>>)
    %c0_i32_138 = arith.constant 0 : i32
    %c3_i32_139 = arith.constant 3 : i32
    %c0_i32_140 = arith.constant 0 : i32
    %c0_i32_141 = arith.constant 0 : i32
    %137 = tpu.memref_slice %arg3[%c0_i32_140, %c0_i32_141] : memref<128x128xf32, #tpu.memory_space<any>> -> memref<1x128xf32, #tpu.memory_space<any>>
    %c3_i32_142 = arith.constant 3 : i32
    %c0_i32_143 = arith.constant 0 : i32
    %138 = tpu.memref_slice %arg5[%c3_i32_142, %c0_i32_143] : memref<8x128xf32, #tpu.memory_space<vmem>> -> memref<1x128xf32, #tpu.memory_space<vmem>>
    %139 = tpu.memref_slice %arg7[%c0_i32_138, %c3_i32_139] : memref<2x8x!tpu.dma_semaphore, #tpu.memory_space<semaphore_mem>> -> memref<1x1x!tpu.dma_semaphore, #tpu.memory_space<semaphore_mem>>
    %140 = tpu.memref_squeeze %139 : memref<1x1x!tpu.dma_semaphore, #tpu.memory_space<semaphore_mem>> -> memref<!tpu.dma_semaphore, #tpu.memory_space<semaphore_mem>>
    tpu.wait_dma2 semaphore(%140 : memref<!tpu.dma_semaphore, #tpu.memory_space<semaphore_mem>>) src(%137 : memref<1x128xf32, #tpu.memory_space<any>>) dst(%138 : memref<1x128xf32, #tpu.memory_space<vmem>>)
    %c1_i32_144 = arith.constant 1 : i32
    %c3_i32_145 = arith.constant 3 : i32
    %c0_i32_146 = arith.constant 0 : i32
    %c0_i32_147 = arith.constant 0 : i32
    %141 = tpu.memref_slice %arg3[%c0_i32_146, %c0_i32_147] : memref<128x128xf32, #tpu.memory_space<any>> -> memref<1x128xf32, #tpu.memory_space<any>>
    %c3_i32_148 = arith.constant 3 : i32
    %c0_i32_149 = arith.constant 0 : i32
    %142 = tpu.memref_slice %arg6[%c3_i32_148, %c0_i32_149] : memref<8x128xf32, #tpu.memory_space<vmem>> -> memref<1x128xf32, #tpu.memory_space<vmem>>
    %143 = tpu.memref_slice %arg7[%c1_i32_144, %c3_i32_145] : memref<2x8x!tpu.dma_semaphore, #tpu.memory_space<semaphore_mem>> -> memref<1x1x!tpu.dma_semaphore, #tpu.memory_space<semaphore_mem>>
    %144 = tpu.memref_squeeze %143 : memref<1x1x!tpu.dma_semaphore, #tpu.memory_space<semaphore_mem>> -> memref<!tpu.dma_semaphore, #tpu.memory_space<semaphore_mem>>
    tpu.wait_dma2 semaphore(%144 : memref<!tpu.dma_semaphore, #tpu.memory_space<semaphore_mem>>) src(%141 : memref<1x128xf32, #tpu.memory_space<any>>) dst(%142 : memref<1x128xf32, #tpu.memory_space<vmem>>)
    %c0_i32_150 = arith.constant 0 : i32
    %c4_i32_151 = arith.constant 4 : i32
    %c0_i32_152 = arith.constant 0 : i32
    %c0_i32_153 = arith.constant 0 : i32
    %145 = tpu.memref_slice %arg3[%c0_i32_152, %c0_i32_153] : memref<128x128xf32, #tpu.memory_space<any>> -> memref<1x128xf32, #tpu.memory_space<any>>
    %c4_i32_154 = arith.constant 4 : i32
    %c0_i32_155 = arith.constant 0 : i32
    %146 = tpu.memref_slice %arg5[%c4_i32_154, %c0_i32_155] : memref<8x128xf32, #tpu.memory_space<vmem>> -> memref<1x128xf32, #tpu.memory_space<vmem>>
    %147 = tpu.memref_slice %arg7[%c0_i32_150, %c4_i32_151] : memref<2x8x!tpu.dma_semaphore, #tpu.memory_space<semaphore_mem>> -> memref<1x1x!tpu.dma_semaphore, #tpu.memory_space<semaphore_mem>>
    %148 = tpu.memref_squeeze %147 : memref<1x1x!tpu.dma_semaphore, #tpu.memory_space<semaphore_mem>> -> memref<!tpu.dma_semaphore, #tpu.memory_space<semaphore_mem>>
    tpu.wait_dma2 semaphore(%148 : memref<!tpu.dma_semaphore, #tpu.memory_space<semaphore_mem>>) src(%145 : memref<1x128xf32, #tpu.memory_space<any>>) dst(%146 : memref<1x128xf32, #tpu.memory_space<vmem>>)
    %c1_i32_156 = arith.constant 1 : i32
    %c4_i32_157 = arith.constant 4 : i32
    %c0_i32_158 = arith.constant 0 : i32
    %c0_i32_159 = arith.constant 0 : i32
    %149 = tpu.memref_slice %arg3[%c0_i32_158, %c0_i32_159] : memref<128x128xf32, #tpu.memory_space<any>> -> memref<1x128xf32, #tpu.memory_space<any>>
    %c4_i32_160 = arith.constant 4 : i32
    %c0_i32_161 = arith.constant 0 : i32
    %150 = tpu.memref_slice %arg6[%c4_i32_160, %c0_i32_161] : memref<8x128xf32, #tpu.memory_space<vmem>> -> memref<1x128xf32, #tpu.memory_space<vmem>>
    %151 = tpu.memref_slice %arg7[%c1_i32_156, %c4_i32_157] : memref<2x8x!tpu.dma_semaphore, #tpu.memory_space<semaphore_mem>> -> memref<1x1x!tpu.dma_semaphore, #tpu.memory_space<semaphore_mem>>
    %152 = tpu.memref_squeeze %151 : memref<1x1x!tpu.dma_semaphore, #tpu.memory_space<semaphore_mem>> -> memref<!tpu.dma_semaphore, #tpu.memory_space<semaphore_mem>>
    tpu.wait_dma2 semaphore(%152 : memref<!tpu.dma_semaphore, #tpu.memory_space<semaphore_mem>>) src(%149 : memref<1x128xf32, #tpu.memory_space<any>>) dst(%150 : memref<1x128xf32, #tpu.memory_space<vmem>>)
    %c0_i32_162 = arith.constant 0 : i32
    %c5_i32_163 = arith.constant 5 : i32
    %c0_i32_164 = arith.constant 0 : i32
    %c0_i32_165 = arith.constant 0 : i32
    %153 = tpu.memref_slice %arg3[%c0_i32_164, %c0_i32_165] : memref<128x128xf32, #tpu.memory_space<any>> -> memref<1x128xf32, #tpu.memory_space<any>>
    %c5_i32_166 = arith.constant 5 : i32
    %c0_i32_167 = arith.constant 0 : i32
    %154 = tpu.memref_slice %arg5[%c5_i32_166, %c0_i32_167] : memref<8x128xf32, #tpu.memory_space<vmem>> -> memref<1x128xf32, #tpu.memory_space<vmem>>
    %155 = tpu.memref_slice %arg7[%c0_i32_162, %c5_i32_163] : memref<2x8x!tpu.dma_semaphore, #tpu.memory_space<semaphore_mem>> -> memref<1x1x!tpu.dma_semaphore, #tpu.memory_space<semaphore_mem>>
    %156 = tpu.memref_squeeze %155 : memref<1x1x!tpu.dma_semaphore, #tpu.memory_space<semaphore_mem>> -> memref<!tpu.dma_semaphore, #tpu.memory_space<semaphore_mem>>
    tpu.wait_dma2 semaphore(%156 : memref<!tpu.dma_semaphore, #tpu.memory_space<semaphore_mem>>) src(%153 : memref<1x128xf32, #tpu.memory_space<any>>) dst(%154 : memref<1x128xf32, #tpu.memory_space<vmem>>)
    %c1_i32_168 = arith.constant 1 : i32
    %c5_i32_169 = arith.constant 5 : i32
    %c0_i32_170 = arith.constant 0 : i32
    %c0_i32_171 = arith.constant 0 : i32
    %157 = tpu.memref_slice %arg3[%c0_i32_170, %c0_i32_171] : memref<128x128xf32, #tpu.memory_space<any>> -> memref<1x128xf32, #tpu.memory_space<any>>
    %c5_i32_172 = arith.constant 5 : i32
    %c0_i32_173 = arith.constant 0 : i32
    %158 = tpu.memref_slice %arg6[%c5_i32_172, %c0_i32_173] : memref<8x128xf32, #tpu.memory_space<vmem>> -> memref<1x128xf32, #tpu.memory_space<vmem>>
    %159 = tpu.memref_slice %arg7[%c1_i32_168, %c5_i32_169] : memref<2x8x!tpu.dma_semaphore, #tpu.memory_space<semaphore_mem>> -> memref<1x1x!tpu.dma_semaphore, #tpu.memory_space<semaphore_mem>>
    %160 = tpu.memref_squeeze %159 : memref<1x1x!tpu.dma_semaphore, #tpu.memory_space<semaphore_mem>> -> memref<!tpu.dma_semaphore, #tpu.memory_space<semaphore_mem>>
    tpu.wait_dma2 semaphore(%160 : memref<!tpu.dma_semaphore, #tpu.memory_space<semaphore_mem>>) src(%157 : memref<1x128xf32, #tpu.memory_space<any>>) dst(%158 : memref<1x128xf32, #tpu.memory_space<vmem>>)
    %c0_i32_174 = arith.constant 0 : i32
    %c6_i32_175 = arith.constant 6 : i32
    %c0_i32_176 = arith.constant 0 : i32
    %c0_i32_177 = arith.constant 0 : i32
    %161 = tpu.memref_slice %arg3[%c0_i32_176, %c0_i32_177] : memref<128x128xf32, #tpu.memory_space<any>> -> memref<1x128xf32, #tpu.memory_space<any>>
    %c6_i32_178 = arith.constant 6 : i32
    %c0_i32_179 = arith.constant 0 : i32
    %162 = tpu.memref_slice %arg5[%c6_i32_178, %c0_i32_179] : memref<8x128xf32, #tpu.memory_space<vmem>> -> memref<1x128xf32, #tpu.memory_space<vmem>>
    %163 = tpu.memref_slice %arg7[%c0_i32_174, %c6_i32_175] : memref<2x8x!tpu.dma_semaphore, #tpu.memory_space<semaphore_mem>> -> memref<1x1x!tpu.dma_semaphore, #tpu.memory_space<semaphore_mem>>
    %164 = tpu.memref_squeeze %163 : memref<1x1x!tpu.dma_semaphore, #tpu.memory_space<semaphore_mem>> -> memref<!tpu.dma_semaphore, #tpu.memory_space<semaphore_mem>>
    tpu.wait_dma2 semaphore(%164 : memref<!tpu.dma_semaphore, #tpu.memory_space<semaphore_mem>>) src(%161 : memref<1x128xf32, #tpu.memory_space<any>>) dst(%162 : memref<1x128xf32, #tpu.memory_space<vmem>>)
    %c1_i32_180 = arith.constant 1 : i32
    %c6_i32_181 = arith.constant 6 : i32
    %c0_i32_182 = arith.constant 0 : i32
    %c0_i32_183 = arith.constant 0 : i32
    %165 = tpu.memref_slice %arg3[%c0_i32_182, %c0_i32_183] : memref<128x128xf32, #tpu.memory_space<any>> -> memref<1x128xf32, #tpu.memory_space<any>>
    %c6_i32_184 = arith.constant 6 : i32
    %c0_i32_185 = arith.constant 0 : i32
    %166 = tpu.memref_slice %arg6[%c6_i32_184, %c0_i32_185] : memref<8x128xf32, #tpu.memory_space<vmem>> -> memref<1x128xf32, #tpu.memory_space<vmem>>
    %167 = tpu.memref_slice %arg7[%c1_i32_180, %c6_i32_181] : memref<2x8x!tpu.dma_semaphore, #tpu.memory_space<semaphore_mem>> -> memref<1x1x!tpu.dma_semaphore, #tpu.memory_space<semaphore_mem>>
    %168 = tpu.memref_squeeze %167 : memref<1x1x!tpu.dma_semaphore, #tpu.memory_space<semaphore_mem>> -> memref<!tpu.dma_semaphore, #tpu.memory_space<semaphore_mem>>
    tpu.wait_dma2 semaphore(%168 : memref<!tpu.dma_semaphore, #tpu.memory_space<semaphore_mem>>) src(%165 : memref<1x128xf32, #tpu.memory_space<any>>) dst(%166 : memref<1x128xf32, #tpu.memory_space<vmem>>)
    %c0_i32_186 = arith.constant 0 : i32
    %c7_i32_187 = arith.constant 7 : i32
    %c0_i32_188 = arith.constant 0 : i32
    %c0_i32_189 = arith.constant 0 : i32
    %169 = tpu.memref_slice %arg3[%c0_i32_188, %c0_i32_189] : memref<128x128xf32, #tpu.memory_space<any>> -> memref<1x128xf32, #tpu.memory_space<any>>
    %c7_i32_190 = arith.constant 7 : i32
    %c0_i32_191 = arith.constant 0 : i32
    %170 = tpu.memref_slice %arg5[%c7_i32_190, %c0_i32_191] : memref<8x128xf32, #tpu.memory_space<vmem>> -> memref<1x128xf32, #tpu.memory_space<vmem>>
    %171 = tpu.memref_slice %arg7[%c0_i32_186, %c7_i32_187] : memref<2x8x!tpu.dma_semaphore, #tpu.memory_space<semaphore_mem>> -> memref<1x1x!tpu.dma_semaphore, #tpu.memory_space<semaphore_mem>>
    %172 = tpu.memref_squeeze %171 : memref<1x1x!tpu.dma_semaphore, #tpu.memory_space<semaphore_mem>> -> memref<!tpu.dma_semaphore, #tpu.memory_space<semaphore_mem>>
    tpu.wait_dma2 semaphore(%172 : memref<!tpu.dma_semaphore, #tpu.memory_space<semaphore_mem>>) src(%169 : memref<1x128xf32, #tpu.memory_space<any>>) dst(%170 : memref<1x128xf32, #tpu.memory_space<vmem>>)
    %c1_i32_192 = arith.constant 1 : i32
    %c7_i32_193 = arith.constant 7 : i32
    %c0_i32_194 = arith.constant 0 : i32
    %c0_i32_195 = arith.constant 0 : i32
    %173 = tpu.memref_slice %arg3[%c0_i32_194, %c0_i32_195] : memref<128x128xf32, #tpu.memory_space<any>> -> memref<1x128xf32, #tpu.memory_space<any>>
    %c7_i32_196 = arith.constant 7 : i32
    %c0_i32_197 = arith.constant 0 : i32
    %174 = tpu.memref_slice %arg6[%c7_i32_196, %c0_i32_197] : memref<8x128xf32, #tpu.memory_space<vmem>> -> memref<1x128xf32, #tpu.memory_space<vmem>>
    %175 = tpu.memref_slice %arg7[%c1_i32_192, %c7_i32_193] : memref<2x8x!tpu.dma_semaphore, #tpu.memory_space<semaphore_mem>> -> memref<1x1x!tpu.dma_semaphore, #tpu.memory_space<semaphore_mem>>
    %176 = tpu.memref_squeeze %175 : memref<1x1x!tpu.dma_semaphore, #tpu.memory_space<semaphore_mem>> -> memref<!tpu.dma_semaphore, #tpu.memory_space<semaphore_mem>>
    tpu.wait_dma2 semaphore(%176 : memref<!tpu.dma_semaphore, #tpu.memory_space<semaphore_mem>>) src(%173 : memref<1x128xf32, #tpu.memory_space<any>>) dst(%174 : memref<1x128xf32, #tpu.memory_space<vmem>>)
    %c0_198 = arith.constant 0 : index
    %c0_199 = arith.constant 0 : index
    %177 = vector.load %arg5[%c0_198, %c0_199] : memref<8x128xf32, #tpu.memory_space<vmem>>, vector<8x128xf32>
    %c0_200 = arith.constant 0 : index
    %c0_201 = arith.constant 0 : index
    %178 = vector.load %arg2[%c0_200, %c0_201] : memref<1x128xf32, #tpu.memory_space<vmem>>, vector<1x128xf32>
    %179 = vector.broadcast %178 : vector<1x128xf32> to vector<8x128xf32>
    %180 = arith.mulf %177, %179 : vector<8x128xf32>
    %c0_202 = arith.constant 0 : index
    %c0_203 = arith.constant 0 : index
    %181 = vector.load %arg6[%c0_202, %c0_203] : memref<8x128xf32, #tpu.memory_space<vmem>>, vector<8x128xf32>
    %182 = arith.mulf %180, %181 : vector<8x128xf32>
    %cst = arith.constant dense<0.000000e+00> : vector<8xf32>
    %183 = vector.multi_reduction <add>, %182, %cst [1] : vector<8x128xf32> to vector<8xf32>
    %184 = vector.shape_cast %183 : vector<8xf32> to vector<8x1xf32>
    %185 = vector.shape_cast %184 : vector<8x1xf32> to vector<8x1xf32>
    %186 = vector.broadcast %185 : vector<8x1xf32> to vector<8x128xf32>
    %c0_204 = arith.constant 0 : index
    %c0_205 = arith.constant 0 : index
    %187 = vector.load %arg4[%c0_204, %c0_205] : memref<8x128xf32, #tpu.memory_space<vmem>>, vector<8x128xf32>
    tpu.vector_store %arg4[%c0_204, %c0_205], %186 {strides = array<i32>} : memref<8x128xf32, #tpu.memory_space<vmem>>, vector<8x128xf32>,
    return
  }
  func.func @transform_0(%arg0: i32, %arg1: memref<8x2xi32, #tpu.memory_space<smem>>) -> (i32, i32) {
    %c0_i32 = arith.constant 0 : i32
    %c0_i32_0 = arith.constant 0 : i32
    %c0_i32_1 = arith.constant 0 : i32
    return %c0_i32, %c0_i32_0 : i32, i32
  }
  func.func @transform_2(%arg0: i32, %arg1: memref<8x2xi32, #tpu.memory_space<smem>>) -> (i32, i32) {
    %c0_i32 = arith.constant 0 : i32
    %c0_i32_0 = arith.constant 0 : i32
    return %arg0, %c0_i32 : i32, i32
  }
}

</mosaic_0001>

<llo_original>
// kernel: gcnlink_forward.5
$region0: #{gcnlink_forward.5}
  #allocation0 [shape = 'u32[]', space=smem, size = 0x4, offset = 0x4, fixed_abs, tag = 'smem constant byte address 0x4 - core index']
  #allocation1 [shape = 'u32[72,128]{1,0:T(1,128)}', space=vmem, size = 0x9000, scoped, tag = 'internal scratch']
  #allocation2 [shape = 'f32[128,128]{1,0:T(8,128)}', space=vmem, size = 0x10000, scoped, tag = 'scratch operand']
  %s0 = inlined_call_operand.vmem [shape: bf16[128,128], index: 0, kind: input, shape index: {}]
  %s1 = inlined_call_operand.vmem [shape: bf16[128,128], index: 1, kind: input, shape index: {}]
  %s2 = inlined_call_operand.vmem [shape: bf16[128,128], index: 2, kind: output, shape index: {}]
  %s3 = sld [smem:[#allocation0]]
  $region26: #{gcnlink_forward.5} parent=0
    _
  %s5 = ssub.s32 1, %s3
  %s6 = scalar_select 0, %s5, %s3
  // Predicated region
  $region2: #{gcnlink_forward.5} parent=0 // pred_check
    _
  $region3: #{gcnlink_forward.5} parent=0 // pred_check_branch
    %8 = sbr.rel (0) target = $region5
  $region4: #{gcnlink_forward.5} parent=0 // pred_region
    _
  $region5: #{gcnlink_forward.5} parent=0 // pred_fallthru
    _
  // Predicated region
  $region6: #{gcnlink_forward.5} parent=0 // pred_check
    _
  $region7: #{gcnlink_forward.5} parent=0 // pred_check_branch
    %10 = sbr.rel (0) target = $region9
  $region8: #{gcnlink_forward.5} parent=0 // pred_region
    _
  $region9: #{gcnlink_forward.5} parent=0 // pred_fallthru
    _
  %p11 = scmp.eq.s32.totalorder 0, 0
  // Predicated region
  $region10: #{gcnlink_forward.5} parent=0 // pred_check
    %p12 = pneg %p11
  $region11: #{gcnlink_forward.5} parent=0 // pred_check_branch
    %14 = sbr.rel (%p12) target = $region13
  $region12: #{gcnlink_forward.5} parent=0 // pred_region
    %15 = vst [vmem:[#allocation2] sm:$0xff] 0.0
    %16 = vst [vmem:[#allocation2 + $0x8] sm:$0xff] 0.0
    %17 = vst [vmem:[#allocation2 + $0x10] sm:$0xff] 0.0
    %18 = vst [vmem:[#allocation2 + $0x18] sm:$0xff] 0.0
    %19 = vst [vmem:[#allocation2 + $0x20] sm:$0xff] 0.0
    %20 = vst [vmem:[#allocation2 + $0x28] sm:$0xff] 0.0
    %21 = vst [vmem:[#allocation2 + $0x30] sm:$0xff] 0.0
    %22 = vst [vmem:[#allocation2 + $0x38] sm:$0xff] 0.0
    %23 = vst [vmem:[#allocation2 + $0x40] sm:$0xff] 0.0
    %24 = vst [vmem:[#allocation2 + $0x48] sm:$0xff] 0.0
    %25 = vst [vmem:[#allocation2 + $0x50] sm:$0xff] 0.0
    %26 = vst [vmem:[#allocation2 + $0x58] sm:$0xff] 0.0
    %27 = vst [vmem:[#allocation2 + $0x60] sm:$0xff] 0.0
    %28 = vst [vmem:[#allocation2 + $0x68] sm:$0xff] 0.0
    %29 = vst [vmem:[#allocation2 + $0x70] sm:$0xff] 0.0
    %30 = vst [vmem:[#allocation2 + $0x78] sm:$0xff] 0.0
  $region13: #{gcnlink_forward.5} parent=0 // pred_fallthru
    _
  %v31 = vld [vmem:[#allocation2] sm:$0xff]
  %v32 = vld [vmem:[#allocation2 + $0x8] sm:$0xff]
  %v33 = vld [vmem:[#allocation2 + $0x10] sm:$0xff]
  %v34 = vld [vmem:[#allocation2 + $0x18] sm:$0xff]
  %v35 = vld [vmem:[#allocation2 + $0x20] sm:$0xff]
  %v36 = vld [vmem:[#allocation2 + $0x28] sm:$0xff]
  %v37 = vld [vmem:[#allocation2 + $0x30] sm:$0xff]
  %v38 = vld [vmem:[#allocation2 + $0x38] sm:$0xff]
  %v39 = vld [vmem:[#allocation2 + $0x40] sm:$0xff]
  %v40 = vld [vmem:[#allocation2 + $0x48] sm:$0xff]
  %v41 = vld [vmem:[#allocation2 + $0x50] sm:$0xff]
  %v42 = vld [vmem:[#allocation2 + $0x58] sm:$0xff]
  %v43 = vld [vmem:[#allocation2 + $0x60] sm:$0xff]
  %v44 = vld [vmem:[#allocation2 + $0x68] sm:$0xff]
  %v45 = vld [vmem:[#allocation2 + $0x70] sm:$0xff]
  %v46 = vld [vmem:[#allocation2 + $0x78] sm:$0xff]
  %v47 = vld [vmem:[%s0] sm:$0xf]
  %v48 = vld [vmem:[%s0 + $0x4] sm:$0xf]
  %v49 = vld [vmem:[%s0 + $0x8] sm:$0xf]
  %v50 = vld [vmem:[%s0 + $0xc] sm:$0xf]
  %v51 = vld [vmem:[%s0 + $0x10] sm:$0xf]
  %v52 = vld [vmem:[%s0 + $0x14] sm:$0xf]
  %v53 = vld [vmem:[%s0 + $0x18] sm:$0xf]
  %v54 = vld [vmem:[%s0 + $0x1c] sm:$0xf]
  %v55 = vld [vmem:[%s0 + $0x20] sm:$0xf]
  %v56 = vld [vmem:[%s0 + $0x24] sm:$0xf]
  %v57 = vld [vmem:[%s0 + $0x28] sm:$0xf]
  %v58 = vld [vmem:[%s0 + $0x2c] sm:$0xf]
  %v59 = vld [vmem:[%s0 + $0x30] sm:$0xf]
  %v60 = vld [vmem:[%s0 + $0x34] sm:$0xf]
  %v61 = vld [vmem:[%s0 + $0x38] sm:$0xf]
  %v62 = vld [vmem:[%s0 + $0x3c] sm:$0xf]
  %v63 = vld [vmem:[%s1] sm:$0xf]
  %v64 = vld [vmem:[%s1 + $0x4] sm:$0xf]
  %v65 = vld [vmem:[%s1 + $0x8] sm:$0xf]
  %v66 = vld [vmem:[%s1 + $0xc] sm:$0xf]
  %v67 = vld [vmem:[%s1 + $0x10] sm:$0xf]
  %v68 = vld [vmem:[%s1 + $0x14] sm:$0xf]
  %v69 = vld [vmem:[%s1 + $0x18] sm:$0xf]
  %v70 = vld [vmem:[%s1 + $0x1c] sm:$0xf]
  %v71 = vld [vmem:[%s1 + $0x20] sm:$0xf]
  %v72 = vld [vmem:[%s1 + $0x24] sm:$0xf]
  %v73 = vld [vmem:[%s1 + $0x28] sm:$0xf]
  %v74 = vld [vmem:[%s1 + $0x2c] sm:$0xf]
  %v75 = vld [vmem:[%s1 + $0x30] sm:$0xf]
  %v76 = vld [vmem:[%s1 + $0x34] sm:$0xf]
  %v77 = vld [vmem:[%s1 + $0x38] sm:$0xf]
  %v78 = vld [vmem:[%s1 + $0x3c] sm:$0xf]
  %v95 = vunpack.c.l.b16 %v47
  %v96 = vunpack.c.l.b16 %v48
  %v97 = vunpack.c.l.b16 %v49
  %v98 = vunpack.c.l.b16 %v50
  %v99 = vunpack.c.l.b16 %v51
  %v100 = vunpack.c.l.b16 %v52
  %v101 = vunpack.c.l.b16 %v53
  %v102 = vunpack.c.l.b16 %v54
  %v103 = vunpack.c.l.b16 %v55
  %v104 = vunpack.c.l.b16 %v56
  %v105 = vunpack.c.l.b16 %v57
  %v106 = vunpack.c.l.b16 %v58
  %v107 = vunpack.c.l.b16 %v59
  %v108 = vunpack.c.l.b16 %v60
  %v109 = vunpack.c.l.b16 %v61
  %v110 = vunpack.c.l.b16 %v62
  %v111 = vpack.c.b16 %v96, %v95
  %v112 = vpack.c.b16 %v98, %v97
  %v113 = vpack.c.b16 %v100, %v99
  %v114 = vpack.c.b16 %v102, %v101
  %v115 = vpack.c.b16 %v104, %v103
  %v116 = vpack.c.b16 %v106, %v105
  %v117 = vpack.c.b16 %v108, %v107
  %v118 = vpack.c.b16 %v110, %v109
  %v143 = vunpack.c.l.b16 %v63
  %v144 = vunpack.c.l.b16 %v64
  %v145 = vunpack.c.l.b16 %v65
  %v146 = vunpack.c.l.b16 %v66
  %v147 = vunpack.c.l.b16 %v67
  %v148 = vunpack.c.l.b16 %v68
  %v149 = vunpack.c.l.b16 %v69
  %v150 = vunpack.c.l.b16 %v70
  %v151 = vunpack.c.l.b16 %v71
  %v152 = vunpack.c.l.b16 %v72
  %v153 = vunpack.c.l.b16 %v73
  %v154 = vunpack.c.l.b16 %v74
  %v155 = vunpack.c.l.b16 %v75
  %v156 = vunpack.c.l.b16 %v76
  %v157 = vunpack.c.l.b16 %v77
  %v158 = vunpack.c.l.b16 %v78
  %v159 = vpack.c.b16 %v144, %v143
  %v160 = vpack.c.b16 %v146, %v145
  %v161 = vpack.c.b16 %v148, %v147
  %v162 = vpack.c.b16 %v150, %v149
  %v163 = vpack.c.b16 %v152, %v151
  %v164 = vpack.c.b16 %v154, %v153
  %v165 = vpack.c.b16 %v156, %v155
  %v166 = vpack.c.b16 %v158, %v157
  %175 = vmatpush.bf16.msra.mxu0 %v166
  %176 = vmatpush.bf16.msra.mxu0 %v165
  %177 = vmatpush.bf16.msra.mxu0 %v164
  %178 = vmatpush.bf16.msra.mxu0 %v163
  %179 = vmatpush.bf16.msra.mxu0 %v162
  %180 = vmatpush.bf16.msra.mxu0 %v161
  %181 = vmatpush.bf16.msra.mxu0 %v160
  %182 = vmatpush.bf16.msra.mxu0 %v159
  %183 = vmatmul.bf16.gmra.mxu0 %v111
  %v184 = vpop.f32.mrf.mxu0
  %v185 = vadd.f32 0.0, %v184
  %v186 = vpop.f32.mrf.mxu0
  %v187 = vadd.f32 0.0, %v186
  %188 = vmatmul.bf16.gmra.mxu0 %v112
  %v189 = vpop.f32.mrf.mxu0
  %v190 = vadd.f32 0.0, %v189
  %v191 = vpop.f32.mrf.mxu0
  %v192 = vadd.f32 0.0, %v191
  %193 = vmatmul.bf16.gmra.mxu0 %v113
  %v194 = vpop.f32.mrf.mxu0
  %v195 = vadd.f32 0.0, %v194
  %v196 = vpop.f32.mrf.mxu0
  %v197 = vadd.f32 0.0, %v196
  %198 = vmatmul.bf16.gmra.mxu0 %v114
  %v199 = vpop.f32.mrf.mxu0
  %v200 = vadd.f32 0.0, %v199
  %v201 = vpop.f32.mrf.mxu0
  %v202 = vadd.f32 0.0, %v201
  %203 = vmatmul.bf16.gmra.mxu0 %v115
  %v204 = vpop.f32.mrf.mxu0
  %v205 = vadd.f32 0.0, %v204
  %v206 = vpop.f32.mrf.mxu0
  %v207 = vadd.f32 0.0, %v206
  %208 = vmatmul.bf16.gmra.mxu0 %v116
  %v209 = vpop.f32.mrf.mxu0
  %v210 = vadd.f32 0.0, %v209
  %v211 = vpop.f32.mrf.mxu0
  %v212 = vadd.f32 0.0, %v211
  %213 = vmatmul.bf16.gmra.mxu0 %v117
  %v214 = vpop.f32.mrf.mxu0
  %v215 = vadd.f32 0.0, %v214
  %v216 = vpop.f32.mrf.mxu0
  %v217 = vadd.f32 0.0, %v216
  %218 = vmatmul.bf16.gmra.mxu0 %v118
  %v219 = vpop.f32.mrf.mxu0
  %v220 = vadd.f32 0.0, %v219
  %v221 = vpop.f32.mrf.mxu0
  %v222 = vadd.f32 0.0, %v221
  %223 = vdwg.mxu0
  %v224 = vadd.f32 %v31, %v185
  %v225 = vadd.f32 %v32, %v187
  %v226 = vadd.f32 %v33, %v190
  %v227 = vadd.f32 %v34, %v192
  %v228 = vadd.f32 %v35, %v195
  %v229 = vadd.f32 %v36, %v197
  %v230 = vadd.f32 %v37, %v200
  %v231 = vadd.f32 %v38, %v202
  %v232 = vadd.f32 %v39, %v205
  %v233 = vadd.f32 %v40, %v207
  %v234 = vadd.f32 %v41, %v210
  %v235 = vadd.f32 %v42, %v212
  %v236 = vadd.f32 %v43, %v215
  %v237 = vadd.f32 %v44, %v217
  %v238 = vadd.f32 %v45, %v220
  %v239 = vadd.f32 %v46, %v222
  %240 = vst [vmem:[#allocation2] sm:$0xff] %v224
  %241 = vst [vmem:[#allocation2 + $0x8] sm:$0xff] %v225
  %242 = vst [vmem:[#allocation2 + $0x10] sm:$0xff] %v226
  %243 = vst [vmem:[#allocation2 + $0x18] sm:$0xff] %v227
  %244 = vst [vmem:[#allocation2 + $0x20] sm:$0xff] %v228
  %245 = vst [vmem:[#allocation2 + $0x28] sm:$0xff] %v229
  %246 = vst [vmem:[#allocation2 + $0x30] sm:$0xff] %v230
  %247 = vst [vmem:[#allocation2 + $0x38] sm:$0xff] %v231
  %248 = vst [vmem:[#allocation2 + $0x40] sm:$0xff] %v232
  %249 = vst [vmem:[#allocation2 + $0x48] sm:$0xff] %v233
  %250 = vst [vmem:[#allocation2 + $0x50] sm:$0xff] %v234
  %251 = vst [vmem:[#allocation2 + $0x58] sm:$0xff] %v235
  %252 = vst [vmem:[#allocation2 + $0x60] sm:$0xff] %v236
  %253 = vst [vmem:[#allocation2 + $0x68] sm:$0xff] %v237
  %254 = vst [vmem:[#allocation2 + $0x70] sm:$0xff] %v238
  %255 = vst [vmem:[#allocation2 + $0x78] sm:$0xff] %v239
  // Predicated region
  $region14: #{gcnlink_forward.5} parent=0 // pred_check
    %p256 = pneg %p11
  $region15: #{gcnlink_forward.5} parent=0 // pred_check_branch
    %258 = sbr.rel (%p256) target = $region17
  $region16: #{gcnlink_forward.5} parent=0 // pred_region
    %v259 = vld [vmem:[#allocation2] sm:$0xff]
    %v260 = vld [vmem:[#allocation2 + $0x8] sm:$0xff]
    %v261 = vld [vmem:[#allocation2 + $0x10] sm:$0xff]
    %v262 = vld [vmem:[#allocation2 + $0x18] sm:$0xff]
    %v263 = vld [vmem:[#allocation2 + $0x20] sm:$0xff]
    %v264 = vld [vmem:[#allocation2 + $0x28] sm:$0xff]
    %v265 = vld [vmem:[#allocation2 + $0x30] sm:$0xff]
    %v266 = vld [vmem:[#allocation2 + $0x38] sm:$0xff]
    %v267 = vld [vmem:[#allocation2 + $0x40] sm:$0xff]
    %v268 = vld [vmem:[#allocation2 + $0x48] sm:$0xff]
    %v269 = vld [vmem:[#allocation2 + $0x50] sm:$0xff]
    %v270 = vld [vmem:[#allocation2 + $0x58] sm:$0xff]
    %v271 = vld [vmem:[#allocation2 + $0x60] sm:$0xff]
    %v272 = vld [vmem:[#allocation2 + $0x68] sm:$0xff]
    %v273 = vld [vmem:[#allocation2 + $0x70] sm:$0xff]
    %v274 = vld [vmem:[#allocation2 + $0x78] sm:$0xff]
    %v275 = vpack.c.bf16 %v259, %v259
    %v276 = vpack.c.bf16 %v260, %v260
    %v277 = vpack.c.bf16 %v261, %v261
    %v278 = vpack.c.bf16 %v262, %v262
    %v279 = vpack.c.bf16 %v263, %v263
    %v280 = vpack.c.bf16 %v264, %v264
    %v281 = vpack.c.bf16 %v265, %v265
    %v282 = vpack.c.bf16 %v266, %v266
    %v283 = vpack.c.bf16 %v267, %v267
    %v284 = vpack.c.bf16 %v268, %v268
    %v285 = vpack.c.bf16 %v269, %v269
    %v286 = vpack.c.bf16 %v270, %v270
    %v287 = vpack.c.bf16 %v271, %v271
    %v288 = vpack.c.bf16 %v272, %v272
    %v289 = vpack.c.bf16 %v273, %v273
    %v290 = vpack.c.bf16 %v274, %v274
    %291 = vst [vmem:[%s2] sm:$0xf] %v275
    %292 = vst [vmem:[%s2 + $0x4] sm:$0xf] %v276
    %293 = vst [vmem:[%s2 + $0x8] sm:$0xf] %v277
    %294 = vst [vmem:[%s2 + $0xc] sm:$0xf] %v278
    %295 = vst [vmem:[%s2 + $0x10] sm:$0xf] %v279
    %296 = vst [vmem:[%s2 + $0x14] sm:$0xf] %v280
    %297 = vst [vmem:[%s2 + $0x18] sm:$0xf] %v281
    %298 = vst [vmem:[%s2 + $0x1c] sm:$0xf] %v282
    %299 = vst [vmem:[%s2 + $0x20] sm:$0xf] %v283
    %300 = vst [vmem:[%s2 + $0x24] sm:$0xf] %v284
    %301 = vst [vmem:[%s2 + $0x28] sm:$0xf] %v285
    %302 = vst [vmem:[%s2 + $0x2c] sm:$0xf] %v286
    %303 = vst [vmem:[%s2 + $0x30] sm:$0xf] %v287
    %304 = vst [vmem:[%s2 + $0x34] sm:$0xf] %v288
    %305 = vst [vmem:[%s2 + $0x38] sm:$0xf] %v289
    %306 = vst [vmem:[%s2 + $0x3c] sm:$0xf] %v290
  $region17: #{gcnlink_forward.5} parent=0 // pred_fallthru
    _
  // Predicated region
  $region18: #{gcnlink_forward.5} parent=0 // pred_check
    _
  $region19: #{gcnlink_forward.5} parent=0 // pred_check_branch
    %308 = sbr.rel (0) target = $region21
  $region20: #{gcnlink_forward.5} parent=0 // pred_region
    _
  $region21: #{gcnlink_forward.5} parent=0 // pred_fallthru
    _
  // Predicated region
  $region22: #{gcnlink_forward.5} parent=0 // pred_check
    _
  $region23: #{gcnlink_forward.5} parent=0 // pred_check_branch
    %310 = sbr.rel (0) target = $region25
  $region24: #{gcnlink_forward.5} parent=0 // pred_region
    _
  $region25: #{gcnlink_forward.5} parent=0 // pred_fallthru
    _

// kernel: gcnlink_forward.8
$region0: #{gcnlink_forward.8}
  #allocation0 [shape = 'u32[]', space=smem, size = 0x4, offset = 0x4, fixed_abs, tag = 'smem constant byte address 0x4 - core index']
  #allocation1 [shape = 'u32[72,128]{1,0:T(1,128)}', space=vmem, size = 0x9000, scoped, tag = 'internal scratch']
  %s0 = inlined_call_operand.vmem [shape: bf16[128,128], index: 0, kind: input, shape index: {}]
  %s1 = inlined_call_operand.vmem [shape: bf16[128,128], index: 1, kind: input, shape index: {}]
  %s2 = inlined_call_operand.vmem [shape: f32[1,128], index: 2, kind: input, shape index: {}]
  %s3 = inlined_call_operand.vmem [shape: f32[128,128], index: 3, kind: output, shape index: {}]
  %s4 = sld [smem:[#allocation0]]
  $region26: #{gcnlink_forward.8} parent=0
    _
  %s6 = ssub.s32 1, %s4
  %s7 = scalar_select 0, %s6, %s4
  // Predicated region
  $region2: #{gcnlink_forward.8} parent=0 // pred_check
    _
  $region3: #{gcnlink_forward.8} parent=0 // pred_check_branch
    %9 = sbr.rel (0) target = $region5
  $region4: #{gcnlink_forward.8} parent=0 // pred_region
    _
  $region5: #{gcnlink_forward.8} parent=0 // pred_fallthru
    _
  // Predicated region
  $region6: #{gcnlink_forward.8} parent=0 // pred_check
    _
  $region7: #{gcnlink_forward.8} parent=0 // pred_check_branch
    %11 = sbr.rel (0) target = $region9
  $region8: #{gcnlink_forward.8} parent=0 // pred_region
    _
  $region9: #{gcnlink_forward.8} parent=0 // pred_fallthru
    _
  // Predicated region
  $region10: #{gcnlink_forward.8} parent=0 // pred_check
    _
  $region11: #{gcnlink_forward.8} parent=0 // pred_check_branch
    %13 = sbr.rel (0) target = $region13
  $region12: #{gcnlink_forward.8} parent=0 // pred_region
    _
  $region13: #{gcnlink_forward.8} parent=0 // pred_fallthru
    _
  %p14 = scmp.eq.s32.totalorder 0, 0
  // Predicated region
  $region14: #{gcnlink_forward.8} parent=0 // pred_check
    %p15 = pneg %p14
  $region15: #{gcnlink_forward.8} parent=0 // pred_check_branch
    %17 = sbr.rel (%p15) target = $region17
  $region16: #{gcnlink_forward.8} parent=0 // pred_region
    %v18 = vld [vmem:[%s2] sm:$0x1]
    %v20 = vperm.slane %v18, 0
    %22 = vst [vmem:[%s3] sm:$0xff] %v20
    %23 = vst [vmem:[%s3 + $0x8] sm:$0xff] %v20
    %24 = vst [vmem:[%s3 + $0x10] sm:$0xff] %v20
    %25 = vst [vmem:[%s3 + $0x18] sm:$0xff] %v20
    %26 = vst [vmem:[%s3 + $0x20] sm:$0xff] %v20
    %27 = vst [vmem:[%s3 + $0x28] sm:$0xff] %v20
    %28 = vst [vmem:[%s3 + $0x30] sm:$0xff] %v20
    %29 = vst [vmem:[%s3 + $0x38] sm:$0xff] %v20
    %30 = vst [vmem:[%s3 + $0x40] sm:$0xff] %v20
    %31 = vst [vmem:[%s3 + $0x48] sm:$0xff] %v20
    %32 = vst [vmem:[%s3 + $0x50] sm:$0xff] %v20
    %33 = vst [vmem:[%s3 + $0x58] sm:$0xff] %v20
    %34 = vst [vmem:[%s3 + $0x60] sm:$0xff] %v20
    %35 = vst [vmem:[%s3 + $0x68] sm:$0xff] %v20
    %36 = vst [vmem:[%s3 + $0x70] sm:$0xff] %v20
    %37 = vst [vmem:[%s3 + $0x78] sm:$0xff] %v20
  $region17: #{gcnlink_forward.8} parent=0 // pred_fallthru
    _
  %v38 = vld [vmem:[%s3] sm:$0xff]
  %v39 = vld [vmem:[%s3 + $0x8] sm:$0xff]
  %v40 = vld [vmem:[%s3 + $0x10] sm:$0xff]
  %v41 = vld [vmem:[%s3 + $0x18] sm:$0xff]
  %v42 = vld [vmem:[%s3 + $0x20] sm:$0xff]
  %v43 = vld [vmem:[%s3 + $0x28] sm:$0xff]
  %v44 = vld [vmem:[%s3 + $0x30] sm:$0xff]
  %v45 = vld [vmem:[%s3 + $0x38] sm:$0xff]
  %v46 = vld [vmem:[%s3 + $0x40] sm:$0xff]
  %v47 = vld [vmem:[%s3 + $0x48] sm:$0xff]
  %v48 = vld [vmem:[%s3 + $0x50] sm:$0xff]
  %v49 = vld [vmem:[%s3 + $0x58] sm:$0xff]
  %v50 = vld [vmem:[%s3 + $0x60] sm:$0xff]
  %v51 = vld [vmem:[%s3 + $0x68] sm:$0xff]
  %v52 = vld [vmem:[%s3 + $0x70] sm:$0xff]
  %v53 = vld [vmem:[%s3 + $0x78] sm:$0xff]
  %v54 = vld [vmem:[%s0] sm:$0xf]
  %v55 = vld [vmem:[%s0 + $0x4] sm:$0xf]
  %v56 = vld [vmem:[%s0 + $0x8] sm:$0xf]
  %v57 = vld [vmem:[%s0 + $0xc] sm:$0xf]
  %v58 = vld [vmem:[%s0 + $0x10] sm:$0xf]
  %v59 = vld [vmem:[%s0 + $0x14] sm:$0xf]
  %v60 = vld [vmem:[%s0 + $0x18] sm:$0xf]
  %v61 = vld [vmem:[%s0 + $0x1c] sm:$0xf]
  %v62 = vld [vmem:[%s0 + $0x20] sm:$0xf]
  %v63 = vld [vmem:[%s0 + $0x24] sm:$0xf]
  %v64 = vld [vmem:[%s0 + $0x28] sm:$0xf]
  %v65 = vld [vmem:[%s0 + $0x2c] sm:$0xf]
  %v66 = vld [vmem:[%s0 + $0x30] sm:$0xf]
  %v67 = vld [vmem:[%s0 + $0x34] sm:$0xf]
  %v68 = vld [vmem:[%s0 + $0x38] sm:$0xf]
  %v69 = vld [vmem:[%s0 + $0x3c] sm:$0xf]
  %v70 = vld [vmem:[%s1] sm:$0xf]
  %v71 = vld [vmem:[%s1 + $0x4] sm:$0xf]
  %v72 = vld [vmem:[%s1 + $0x8] sm:$0xf]
  %v73 = vld [vmem:[%s1 + $0xc] sm:$0xf]
  %v74 = vld [vmem:[%s1 + $0x10] sm:$0xf]
  %v75 = vld [vmem:[%s1 + $0x14] sm:$0xf]
  %v76 = vld [vmem:[%s1 + $0x18] sm:$0xf]
  %v77 = vld [vmem:[%s1 + $0x1c] sm:$0xf]
  %v78 = vld [vmem:[%s1 + $0x20] sm:$0xf]
  %v79 = vld [vmem:[%s1 + $0x24] sm:$0xf]
  %v80 = vld [vmem:[%s1 + $0x28] sm:$0xf]
  %v81 = vld [vmem:[%s1 + $0x2c] sm:$0xf]
  %v82 = vld [vmem:[%s1 + $0x30] sm:$0xf]
  %v83 = vld [vmem:[%s1 + $0x34] sm:$0xf]
  %v84 = vld [vmem:[%s1 + $0x38] sm:$0xf]
  %v85 = vld [vmem:[%s1 + $0x3c] sm:$0xf]
  %v102 = vunpack.c.l.b16 %v54
  %v103 = vunpack.c.l.b16 %v55
  %v104 = vunpack.c.l.b16 %v56
  %v105 = vunpack.c.l.b16 %v57
  %v106 = vunpack.c.l.b16 %v58
  %v107 = vunpack.c.l.b16 %v59
  %v108 = vunpack.c.l.b16 %v60
  %v109 = vunpack.c.l.b16 %v61
  %v110 = vunpack.c.l.b16 %v62
  %v111 = vunpack.c.l.b16 %v63
  %v112 = vunpack.c.l.b16 %v64
  %v113 = vunpack.c.l.b16 %v65
  %v114 = vunpack.c.l.b16 %v66
  %v115 = vunpack.c.l.b16 %v67
  %v116 = vunpack.c.l.b16 %v68
  %v117 = vunpack.c.l.b16 %v69
  %v118 = vpack.c.b16 %v103, %v102
  %v119 = vpack.c.b16 %v105, %v104
  %v120 = vpack.c.b16 %v107, %v106
  %v121 = vpack.c.b16 %v109, %v108
  %v122 = vpack.c.b16 %v111, %v110
  %v123 = vpack.c.b16 %v113, %v112
  %v124 = vpack.c.b16 %v115, %v114
  %v125 = vpack.c.b16 %v117, %v116
  %v150 = vunpack.c.l.b16 %v70
  %v151 = vunpack.c.l.b16 %v71
  %v152 = vunpack.c.l.b16 %v72
  %v153 = vunpack.c.l.b16 %v73
  %v154 = vunpack.c.l.b16 %v74
  %v155 = vunpack.c.l.b16 %v75
  %v156 = vunpack.c.l.b16 %v76
  %v157 = vunpack.c.l.b16 %v77
  %v158 = vunpack.c.l.b16 %v78
  %v159 = vunpack.c.l.b16 %v79
  %v160 = vunpack.c.l.b16 %v80
  %v161 = vunpack.c.l.b16 %v81
  %v162 = vunpack.c.l.b16 %v82
  %v163 = vunpack.c.l.b16 %v83
  %v164 = vunpack.c.l.b16 %v84
  %v165 = vunpack.c.l.b16 %v85
  %v166 = vpack.c.b16 %v151, %v150
  %v167 = vpack.c.b16 %v153, %v152
  %v168 = vpack.c.b16 %v155, %v154
  %v169 = vpack.c.b16 %v157, %v156
  %v170 = vpack.c.b16 %v159, %v158
  %v171 = vpack.c.b16 %v161, %v160
  %v172 = vpack.c.b16 %v163, %v162
  %v173 = vpack.c.b16 %v165, %v164
  %182 = vmatpush.bf16.msra.mxu0 %v173
  %183 = vmatpush.bf16.msra.mxu0 %v172
  %184 = vmatpush.bf16.msra.mxu0 %v171
  %185 = vmatpush.bf16.msra.mxu0 %v170
  %186 = vmatpush.bf16.msra.mxu0 %v169
  %187 = vmatpush.bf16.msra.mxu0 %v168
  %188 = vmatpush.bf16.msra.mxu0 %v167
  %189 = vmatpush.bf16.msra.mxu0 %v166
  %190 = vmatmul.bf16.gmra.mxu0 %v118
  %v191 = vpop.f32.mrf.mxu0
  %v192 = vadd.f32 0.0, %v191
  %v193 = vpop.f32.mrf.mxu0
  %v194 = vadd.f32 0.0, %v193
  %195 = vmatmul.bf16.gmra.mxu0 %v119
  %v196 = vpop.f32.mrf.mxu0
  %v197 = vadd.f32 0.0, %v196
  %v198 = vpop.f32.mrf.mxu0
  %v199 = vadd.f32 0.0, %v198
  %200 = vmatmul.bf16.gmra.mxu0 %v120
  %v201 = vpop.f32.mrf.mxu0
  %v202 = vadd.f32 0.0, %v201
  %v203 = vpop.f32.mrf.mxu0
  %v204 = vadd.f32 0.0, %v203
  %205 = vmatmul.bf16.gmra.mxu0 %v121
  %v206 = vpop.f32.mrf.mxu0
  %v207 = vadd.f32 0.0, %v206
  %v208 = vpop.f32.mrf.mxu0
  %v209 = vadd.f32 0.0, %v208
  %210 = vmatmul.bf16.gmra.mxu0 %v122
  %v211 = vpop.f32.mrf.mxu0
  %v212 = vadd.f32 0.0, %v211
  %v213 = vpop.f32.mrf.mxu0
  %v214 = vadd.f32 0.0, %v213
  %215 = vmatmul.bf16.gmra.mxu0 %v123
  %v216 = vpop.f32.mrf.mxu0
  %v217 = vadd.f32 0.0, %v216
  %v218 = vpop.f32.mrf.mxu0
  %v219 = vadd.f32 0.0, %v218
  %220 = vmatmul.bf16.gmra.mxu0 %v124
  %v221 = vpop.f32.mrf.mxu0
  %v222 = vadd.f32 0.0, %v221
  %v223 = vpop.f32.mrf.mxu0
  %v224 = vadd.f32 0.0, %v223
  %225 = vmatmul.bf16.gmra.mxu0 %v125
  %v226 = vpop.f32.mrf.mxu0
  %v227 = vadd.f32 0.0, %v226
  %v228 = vpop.f32.mrf.mxu0
  %v229 = vadd.f32 0.0, %v228
  %230 = vdwg.mxu0
  %v231 = vadd.f32 %v38, %v192
  %v232 = vadd.f32 %v39, %v194
  %v233 = vadd.f32 %v40, %v197
  %v234 = vadd.f32 %v41, %v199
  %v235 = vadd.f32 %v42, %v202
  %v236 = vadd.f32 %v43, %v204
  %v237 = vadd.f32 %v44, %v207
  %v238 = vadd.f32 %v45, %v209
  %v239 = vadd.f32 %v46, %v212
  %v240 = vadd.f32 %v47, %v214
  %v241 = vadd.f32 %v48, %v217
  %v242 = vadd.f32 %v49, %v219
  %v243 = vadd.f32 %v50, %v222
  %v244 = vadd.f32 %v51, %v224
  %v245 = vadd.f32 %v52, %v227
  %v246 = vadd.f32 %v53, %v229
  %247 = vst [vmem:[%s3] sm:$0xff] %v231
  %248 = vst [vmem:[%s3 + $0x8] sm:$0xff] %v232
  %249 = vst [vmem:[%s3 + $0x10] sm:$0xff] %v233
  %250 = vst [vmem:[%s3 + $0x18] sm:$0xff] %v234
  %251 = vst [vmem:[%s3 + $0x20] sm:$0xff] %v235
  %252 = vst [vmem:[%s3 + $0x28] sm:$0xff] %v236
  %253 = vst [vmem:[%s3 + $0x30] sm:$0xff] %v237
  %254 = vst [vmem:[%s3 + $0x38] sm:$0xff] %v238
  %255 = vst [vmem:[%s3 + $0x40] sm:$0xff] %v239
  %256 = vst [vmem:[%s3 + $0x48] sm:$0xff] %v240
  %257 = vst [vmem:[%s3 + $0x50] sm:$0xff] %v241
  %258 = vst [vmem:[%s3 + $0x58] sm:$0xff] %v242
  %259 = vst [vmem:[%s3 + $0x60] sm:$0xff] %v243
  %260 = vst [vmem:[%s3 + $0x68] sm:$0xff] %v244
  %261 = vst [vmem:[%s3 + $0x70] sm:$0xff] %v245
  %262 = vst [vmem:[%s3 + $0x78] sm:$0xff] %v246
  // Predicated region
  $region18: #{gcnlink_forward.8} parent=0 // pred_check
    _
  $region19: #{gcnlink_forward.8} parent=0 // pred_check_branch
    %264 = sbr.rel (0) target = $region21
  $region20: #{gcnlink_forward.8} parent=0 // pred_region
    _
  $region21: #{gcnlink_forward.8} parent=0 // pred_fallthru
    _
  // Predicated region
  $region22: #{gcnlink_forward.8} parent=0 // pred_check
    _
  $region23: #{gcnlink_forward.8} parent=0 // pred_check_branch
    %266 = sbr.rel (0) target = $region25
  $region24: #{gcnlink_forward.8} parent=0 // pred_region
    _
  $region25: #{gcnlink_forward.8} parent=0 // pred_fallthru
    _

// kernel: gcnlink_forward.6
$region0: #{gcnlink_forward.6}
  #allocation0 [shape = 'u32[]', space=smem, size = 0x4, offset = 0x4, fixed_abs, tag = 'smem constant byte address 0x4 - core index']
  #allocation1 [shape = 'u32[72,128]{1,0:T(1,128)}', space=vmem, size = 0x9000, scoped, tag = 'internal scratch']
  #allocation2 [shape = 'f32[128,128]{1,0:T(8,128)}', space=vmem, size = 0x10000, scoped, tag = 'scratch operand']
  %s0 = inlined_call_operand.vmem [shape: bf16[128,128], index: 0, kind: input, shape index: {}]
  %s1 = inlined_call_operand.vmem [shape: bf16[128,128], index: 1, kind: input, shape index: {}]
  %s2 = inlined_call_operand.vmem [shape: f32[1,128], index: 2, kind: input, shape index: {}]
  %s3 = inlined_call_operand.vmem [shape: bf16[128,128], index: 3, kind: output, shape index: {}]
  %s4 = sld [smem:[#allocation0]]
  $region30: #{gcnlink_forward.6} parent=0
    _
  %s6 = ssub.s32 1, %s4
  %s7 = scalar_select 0, %s6, %s4
  // Predicated region
  $region2: #{gcnlink_forward.6} parent=0 // pred_check
    _
  $region3: #{gcnlink_forward.6} parent=0 // pred_check_branch
    %9 = sbr.rel (0) target = $region5
  $region4: #{gcnlink_forward.6} parent=0 // pred_region
    _
  $region5: #{gcnlink_forward.6} parent=0 // pred_fallthru
    _
  // Predicated region
  $region6: #{gcnlink_forward.6} parent=0 // pred_check
    _
  $region7: #{gcnlink_forward.6} parent=0 // pred_check_branch
    %11 = sbr.rel (0) target = $region9
  $region8: #{gcnlink_forward.6} parent=0 // pred_region
    _
  $region9: #{gcnlink_forward.6} parent=0 // pred_fallthru
    _
  // Predicated region
  $region10: #{gcnlink_forward.6} parent=0 // pred_check
    _
  $region11: #{gcnlink_forward.6} parent=0 // pred_check_branch
    %13 = sbr.rel (0) target = $region13
  $region12: #{gcnlink_forward.6} parent=0 // pred_region
    _
  $region13: #{gcnlink_forward.6} parent=0 // pred_fallthru
    _
  %p14 = scmp.eq.s32.totalorder 0, 0
  // Predicated region
  $region14: #{gcnlink_forward.6} parent=0 // pred_check
    %p15 = pneg %p14
  $region15: #{gcnlink_forward.6} parent=0 // pred_check_branch
    %17 = sbr.rel (%p15) target = $region17
  $region16: #{gcnlink_forward.6} parent=0 // pred_region
    %18 = vst [vmem:[#allocation2] sm:$0xff] 0.0
    %19 = vst [vmem:[#allocation2 + $0x8] sm:$0xff] 0.0
    %20 = vst [vmem:[#allocation2 + $0x10] sm:$0xff] 0.0
    %21 = vst [vmem:[#allocation2 + $0x18] sm:$0xff] 0.0
    %22 = vst [vmem:[#allocation2 + $0x20] sm:$0xff] 0.0
    %23 = vst [vmem:[#allocation2 + $0x28] sm:$0xff] 0.0
    %24 = vst [vmem:[#allocation2 + $0x30] sm:$0xff] 0.0
    %25 = vst [vmem:[#allocation2 + $0x38] sm:$0xff] 0.0
    %26 = vst [vmem:[#allocation2 + $0x40] sm:$0xff] 0.0
    %27 = vst [vmem:[#allocation2 + $0x48] sm:$0xff] 0.0
    %28 = vst [vmem:[#allocation2 + $0x50] sm:$0xff] 0.0
    %29 = vst [vmem:[#allocation2 + $0x58] sm:$0xff] 0.0
    %30 = vst [vmem:[#allocation2 + $0x60] sm:$0xff] 0.0
    %31 = vst [vmem:[#allocation2 + $0x68] sm:$0xff] 0.0
    %32 = vst [vmem:[#allocation2 + $0x70] sm:$0xff] 0.0
    %33 = vst [vmem:[#allocation2 + $0x78] sm:$0xff] 0.0
  $region17: #{gcnlink_forward.6} parent=0 // pred_fallthru
    _
  %v34 = vld [vmem:[#allocation2] sm:$0xff]
  %v35 = vld [vmem:[#allocation2 + $0x8] sm:$0xff]
  %v36 = vld [vmem:[#allocation2 + $0x10] sm:$0xff]
  %v37 = vld [vmem:[#allocation2 + $0x18] sm:$0xff]
  %v38 = vld [vmem:[#allocation2 + $0x20] sm:$0xff]
  %v39 = vld [vmem:[#allocation2 + $0x28] sm:$0xff]
  %v40 = vld [vmem:[#allocation2 + $0x30] sm:$0xff]
  %v41 = vld [vmem:[#allocation2 + $0x38] sm:$0xff]
  %v42 = vld [vmem:[#allocation2 + $0x40] sm:$0xff]
  %v43 = vld [vmem:[#allocation2 + $0x48] sm:$0xff]
  %v44 = vld [vmem:[#allocation2 + $0x50] sm:$0xff]
  %v45 = vld [vmem:[#allocation2 + $0x58] sm:$0xff]
  %v46 = vld [vmem:[#allocation2 + $0x60] sm:$0xff]
  %v47 = vld [vmem:[#allocation2 + $0x68] sm:$0xff]
  %v48 = vld [vmem:[#allocation2 + $0x70] sm:$0xff]
  %v49 = vld [vmem:[#allocation2 + $0x78] sm:$0xff]
  %v50 = vld [vmem:[%s0] sm:$0xf]
  %v51 = vld [vmem:[%s0 + $0x4] sm:$0xf]
  %v52 = vld [vmem:[%s0 + $0x8] sm:$0xf]
  %v53 = vld [vmem:[%s0 + $0xc] sm:$0xf]
  %v54 = vld [vmem:[%s0 + $0x10] sm:$0xf]
  %v55 = vld [vmem:[%s0 + $0x14] sm:$0xf]
  %v56 = vld [vmem:[%s0 + $0x18] sm:$0xf]
  %v57 = vld [vmem:[%s0 + $0x1c] sm:$0xf]
  %v58 = vld [vmem:[%s0 + $0x20] sm:$0xf]
  %v59 = vld [vmem:[%s0 + $0x24] sm:$0xf]
  %v60 = vld [vmem:[%s0 + $0x28] sm:$0xf]
  %v61 = vld [vmem:[%s0 + $0x2c] sm:$0xf]
  %v62 = vld [vmem:[%s0 + $0x30] sm:$0xf]
  %v63 = vld [vmem:[%s0 + $0x34] sm:$0xf]
  %v64 = vld [vmem:[%s0 + $0x38] sm:$0xf]
  %v65 = vld [vmem:[%s0 + $0x3c] sm:$0xf]
  %v66 = vld [vmem:[%s1] sm:$0xf]
  %v67 = vld [vmem:[%s1 + $0x4] sm:$0xf]
  %v68 = vld [vmem:[%s1 + $0x8] sm:$0xf]
  %v69 = vld [vmem:[%s1 + $0xc] sm:$0xf]
  %v70 = vld [vmem:[%s1 + $0x10] sm:$0xf]
  %v71 = vld [vmem:[%s1 + $0x14] sm:$0xf]
  %v72 = vld [vmem:[%s1 + $0x18] sm:$0xf]
  %v73 = vld [vmem:[%s1 + $0x1c] sm:$0xf]
  %v74 = vld [vmem:[%s1 + $0x20] sm:$0xf]
  %v75 = vld [vmem:[%s1 + $0x24] sm:$0xf]
  %v76 = vld [vmem:[%s1 + $0x28] sm:$0xf]
  %v77 = vld [vmem:[%s1 + $0x2c] sm:$0xf]
  %v78 = vld [vmem:[%s1 + $0x30] sm:$0xf]
  %v79 = vld [vmem:[%s1 + $0x34] sm:$0xf]
  %v80 = vld [vmem:[%s1 + $0x38] sm:$0xf]
  %v81 = vld [vmem:[%s1 + $0x3c] sm:$0xf]
  %v98 = vunpack.c.l.b16 %v50
  %v99 = vunpack.c.l.b16 %v51
  %v100 = vunpack.c.l.b16 %v52
  %v101 = vunpack.c.l.b16 %v53
  %v102 = vunpack.c.l.b16 %v54
  %v103 = vunpack.c.l.b16 %v55
  %v104 = vunpack.c.l.b16 %v56
  %v105 = vunpack.c.l.b16 %v57
  %v106 = vunpack.c.l.b16 %v58
  %v107 = vunpack.c.l.b16 %v59
  %v108 = vunpack.c.l.b16 %v60
  %v109 = vunpack.c.l.b16 %v61
  %v110 = vunpack.c.l.b16 %v62
  %v111 = vunpack.c.l.b16 %v63
  %v112 = vunpack.c.l.b16 %v64
  %v113 = vunpack.c.l.b16 %v65
  %v114 = vpack.c.b16 %v99, %v98
  %v115 = vpack.c.b16 %v101, %v100
  %v116 = vpack.c.b16 %v103, %v102
  %v117 = vpack.c.b16 %v105, %v104
  %v118 = vpack.c.b16 %v107, %v106
  %v119 = vpack.c.b16 %v109, %v108
  %v120 = vpack.c.b16 %v111, %v110
  %v121 = vpack.c.b16 %v113, %v112
  %v146 = vunpack.c.l.b16 %v66
  %v147 = vunpack.c.l.b16 %v67
  %v148 = vunpack.c.l.b16 %v68
  %v149 = vunpack.c.l.b16 %v69
  %v150 = vunpack.c.l.b16 %v70
  %v151 = vunpack.c.l.b16 %v71
  %v152 = vunpack.c.l.b16 %v72
  %v153 = vunpack.c.l.b16 %v73
  %v154 = vunpack.c.l.b16 %v74
  %v155 = vunpack.c.l.b16 %v75
  %v156 = vunpack.c.l.b16 %v76
  %v157 = vunpack.c.l.b16 %v77
  %v158 = vunpack.c.l.b16 %v78
  %v159 = vunpack.c.l.b16 %v79
  %v160 = vunpack.c.l.b16 %v80
  %v161 = vunpack.c.l.b16 %v81
  %v162 = vpack.c.b16 %v147, %v146
  %v163 = vpack.c.b16 %v149, %v148
  %v164 = vpack.c.b16 %v151, %v150
  %v165 = vpack.c.b16 %v153, %v152
  %v166 = vpack.c.b16 %v155, %v154
  %v167 = vpack.c.b16 %v157, %v156
  %v168 = vpack.c.b16 %v159, %v158
  %v169 = vpack.c.b16 %v161, %v160
  %178 = vmatpush.bf16.msra.mxu0 %v169
  %179 = vmatpush.bf16.msra.mxu0 %v168
  %180 = vmatpush.bf16.msra.mxu0 %v167
  %181 = vmatpush.bf16.msra.mxu0 %v166
  %182 = vmatpush.bf16.msra.mxu0 %v165
  %183 = vmatpush.bf16.msra.mxu0 %v164
  %184 = vmatpush.bf16.msra.mxu0 %v163
  %185 = vmatpush.bf16.msra.mxu0 %v162
  %186 = vmatmul.bf16.gmra.mxu0 %v114
  %v187 = vpop.f32.mrf.mxu0
  %v188 = vadd.f32 0.0, %v187
  %v189 = vpop.f32.mrf.mxu0
  %v190 = vadd.f32 0.0, %v189
  %191 = vmatmul.bf16.gmra.mxu0 %v115
  %v192 = vpop.f32.mrf.mxu0
  %v193 = vadd.f32 0.0, %v192
  %v194 = vpop.f32.mrf.mxu0
  %v195 = vadd.f32 0.0, %v194
  %196 = vmatmul.bf16.gmra.mxu0 %v116
  %v197 = vpop.f32.mrf.mxu0
  %v198 = vadd.f32 0.0, %v197
  %v199 = vpop.f32.mrf.mxu0
  %v200 = vadd.f32 0.0, %v199
  %201 = vmatmul.bf16.gmra.mxu0 %v117
  %v202 = vpop.f32.mrf.mxu0
  %v203 = vadd.f32 0.0, %v202
  %v204 = vpop.f32.mrf.mxu0
  %v205 = vadd.f32 0.0, %v204
  %206 = vmatmul.bf16.gmra.mxu0 %v118
  %v207 = vpop.f32.mrf.mxu0
  %v208 = vadd.f32 0.0, %v207
  %v209 = vpop.f32.mrf.mxu0
  %v210 = vadd.f32 0.0, %v209
  %211 = vmatmul.bf16.gmra.mxu0 %v119
  %v212 = vpop.f32.mrf.mxu0
  %v213 = vadd.f32 0.0, %v212
  %v214 = vpop.f32.mrf.mxu0
  %v215 = vadd.f32 0.0, %v214
  %216 = vmatmul.bf16.gmra.mxu0 %v120
  %v217 = vpop.f32.mrf.mxu0
  %v218 = vadd.f32 0.0, %v217
  %v219 = vpop.f32.mrf.mxu0
  %v220 = vadd.f32 0.0, %v219
  %221 = vmatmul.bf16.gmra.mxu0 %v121
  %v222 = vpop.f32.mrf.mxu0
  %v223 = vadd.f32 0.0, %v222
  %v224 = vpop.f32.mrf.mxu0
  %v225 = vadd.f32 0.0, %v224
  %226 = vdwg.mxu0
  %v227 = vadd.f32 %v34, %v188
  %v228 = vadd.f32 %v35, %v190
  %v229 = vadd.f32 %v36, %v193
  %v230 = vadd.f32 %v37, %v195
  %v231 = vadd.f32 %v38, %v198
  %v232 = vadd.f32 %v39, %v200
  %v233 = vadd.f32 %v40, %v203
  %v234 = vadd.f32 %v41, %v205
  %v235 = vadd.f32 %v42, %v208
  %v236 = vadd.f32 %v43, %v210
  %v237 = vadd.f32 %v44, %v213
  %v238 = vadd.f32 %v45, %v215
  %v239 = vadd.f32 %v46, %v218
  %v240 = vadd.f32 %v47, %v220
  %v241 = vadd.f32 %v48, %v223
  %v242 = vadd.f32 %v49, %v225
  %243 = vst [vmem:[#allocation2] sm:$0xff] %v227
  %244 = vst [vmem:[#allocation2 + $0x8] sm:$0xff] %v228
  %245 = vst [vmem:[#allocation2 + $0x10] sm:$0xff] %v229
  %246 = vst [vmem:[#allocation2 + $0x18] sm:$0xff] %v230
  %247 = vst [vmem:[#allocation2 + $0x20] sm:$0xff] %v231
  %248 = vst [vmem:[#allocation2 + $0x28] sm:$0xff] %v232
  %249 = vst [vmem:[#allocation2 + $0x30] sm:$0xff] %v233
  %250 = vst [vmem:[#allocation2 + $0x38] sm:$0xff] %v234
  %251 = vst [vmem:[#allocation2 + $0x40] sm:$0xff] %v235
  %252 = vst [vmem:[#allocation2 + $0x48] sm:$0xff] %v236
  %253 = vst [vmem:[#allocation2 + $0x50] sm:$0xff] %v237
  %254 = vst [vmem:[#allocation2 + $0x58] sm:$0xff] %v238
  %255 = vst [vmem:[#allocation2 + $0x60] sm:$0xff] %v239
  %256 = vst [vmem:[#allocation2 + $0x68] sm:$0xff] %v240
  %257 = vst [vmem:[#allocation2 + $0x70] sm:$0xff] %v241
  %258 = vst [vmem:[#allocation2 + $0x78] sm:$0xff] %v242
  // Predicated region
  $region18: #{gcnlink_forward.6} parent=0 // pred_check
    %p259 = pneg %p14
  $region19: #{gcnlink_forward.6} parent=0 // pred_check_branch
    %261 = sbr.rel (%p259) target = $region21
  $region20: #{gcnlink_forward.6} parent=0 // pred_region
    %v262 = vld [vmem:[#allocation2] sm:$0xff]
    %v263 = vld [vmem:[#allocation2 + $0x8] sm:$0xff]
    %v264 = vld [vmem:[#allocation2 + $0x10] sm:$0xff]
    %v265 = vld [vmem:[#allocation2 + $0x18] sm:$0xff]
    %v266 = vld [vmem:[#allocation2 + $0x20] sm:$0xff]
    %v267 = vld [vmem:[#allocation2 + $0x28] sm:$0xff]
    %v268 = vld [vmem:[#allocation2 + $0x30] sm:$0xff]
    %v269 = vld [vmem:[#allocation2 + $0x38] sm:$0xff]
    %v270 = vld [vmem:[#allocation2 + $0x40] sm:$0xff]
    %v271 = vld [vmem:[#allocation2 + $0x48] sm:$0xff]
    %v272 = vld [vmem:[#allocation2 + $0x50] sm:$0xff]
    %v273 = vld [vmem:[#allocation2 + $0x58] sm:$0xff]
    %v274 = vld [vmem:[#allocation2 + $0x60] sm:$0xff]
    %v275 = vld [vmem:[#allocation2 + $0x68] sm:$0xff]
    %v276 = vld [vmem:[#allocation2 + $0x70] sm:$0xff]
    %v277 = vld [vmem:[#allocation2 + $0x78] sm:$0xff]
    %v278 = vld [vmem:[%s2] sm:$0x1]
    %v280 = vperm.slane %v278, 0
    %v282 = vadd.f32 %v262, %v280
    %v283 = vadd.f32 %v263, %v280
    %v284 = vadd.f32 %v264, %v280
    %v285 = vadd.f32 %v265, %v280
    %v286 = vadd.f32 %v266, %v280
    %v287 = vadd.f32 %v267, %v280
    %v288 = vadd.f32 %v268, %v280
    %v289 = vadd.f32 %v269, %v280
    %v290 = vadd.f32 %v270, %v280
    %v291 = vadd.f32 %v271, %v280
    %v292 = vadd.f32 %v272, %v280
    %v293 = vadd.f32 %v273, %v280
    %v294 = vadd.f32 %v274, %v280
    %v295 = vadd.f32 %v275, %v280
    %v296 = vadd.f32 %v276, %v280
    %v297 = vadd.f32 %v277, %v280
    %v298 = vmax.f32 %v282, 0.0
    %v299 = vmax.f32 %v283, 0.0
    %v300 = vmax.f32 %v284, 0.0
    %v301 = vmax.f32 %v285, 0.0
    %v302 = vmax.f32 %v286, 0.0
    %v303 = vmax.f32 %v287, 0.0
    %v304 = vmax.f32 %v288, 0.0
    %v305 = vmax.f32 %v289, 0.0
    %v306 = vmax.f32 %v290, 0.0
    %v307 = vmax.f32 %v291, 0.0
    %v308 = vmax.f32 %v292, 0.0
    %v309 = vmax.f32 %v293, 0.0
    %v310 = vmax.f32 %v294, 0.0
    %v311 = vmax.f32 %v295, 0.0
    %v312 = vmax.f32 %v296, 0.0
    %v313 = vmax.f32 %v297, 0.0
    %v314 = vpack.c.bf16 %v298, %v298
    %v315 = vpack.c.bf16 %v299, %v299
    %v316 = vpack.c.bf16 %v300, %v300
    %v317 = vpack.c.bf16 %v301, %v301
    %v318 = vpack.c.bf16 %v302, %v302
    %v319 = vpack.c.bf16 %v303, %v303
    %v320 = vpack.c.bf16 %v304, %v304
    %v321 = vpack.c.bf16 %v305, %v305
    %v322 = vpack.c.bf16 %v306, %v306
    %v323 = vpack.c.bf16 %v307, %v307
    %v324 = vpack.c.bf16 %v308, %v308
    %v325 = vpack.c.bf16 %v309, %v309
    %v326 = vpack.c.bf16 %v310, %v310
    %v327 = vpack.c.bf16 %v311, %v311
    %v328 = vpack.c.bf16 %v312, %v312
    %v329 = vpack.c.bf16 %v313, %v313
    %330 = vst [vmem:[%s3] sm:$0xf] %v314
    %331 = vst [vmem:[%s3 + $0x4] sm:$0xf] %v315
    %332 = vst [vmem:[%s3 + $0x8] sm:$0xf] %v316
    %333 = vst [vmem:[%s3 + $0xc] sm:$0xf] %v317
    %334 = vst [vmem:[%s3 + $0x10] sm:$0xf] %v318
    %335 = vst [vmem:[%s3 + $0x14] sm:$0xf] %v319
    %336 = vst [vmem:[%s3 + $0x18] sm:$0xf] %v320
    %337 = vst [vmem:[%s3 + $0x1c] sm:$0xf] %v321
    %338 = vst [vmem:[%s3 + $0x20] sm:$0xf] %v322
    %339 = vst [vmem:[%s3 + $0x24] sm:$0xf] %v323
    %340 = vst [vmem:[%s3 + $0x28] sm:$0xf] %v324
    %341 = vst [vmem:[%s3 + $0x2c] sm:$0xf] %v325
    %342 = vst [vmem:[%s3 + $0x30] sm:$0xf] %v326
    %343 = vst [vmem:[%s3 + $0x34] sm:$0xf] %v327
    %344 = vst [vmem:[%s3 + $0x38] sm:$0xf] %v328
    %345 = vst [vmem:[%s3 + $0x3c] sm:$0xf] %v329
  $region21: #{gcnlink_forward.6} parent=0 // pred_fallthru
    _
  // Predicated region
  $region22: #{gcnlink_forward.6} parent=0 // pred_check
    _
  $region23: #{gcnlink_forward.6} parent=0 // pred_check_branch
    %347 = sbr.rel (0) target = $region25
  $region24: #{gcnlink_forward.6} parent=0 // pred_region
    _
  $region25: #{gcnlink_forward.6} parent=0 // pred_fallthru
    _
  // Predicated region
  $region26: #{gcnlink_forward.6} parent=0 // pred_check
    _
  $region27: #{gcnlink_forward.6} parent=0 // pred_check_branch
    %349 = sbr.rel (0) target = $region29
  $region28: #{gcnlink_forward.6} parent=0 // pred_region
    _
  $region29: #{gcnlink_forward.6} parent=0 // pred_fallthru
    _

// kernel: gcnlink_forward.9
$region0: #{gcnlink_forward.9}
  #allocation0 [shape = 'u32[]', space=smem, size = 0x4, offset = 0x4, fixed_abs, tag = 'smem constant byte address 0x4 - core index']
  #allocation1 [shape = 'u32[72,128]{1,0:T(1,128)}', space=vmem, size = 0x9000, scoped, tag = 'internal scratch']
  #allocation2 [shape = 'f32[8,128]{1,0:T(8,128)}', space=vmem, size = 0x1000, scoped, tag = 'scratch operand']
  #allocation3 [shape = 'f32[8,128]{1,0:T(8,128)}', space=vmem, size = 0x1000, scoped, tag = 'scratch operand']
  #allocation4 [shape = 's32[16]{0}', space=sflag, size = 0x40, scoped, tag = 'scratch operand']
  #allocation5 [shape = 's32[1]{0}', space=sflag, size = 0x4, scoped, tag = 'scoped memory for gcnlink_forward.9']
  #allocation6 [shape = 'u8[4096]{0}', space=smem, size = 0x1000, scoped, tag = 'prefetched SMEM operand 0']
  #allocation7 [shape = 's32[]', space=sflag, size = 0x4, offset = 0, fixed_abs, tag = 'sflag constant byte address 0x0 - dummy sync flag']
  #allocation8 [shape = 's32[]', space=sflag, size = 0x4, offset = 0, fixed_abs, tag = 'sflag constant byte address 0x0 - dummy sync flag']
  #allocation9 [shape = 's32[]', space=sflag, size = 0x4, offset = 0, fixed_abs, tag = 'sflag constant byte address 0x0 - dummy sync flag']
  #allocation10 [shape = 's32[]', space=sflag, size = 0x4, offset = 0, fixed_abs, tag = 'sflag constant byte address 0x0 - dummy sync flag']
  #allocation11 [shape = 's32[]', space=sflag, size = 0x4, offset = 0, fixed_abs, tag = 'sflag constant byte address 0x0 - dummy sync flag']
  #allocation12 [shape = 's32[]', space=sflag, size = 0x4, offset = 0, fixed_abs, tag = 'sflag constant byte address 0x0 - dummy sync flag']
  #allocation13 [shape = 's32[]', space=sflag, size = 0x4, offset = 0, fixed_abs, tag = 'sflag constant byte address 0x0 - dummy sync flag']
  #allocation14 [shape = 's32[]', space=sflag, size = 0x4, offset = 0, fixed_abs, tag = 'sflag constant byte address 0x0 - dummy sync flag']
  #allocation15 [shape = 's32[]', space=sflag, size = 0x4, offset = 0, fixed_abs, tag = 'sflag constant byte address 0x0 - dummy sync flag']
  #allocation16 [shape = 's32[]', space=sflag, size = 0x4, offset = 0, fixed_abs, tag = 'sflag constant byte address 0x0 - dummy sync flag']
  #allocation17 [shape = 's32[]', space=sflag, size = 0x4, offset = 0, fixed_abs, tag = 'sflag constant byte address 0x0 - dummy sync flag']
  #allocation18 [shape = 's32[]', space=sflag, size = 0x4, offset = 0, fixed_abs, tag = 'sflag constant byte address 0x0 - dummy sync flag']
  #allocation19 [shape = 's32[]', space=sflag, size = 0x4, offset = 0, fixed_abs, tag = 'sflag constant byte address 0x0 - dummy sync flag']
  #allocation20 [shape = 's32[]', space=sflag, size = 0x4, offset = 0, fixed_abs, tag = 'sflag constant byte address 0x0 - dummy sync flag']
  #allocation21 [shape = 's32[]', space=sflag, size = 0x4, offset = 0, fixed_abs, tag = 'sflag constant byte address 0x0 - dummy sync flag']
  #allocation22 [shape = 's32[]', space=sflag, size = 0x4, offset = 0, fixed_abs, tag = 'sflag constant byte address 0x0 - dummy sync flag']
  %s0 = inlined_call_operand.vmem [shape: s32[8,2], index: 0, kind: input, shape index: {}]
  %s1 = inlined_call_operand.vmem [shape: f32[1,128], index: 1, kind: input, shape index: {}]
  %s2 = inlined_call_operand.vmem [shape: f32[128,128], index: 2, kind: input, shape index: {}]
  %s3 = inlined_call_operand.vmem [shape: f32[8,128], index: 3, kind: output, shape index: {}]
  %s4 = sld [smem:[#allocation0]]
  $region494: #{gcnlink_forward.9} parent=0
    _
  %s6 = ssub.s32 1, %s4
  %s7 = scalar_select 0, %s6, %s4
  %s9 = sshll.u32 %s0, 4
  %s10 = int_to_ptr.vmem [resolvable:$true] %s9
  %12 = dma.vmem_to_smem %s10, 128, [#allocation6], [#allocation5]
  %14 = dma.done [#allocation5], 128
  %15 = sfence
  // Predicated region
  $region2: #{gcnlink_forward.9} parent=0 // pred_check
    _
  $region3: #{gcnlink_forward.9} parent=0 // pred_check_branch
    %17 = sbr.rel (0) target = $region5
  $region4: #{gcnlink_forward.9} parent=0 // pred_region
    _
  $region5: #{gcnlink_forward.9} parent=0 // pred_fallthru
    _
  %s18 = smul.u32 0, 8
  %s19 = smul.u32 %s18, 128
  %s20 = sld [smem:[#allocation6 + %s19]]
  %s21 = sadd.s32 %s19, 1
  %s22 = sld [smem:[#allocation6 + %s21]]
  %s23 = scalar_lea.vmem %s2, %s20
  // Predicated region
  $region6: #{gcnlink_forward.9} parent=0 // pred_check
    _
  $region7: #{gcnlink_forward.9} parent=0 // pred_check_branch
    %25 = sbr.rel target = $region9
  $region8: #{gcnlink_forward.9} parent=0 // pred_region
    // Predicated region
    $region21: #{gcnlink_forward.9} parent=8 // pred_check
      _
    $region22: #{gcnlink_forward.9} parent=8 // pred_check_branch
      %41 = sbr.rel (0) target = $region24
    $region23: #{gcnlink_forward.9} parent=8 // pred_region
      %s43 = ssub.s32 2, 1
      loop: start=0, step=1, limit=1
      $region25: #{gcnlink_forward.9} parent=23 // loop_pre_header
        _
      $region26: #{gcnlink_forward.9} parent=23 // loop_header
        %s45 = sphi 0, %s49
        %p46 = scmp.ge.s32.totalorder %s45, 1
        %s50 = sphi %s23, %s23
        %s51 = sphi [#allocation2], [#allocation2]
      $region27: #{gcnlink_forward.9} parent=23 // loop_header_branch
        %48 = sbr.rel (%p46) target = $region31
      $region28: #{gcnlink_forward.9} parent=23 // loop_body
        %v52 = vld [vmem:[%s50] sm:%s43]
        %53 = vst [vmem:[%s51] sm:%s43] %v52
      $region29: #{gcnlink_forward.9} parent=23 // loop_footer
        %s49 = sadd.s32 1, %s45
      $region30: #{gcnlink_forward.9} parent=23 // loop_footer_branch
        %44 = sbr.rel target = $region26
      $region31: #{gcnlink_forward.9} parent=23 // loop_exit
        _
    $region24: #{gcnlink_forward.9} parent=8 // pred_fallthru
      _
  $region9: #{gcnlink_forward.9} parent=0 // pred_fallthru
    _
  // Predicated region
  $region10: #{gcnlink_forward.9} parent=0 // pred_check
    _
  $region11: #{gcnlink_forward.9} parent=0 // pred_check_branch
    %27 = sbr.rel (0) target = $region13
  $region12: #{gcnlink_forward.9} parent=0 // pred_region
    %s29 = ssub.s32 2, 1
    loop: start=0, step=1, limit=1
    $region14: #{gcnlink_forward.9} parent=12 // loop_pre_header
      _
    $region15: #{gcnlink_forward.9} parent=12 // loop_header
      %s31 = sphi 0, %s35
      %p32 = scmp.ge.s32.totalorder %s31, 1
      %s36 = sphi %s23, %s23
      %s37 = sphi [#allocation2], [#allocation2]
    $region16: #{gcnlink_forward.9} parent=12 // loop_header_branch
      %34 = sbr.rel (%p32) target = $region20
    $region17: #{gcnlink_forward.9} parent=12 // loop_body
      %v38 = vld [vmem:[%s36] sm:%s29]
      %39 = vst [vmem:[%s37] sm:%s29] %v38
    $region18: #{gcnlink_forward.9} parent=12 // loop_footer
      %s35 = sadd.s32 1, %s31
    $region19: #{gcnlink_forward.9} parent=12 // loop_footer_branch
      %30 = sbr.rel target = $region15
    $region20: #{gcnlink_forward.9} parent=12 // loop_exit
      _
  $region13: #{gcnlink_forward.9} parent=0 // pred_fallthru
    _
  // Predicated region
  $region32: #{gcnlink_forward.9} parent=0 // pred_check
    _
  $region33: #{gcnlink_forward.9} parent=0 // pred_check_branch
    %56 = sbr.rel (0) target = $region35
  $region34: #{gcnlink_forward.9} parent=0 // pred_region
    %57 = vsyncadd [#allocation4], 16
  $region35: #{gcnlink_forward.9} parent=0 // pred_fallthru
    _
  %s58 = scalar_lea.vmem %s2, %s22
  %s59 = scalar_lea.sflag [#allocation4], 8
  // Predicated region
  $region36: #{gcnlink_forward.9} parent=0 // pred_check
    _
  $region37: #{gcnlink_forward.9} parent=0 // pred_check_branch
    %61 = sbr.rel target = $region39
  $region38: #{gcnlink_forward.9} parent=0 // pred_region
    // Predicated region
    $region51: #{gcnlink_forward.9} parent=38 // pred_check
      _
    $region52: #{gcnlink_forward.9} parent=38 // pred_check_branch
      %77 = sbr.rel (0) target = $region54
    $region53: #{gcnlink_forward.9} parent=38 // pred_region
      %s79 = ssub.s32 2, 1
      loop: start=0, step=1, limit=1
      $region55: #{gcnlink_forward.9} parent=53 // loop_pre_header
        _
      $region56: #{gcnlink_forward.9} parent=53 // loop_header
        %s81 = sphi 0, %s85
        %p82 = scmp.ge.s32.totalorder %s81, 1
        %s86 = sphi %s58, %s58
        %s87 = sphi [#allocation3], [#allocation3]
      $region57: #{gcnlink_forward.9} parent=53 // loop_header_branch
        %84 = sbr.rel (%p82) target = $region61
      $region58: #{gcnlink_forward.9} parent=53 // loop_body
        %v88 = vld [vmem:[%s86] sm:%s79]
        %89 = vst [vmem:[%s87] sm:%s79] %v88
      $region59: #{gcnlink_forward.9} parent=53 // loop_footer
        %s85 = sadd.s32 1, %s81
      $region60: #{gcnlink_forward.9} parent=53 // loop_footer_branch
        %80 = sbr.rel target = $region56
      $region61: #{gcnlink_forward.9} parent=53 // loop_exit
        _
    $region54: #{gcnlink_forward.9} parent=38 // pred_fallthru
      _
  $region39: #{gcnlink_forward.9} parent=0 // pred_fallthru
    _
  // Predicated region
  $region40: #{gcnlink_forward.9} parent=0 // pred_check
    _
  $region41: #{gcnlink_forward.9} parent=0 // pred_check_branch
    %63 = sbr.rel (0) target = $region43
  $region42: #{gcnlink_forward.9} parent=0 // pred_region
    %s65 = ssub.s32 2, 1
    loop: start=0, step=1, limit=1
    $region44: #{gcnlink_forward.9} parent=42 // loop_pre_header
      _
    $region45: #{gcnlink_forward.9} parent=42 // loop_header
      %s67 = sphi 0, %s71
      %p68 = scmp.ge.s32.totalorder %s67, 1
      %s72 = sphi %s58, %s58
      %s73 = sphi [#allocation3], [#allocation3]
    $region46: #{gcnlink_forward.9} parent=42 // loop_header_branch
      %70 = sbr.rel (%p68) target = $region50
    $region47: #{gcnlink_forward.9} parent=42 // loop_body
      %v74 = vld [vmem:[%s72] sm:%s65]
      %75 = vst [vmem:[%s73] sm:%s65] %v74
    $region48: #{gcnlink_forward.9} parent=42 // loop_footer
      %s71 = sadd.s32 1, %s67
    $region49: #{gcnlink_forward.9} parent=42 // loop_footer_branch
      %66 = sbr.rel target = $region45
    $region50: #{gcnlink_forward.9} parent=42 // loop_exit
      _
  $region43: #{gcnlink_forward.9} parent=0 // pred_fallthru
    _
  // Predicated region
  $region62: #{gcnlink_forward.9} parent=0 // pred_check
    _
  $region63: #{gcnlink_forward.9} parent=0 // pred_check_branch
    %92 = sbr.rel (0) target = $region65
  $region64: #{gcnlink_forward.9} parent=0 // pred_region
    %93 = vsyncadd %s59, 16
  $region65: #{gcnlink_forward.9} parent=0 // pred_fallthru
    _
  %s94 = sadd.s32 %s18, 1
  %s95 = smul.u32 %s94, 128
  %s96 = sld [smem:[#allocation6 + %s95]]
  %s97 = sadd.s32 %s95, 1
  %s98 = sld [smem:[#allocation6 + %s97]]
  %s99 = scalar_lea.vmem %s2, %s96
  %s100 = scalar_lea.vmem [#allocation2], 1
  %s101 = scalar_lea.sflag [#allocation4], 1
  // Predicated region
  $region66: #{gcnlink_forward.9} parent=0 // pred_check
    _
  $region67: #{gcnlink_forward.9} parent=0 // pred_check_branch
    %103 = sbr.rel target = $region69
  $region68: #{gcnlink_forward.9} parent=0 // pred_region
    // Predicated region
    $region81: #{gcnlink_forward.9} parent=68 // pred_check
      _
    $region82: #{gcnlink_forward.9} parent=68 // pred_check_branch
      %119 = sbr.rel (0) target = $region84
    $region83: #{gcnlink_forward.9} parent=68 // pred_region
      %s121 = ssub.s32 2, 1
      loop: start=0, step=1, limit=1
      $region85: #{gcnlink_forward.9} parent=83 // loop_pre_header
        _
      $region86: #{gcnlink_forward.9} parent=83 // loop_header
        %s123 = sphi 0, %s127
        %p124 = scmp.ge.s32.totalorder %s123, 1
        %s128 = sphi %s99, %s99
        %s129 = sphi %s100, %s100
      $region87: #{gcnlink_forward.9} parent=83 // loop_header_branch
        %126 = sbr.rel (%p124) target = $region91
      $region88: #{gcnlink_forward.9} parent=83 // loop_body
        %v130 = vld [vmem:[%s128] sm:%s121]
        %131 = vst [vmem:[%s129] sm:%s121] %v130
      $region89: #{gcnlink_forward.9} parent=83 // loop_footer
        %s127 = sadd.s32 1, %s123
      $region90: #{gcnlink_forward.9} parent=83 // loop_footer_branch
        %122 = sbr.rel target = $region86
      $region91: #{gcnlink_forward.9} parent=83 // loop_exit
        _
    $region84: #{gcnlink_forward.9} parent=68 // pred_fallthru
      _
  $region69: #{gcnlink_forward.9} parent=0 // pred_fallthru
    _
  // Predicated region
  $region70: #{gcnlink_forward.9} parent=0 // pred_check
    _
  $region71: #{gcnlink_forward.9} parent=0 // pred_check_branch
    %105 = sbr.rel (0) target = $region73
  $region72: #{gcnlink_forward.9} parent=0 // pred_region
    %s107 = ssub.s32 2, 1
    loop: start=0, step=1, limit=1
    $region74: #{gcnlink_forward.9} parent=72 // loop_pre_header
      _
    $region75: #{gcnlink_forward.9} parent=72 // loop_header
      %s109 = sphi 0, %s113
      %p110 = scmp.ge.s32.totalorder %s109, 1
      %s114 = sphi %s99, %s99
      %s115 = sphi %s100, %s100
    $region76: #{gcnlink_forward.9} parent=72 // loop_header_branch
      %112 = sbr.rel (%p110) target = $region80
    $region77: #{gcnlink_forward.9} parent=72 // loop_body
      %v116 = vld [vmem:[%s114] sm:%s107]
      %117 = vst [vmem:[%s115] sm:%s107] %v116
    $region78: #{gcnlink_forward.9} parent=72 // loop_footer
      %s113 = sadd.s32 1, %s109
    $region79: #{gcnlink_forward.9} parent=72 // loop_footer_branch
      %108 = sbr.rel target = $region75
    $region80: #{gcnlink_forward.9} parent=72 // loop_exit
      _
  $region73: #{gcnlink_forward.9} parent=0 // pred_fallthru
    _
  // Predicated region
  $region92: #{gcnlink_forward.9} parent=0 // pred_check
    _
  $region93: #{gcnlink_forward.9} parent=0 // pred_check_branch
    %134 = sbr.rel (0) target = $region95
  $region94: #{gcnlink_forward.9} parent=0 // pred_region
    %135 = vsyncadd %s101, 16
  $region95: #{gcnlink_forward.9} parent=0 // pred_fallthru
    _
  %s136 = scalar_lea.vmem %s2, %s98
  %s137 = scalar_lea.vmem [#allocation3], 1
  %s138 = scalar_lea.sflag [#allocation4], 9
  // Predicated region
  $region96: #{gcnlink_forward.9} parent=0 // pred_check
    _
  $region97: #{gcnlink_forward.9} parent=0 // pred_check_branch
    %140 = sbr.rel target = $region99
  $region98: #{gcnlink_forward.9} parent=0 // pred_region
    // Predicated region
    $region111: #{gcnlink_forward.9} parent=98 // pred_check
      _
    $region112: #{gcnlink_forward.9} parent=98 // pred_check_branch
      %156 = sbr.rel (0) target = $region114
    $region113: #{gcnlink_forward.9} parent=98 // pred_region
      %s158 = ssub.s32 2, 1
      loop: start=0, step=1, limit=1
      $region115: #{gcnlink_forward.9} parent=113 // loop_pre_header
        _
      $region116: #{gcnlink_forward.9} parent=113 // loop_header
        %s160 = sphi 0, %s164
        %p161 = scmp.ge.s32.totalorder %s160, 1
        %s165 = sphi %s136, %s136
        %s166 = sphi %s137, %s137
      $region117: #{gcnlink_forward.9} parent=113 // loop_header_branch
        %163 = sbr.rel (%p161) target = $region121
      $region118: #{gcnlink_forward.9} parent=113 // loop_body
        %v167 = vld [vmem:[%s165] sm:%s158]
        %168 = vst [vmem:[%s166] sm:%s158] %v167
      $region119: #{gcnlink_forward.9} parent=113 // loop_footer
        %s164 = sadd.s32 1, %s160
      $region120: #{gcnlink_forward.9} parent=113 // loop_footer_branch
        %159 = sbr.rel target = $region116
      $region121: #{gcnlink_forward.9} parent=113 // loop_exit
        _
    $region114: #{gcnlink_forward.9} parent=98 // pred_fallthru
      _
  $region99: #{gcnlink_forward.9} parent=0 // pred_fallthru
    _
  // Predicated region
  $region100: #{gcnlink_forward.9} parent=0 // pred_check
    _
  $region101: #{gcnlink_forward.9} parent=0 // pred_check_branch
    %142 = sbr.rel (0) target = $region103
  $region102: #{gcnlink_forward.9} parent=0 // pred_region
    %s144 = ssub.s32 2, 1
    loop: start=0, step=1, limit=1
    $region104: #{gcnlink_forward.9} parent=102 // loop_pre_header
      _
    $region105: #{gcnlink_forward.9} parent=102 // loop_header
      %s146 = sphi 0, %s150
      %p147 = scmp.ge.s32.totalorder %s146, 1
      %s151 = sphi %s136, %s136
      %s152 = sphi %s137, %s137
    $region106: #{gcnlink_forward.9} parent=102 // loop_header_branch
      %149 = sbr.rel (%p147) target = $region110
    $region107: #{gcnlink_forward.9} parent=102 // loop_body
      %v153 = vld [vmem:[%s151] sm:%s144]
      %154 = vst [vmem:[%s152] sm:%s144] %v153
    $region108: #{gcnlink_forward.9} parent=102 // loop_footer
      %s150 = sadd.s32 1, %s146
    $region109: #{gcnlink_forward.9} parent=102 // loop_footer_branch
      %145 = sbr.rel target = $region105
    $region110: #{gcnlink_forward.9} parent=102 // loop_exit
      _
  $region103: #{gcnlink_forward.9} parent=0 // pred_fallthru
    _
  // Predicated region
  $region122: #{gcnlink_forward.9} parent=0 // pred_check
    _
  $region123: #{gcnlink_forward.9} parent=0 // pred_check_branch
    %171 = sbr.rel (0) target = $region125
  $region124: #{gcnlink_forward.9} parent=0 // pred_region
    %172 = vsyncadd %s138, 16
  $region125: #{gcnlink_forward.9} parent=0 // pred_fallthru
    _
  %s173 = sadd.s32 %s18, 2
  %s174 = smul.u32 %s173, 128
  %s175 = sld [smem:[#allocation6 + %s174]]
  %s176 = sadd.s32 %s174, 1
  %s177 = sld [smem:[#allocation6 + %s176]]
  %s178 = scalar_lea.vmem %s2, %s175
  %s179 = scalar_lea.vmem [#allocation2], 2
  %s180 = scalar_lea.sflag [#allocation4], 2
  // Predicated region
  $region126: #{gcnlink_forward.9} parent=0 // pred_check
    _
  $region127: #{gcnlink_forward.9} parent=0 // pred_check_branch
    %182 = sbr.rel target = $region129
  $region128: #{gcnlink_forward.9} parent=0 // pred_region
    // Predicated region
    $region141: #{gcnlink_forward.9} parent=128 // pred_check
      _
    $region142: #{gcnlink_forward.9} parent=128 // pred_check_branch
      %198 = sbr.rel (0) target = $region144
    $region143: #{gcnlink_forward.9} parent=128 // pred_region
      %s200 = ssub.s32 2, 1
      loop: start=0, step=1, limit=1
      $region145: #{gcnlink_forward.9} parent=143 // loop_pre_header
        _
      $region146: #{gcnlink_forward.9} parent=143 // loop_header
        %s202 = sphi 0, %s206
        %p203 = scmp.ge.s32.totalorder %s202, 1
        %s207 = sphi %s178, %s178
        %s208 = sphi %s179, %s179
      $region147: #{gcnlink_forward.9} parent=143 // loop_header_branch
        %205 = sbr.rel (%p203) target = $region151
      $region148: #{gcnlink_forward.9} parent=143 // loop_body
        %v209 = vld [vmem:[%s207] sm:%s200]
        %210 = vst [vmem:[%s208] sm:%s200] %v209
      $region149: #{gcnlink_forward.9} parent=143 // loop_footer
        %s206 = sadd.s32 1, %s202
      $region150: #{gcnlink_forward.9} parent=143 // loop_footer_branch
        %201 = sbr.rel target = $region146
      $region151: #{gcnlink_forward.9} parent=143 // loop_exit
        _
    $region144: #{gcnlink_forward.9} parent=128 // pred_fallthru
      _
  $region129: #{gcnlink_forward.9} parent=0 // pred_fallthru
    _
  // Predicated region
  $region130: #{gcnlink_forward.9} parent=0 // pred_check
    _
  $region131: #{gcnlink_forward.9} parent=0 // pred_check_branch
    %184 = sbr.rel (0) target = $region133
  $region132: #{gcnlink_forward.9} parent=0 // pred_region
    %s186 = ssub.s32 2, 1
    loop: start=0, step=1, limit=1
    $region134: #{gcnlink_forward.9} parent=132 // loop_pre_header
      _
    $region135: #{gcnlink_forward.9} parent=132 // loop_header
      %s188 = sphi 0, %s192
      %p189 = scmp.ge.s32.totalorder %s188, 1
      %s193 = sphi %s178, %s178
      %s194 = sphi %s179, %s179
    $region136: #{gcnlink_forward.9} parent=132 // loop_header_branch
      %191 = sbr.rel (%p189) target = $region140
    $region137: #{gcnlink_forward.9} parent=132 // loop_body
      %v195 = vld [vmem:[%s193] sm:%s186]
      %196 = vst [vmem:[%s194] sm:%s186] %v195
    $region138: #{gcnlink_forward.9} parent=132 // loop_footer
      %s192 = sadd.s32 1, %s188
    $region139: #{gcnlink_forward.9} parent=132 // loop_footer_branch
      %187 = sbr.rel target = $region135
    $region140: #{gcnlink_forward.9} parent=132 // loop_exit
      _
  $region133: #{gcnlink_forward.9} parent=0 // pred_fallthru
    _
  // Predicated region
  $region152: #{gcnlink_forward.9} parent=0 // pred_check
    _
  $region153: #{gcnlink_forward.9} parent=0 // pred_check_branch
    %213 = sbr.rel (0) target = $region155
  $region154: #{gcnlink_forward.9} parent=0 // pred_region
    %214 = vsyncadd %s180, 16
  $region155: #{gcnlink_forward.9} parent=0 // pred_fallthru
    _
  %s215 = scalar_lea.vmem %s2, %s177
  %s216 = scalar_lea.vmem [#allocation3], 2
  %s217 = scalar_lea.sflag [#allocation4], 10
  // Predicated region
  $region156: #{gcnlink_forward.9} parent=0 // pred_check
    _
  $region157: #{gcnlink_forward.9} parent=0 // pred_check_branch
    %219 = sbr.rel target = $region159
  $region158: #{gcnlink_forward.9} parent=0 // pred_region
    // Predicated region
    $region171: #{gcnlink_forward.9} parent=158 // pred_check
      _
    $region172: #{gcnlink_forward.9} parent=158 // pred_check_branch
      %235 = sbr.rel (0) target = $region174
    $region173: #{gcnlink_forward.9} parent=158 // pred_region
      %s237 = ssub.s32 2, 1
      loop: start=0, step=1, limit=1
      $region175: #{gcnlink_forward.9} parent=173 // loop_pre_header
        _
      $region176: #{gcnlink_forward.9} parent=173 // loop_header
        %s239 = sphi 0, %s243
        %p240 = scmp.ge.s32.totalorder %s239, 1
        %s244 = sphi %s215, %s215
        %s245 = sphi %s216, %s216
      $region177: #{gcnlink_forward.9} parent=173 // loop_header_branch
        %242 = sbr.rel (%p240) target = $region181
      $region178: #{gcnlink_forward.9} parent=173 // loop_body
        %v246 = vld [vmem:[%s244] sm:%s237]
        %247 = vst [vmem:[%s245] sm:%s237] %v246
      $region179: #{gcnlink_forward.9} parent=173 // loop_footer
        %s243 = sadd.s32 1, %s239
      $region180: #{gcnlink_forward.9} parent=173 // loop_footer_branch
        %238 = sbr.rel target = $region176
      $region181: #{gcnlink_forward.9} parent=173 // loop_exit
        _
    $region174: #{gcnlink_forward.9} parent=158 // pred_fallthru
      _
  $region159: #{gcnlink_forward.9} parent=0 // pred_fallthru
    _
  // Predicated region
  $region160: #{gcnlink_forward.9} parent=0 // pred_check
    _
  $region161: #{gcnlink_forward.9} parent=0 // pred_check_branch
    %221 = sbr.rel (0) target = $region163
  $region162: #{gcnlink_forward.9} parent=0 // pred_region
    %s223 = ssub.s32 2, 1
    loop: start=0, step=1, limit=1
    $region164: #{gcnlink_forward.9} parent=162 // loop_pre_header
      _
    $region165: #{gcnlink_forward.9} parent=162 // loop_header
      %s225 = sphi 0, %s229
      %p226 = scmp.ge.s32.totalorder %s225, 1
      %s230 = sphi %s215, %s215
      %s231 = sphi %s216, %s216
    $region166: #{gcnlink_forward.9} parent=162 // loop_header_branch
      %228 = sbr.rel (%p226) target = $region170
    $region167: #{gcnlink_forward.9} parent=162 // loop_body
      %v232 = vld [vmem:[%s230] sm:%s223]
      %233 = vst [vmem:[%s231] sm:%s223] %v232
    $region168: #{gcnlink_forward.9} parent=162 // loop_footer
      %s229 = sadd.s32 1, %s225
    $region169: #{gcnlink_forward.9} parent=162 // loop_footer_branch
      %224 = sbr.rel target = $region165
    $region170: #{gcnlink_forward.9} parent=162 // loop_exit
      _
  $region163: #{gcnlink_forward.9} parent=0 // pred_fallthru
    _
  // Predicated region
  $region182: #{gcnlink_forward.9} parent=0 // pred_check
    _
  $region183: #{gcnlink_forward.9} parent=0 // pred_check_branch
    %250 = sbr.rel (0) target = $region185
  $region184: #{gcnlink_forward.9} parent=0 // pred_region
    %251 = vsyncadd %s217, 16
  $region185: #{gcnlink_forward.9} parent=0 // pred_fallthru
    _
  %s252 = sadd.s32 %s18, 3
  %s253 = smul.u32 %s252, 128
  %s254 = sld [smem:[#allocation6 + %s253]]
  %s255 = sadd.s32 %s253, 1
  %s256 = sld [smem:[#allocation6 + %s255]]
  %s257 = scalar_lea.vmem %s2, %s254
  %s258 = scalar_lea.vmem [#allocation2], 3
  %s259 = scalar_lea.sflag [#allocation4], 3
  // Predicated region
  $region186: #{gcnlink_forward.9} parent=0 // pred_check
    _
  $region187: #{gcnlink_forward.9} parent=0 // pred_check_branch
    %261 = sbr.rel target = $region189
  $region188: #{gcnlink_forward.9} parent=0 // pred_region
    // Predicated region
    $region201: #{gcnlink_forward.9} parent=188 // pred_check
      _
    $region202: #{gcnlink_forward.9} parent=188 // pred_check_branch
      %277 = sbr.rel (0) target = $region204
    $region203: #{gcnlink_forward.9} parent=188 // pred_region
      %s279 = ssub.s32 2, 1
      loop: start=0, step=1, limit=1
      $region205: #{gcnlink_forward.9} parent=203 // loop_pre_header
        _
      $region206: #{gcnlink_forward.9} parent=203 // loop_header
        %s281 = sphi 0, %s285
        %p282 = scmp.ge.s32.totalorder %s281, 1
        %s286 = sphi %s257, %s257
        %s287 = sphi %s258, %s258
      $region207: #{gcnlink_forward.9} parent=203 // loop_header_branch
        %284 = sbr.rel (%p282) target = $region211
      $region208: #{gcnlink_forward.9} parent=203 // loop_body
        %v288 = vld [vmem:[%s286] sm:%s279]
        %289 = vst [vmem:[%s287] sm:%s279] %v288
      $region209: #{gcnlink_forward.9} parent=203 // loop_footer
        %s285 = sadd.s32 1, %s281
      $region210: #{gcnlink_forward.9} parent=203 // loop_footer_branch
        %280 = sbr.rel target = $region206
      $region211: #{gcnlink_forward.9} parent=203 // loop_exit
        _
    $region204: #{gcnlink_forward.9} parent=188 // pred_fallthru
      _
  $region189: #{gcnlink_forward.9} parent=0 // pred_fallthru
    _
  // Predicated region
  $region190: #{gcnlink_forward.9} parent=0 // pred_check
    _
  $region191: #{gcnlink_forward.9} parent=0 // pred_check_branch
    %263 = sbr.rel (0) target = $region193
  $region192: #{gcnlink_forward.9} parent=0 // pred_region
    %s265 = ssub.s32 2, 1
    loop: start=0, step=1, limit=1
    $region194: #{gcnlink_forward.9} parent=192 // loop_pre_header
      _
    $region195: #{gcnlink_forward.9} parent=192 // loop_header
      %s267 = sphi 0, %s271
      %p268 = scmp.ge.s32.totalorder %s267, 1
      %s272 = sphi %s257, %s257
      %s273 = sphi %s258, %s258
    $region196: #{gcnlink_forward.9} parent=192 // loop_header_branch
      %270 = sbr.rel (%p268) target = $region200
    $region197: #{gcnlink_forward.9} parent=192 // loop_body
      %v274 = vld [vmem:[%s272] sm:%s265]
      %275 = vst [vmem:[%s273] sm:%s265] %v274
    $region198: #{gcnlink_forward.9} parent=192 // loop_footer
      %s271 = sadd.s32 1, %s267
    $region199: #{gcnlink_forward.9} parent=192 // loop_footer_branch
      %266 = sbr.rel target = $region195
    $region200: #{gcnlink_forward.9} parent=192 // loop_exit
      _
  $region193: #{gcnlink_forward.9} parent=0 // pred_fallthru
    _
  // Predicated region
  $region212: #{gcnlink_forward.9} parent=0 // pred_check
    _
  $region213: #{gcnlink_forward.9} parent=0 // pred_check_branch
    %292 = sbr.rel (0) target = $region215
  $region214: #{gcnlink_forward.9} parent=0 // pred_region
    %293 = vsyncadd %s259, 16
  $region215: #{gcnlink_forward.9} parent=0 // pred_fallthru
    _
  %s294 = scalar_lea.vmem %s2, %s256
  %s295 = scalar_lea.vmem [#allocation3], 3
  %s296 = scalar_lea.sflag [#allocation4], 11
  // Predicated region
  $region216: #{gcnlink_forward.9} parent=0 // pred_check
    _
  $region217: #{gcnlink_forward.9} parent=0 // pred_check_branch
    %298 = sbr.rel target = $region219
  $region218: #{gcnlink_forward.9} parent=0 // pred_region
    // Predicated region
    $region231: #{gcnlink_forward.9} parent=218 // pred_check
      _
    $region232: #{gcnlink_forward.9} parent=218 // pred_check_branch
      %314 = sbr.rel (0) target = $region234
    $region233: #{gcnlink_forward.9} parent=218 // pred_region
      %s316 = ssub.s32 2, 1
      loop: start=0, step=1, limit=1
      $region235: #{gcnlink_forward.9} parent=233 // loop_pre_header
        _
      $region236: #{gcnlink_forward.9} parent=233 // loop_header
        %s318 = sphi 0, %s322
        %p319 = scmp.ge.s32.totalorder %s318, 1
        %s323 = sphi %s294, %s294
        %s324 = sphi %s295, %s295
      $region237: #{gcnlink_forward.9} parent=233 // loop_header_branch
        %321 = sbr.rel (%p319) target = $region241
      $region238: #{gcnlink_forward.9} parent=233 // loop_body
        %v325 = vld [vmem:[%s323] sm:%s316]
        %326 = vst [vmem:[%s324] sm:%s316] %v325
      $region239: #{gcnlink_forward.9} parent=233 // loop_footer
        %s322 = sadd.s32 1, %s318
      $region240: #{gcnlink_forward.9} parent=233 // loop_footer_branch
        %317 = sbr.rel target = $region236
      $region241: #{gcnlink_forward.9} parent=233 // loop_exit
        _
    $region234: #{gcnlink_forward.9} parent=218 // pred_fallthru
      _
  $region219: #{gcnlink_forward.9} parent=0 // pred_fallthru
    _
  // Predicated region
  $region220: #{gcnlink_forward.9} parent=0 // pred_check
    _
  $region221: #{gcnlink_forward.9} parent=0 // pred_check_branch
    %300 = sbr.rel (0) target = $region223
  $region222: #{gcnlink_forward.9} parent=0 // pred_region
    %s302 = ssub.s32 2, 1
    loop: start=0, step=1, limit=1
    $region224: #{gcnlink_forward.9} parent=222 // loop_pre_header
      _
    $region225: #{gcnlink_forward.9} parent=222 // loop_header
      %s304 = sphi 0, %s308
      %p305 = scmp.ge.s32.totalorder %s304, 1
      %s309 = sphi %s294, %s294
      %s310 = sphi %s295, %s295
    $region226: #{gcnlink_forward.9} parent=222 // loop_header_branch
      %307 = sbr.rel (%p305) target = $region230
    $region227: #{gcnlink_forward.9} parent=222 // loop_body
      %v311 = vld [vmem:[%s309] sm:%s302]
      %312 = vst [vmem:[%s310] sm:%s302] %v311
    $region228: #{gcnlink_forward.9} parent=222 // loop_footer
      %s308 = sadd.s32 1, %s304
    $region229: #{gcnlink_forward.9} parent=222 // loop_footer_branch
      %303 = sbr.rel target = $region225
    $region230: #{gcnlink_forward.9} parent=222 // loop_exit
      _
  $region223: #{gcnlink_forward.9} parent=0 // pred_fallthru
    _
  // Predicated region
  $region242: #{gcnlink_forward.9} parent=0 // pred_check
    _
  $region243: #{gcnlink_forward.9} parent=0 // pred_check_branch
    %329 = sbr.rel (0) target = $region245
  $region244: #{gcnlink_forward.9} parent=0 // pred_region
    %330 = vsyncadd %s296, 16
  $region245: #{gcnlink_forward.9} parent=0 // pred_fallthru
    _
  %s331 = sadd.s32 %s18, 4
  %s332 = smul.u32 %s331, 128
  %s333 = sld [smem:[#allocation6 + %s332]]
  %s334 = sadd.s32 %s332, 1
  %s335 = sld [smem:[#allocation6 + %s334]]
  %s336 = scalar_lea.vmem %s2, %s333
  %s337 = scalar_lea.vmem [#allocation2], 4
  %s338 = scalar_lea.sflag [#allocation4], 4
  // Predicated region
  $region246: #{gcnlink_forward.9} parent=0 // pred_check
    _
  $region247: #{gcnlink_forward.9} parent=0 // pred_check_branch
    %340 = sbr.rel target = $region249
  $region248: #{gcnlink_forward.9} parent=0 // pred_region
    // Predicated region
    $region261: #{gcnlink_forward.9} parent=248 // pred_check
      _
    $region262: #{gcnlink_forward.9} parent=248 // pred_check_branch
      %356 = sbr.rel (0) target = $region264
    $region263: #{gcnlink_forward.9} parent=248 // pred_region
      %s358 = ssub.s32 2, 1
      loop: start=0, step=1, limit=1
      $region265: #{gcnlink_forward.9} parent=263 // loop_pre_header
        _
      $region266: #{gcnlink_forward.9} parent=263 // loop_header
        %s360 = sphi 0, %s364
        %p361 = scmp.ge.s32.totalorder %s360, 1
        %s365 = sphi %s336, %s336
        %s366 = sphi %s337, %s337
      $region267: #{gcnlink_forward.9} parent=263 // loop_header_branch
        %363 = sbr.rel (%p361) target = $region271
      $region268: #{gcnlink_forward.9} parent=263 // loop_body
        %v367 = vld [vmem:[%s365] sm:%s358]
        %368 = vst [vmem:[%s366] sm:%s358] %v367
      $region269: #{gcnlink_forward.9} parent=263 // loop_footer
        %s364 = sadd.s32 1, %s360
      $region270: #{gcnlink_forward.9} parent=263 // loop_footer_branch
        %359 = sbr.rel target = $region266
      $region271: #{gcnlink_forward.9} parent=263 // loop_exit
        _
    $region264: #{gcnlink_forward.9} parent=248 // pred_fallthru
      _
  $region249: #{gcnlink_forward.9} parent=0 // pred_fallthru
    _
  // Predicated region
  $region250: #{gcnlink_forward.9} parent=0 // pred_check
    _
  $region251: #{gcnlink_forward.9} parent=0 // pred_check_branch
    %342 = sbr.rel (0) target = $region253
  $region252: #{gcnlink_forward.9} parent=0 // pred_region
    %s344 = ssub.s32 2, 1
    loop: start=0, step=1, limit=1
    $region254: #{gcnlink_forward.9} parent=252 // loop_pre_header
      _
    $region255: #{gcnlink_forward.9} parent=252 // loop_header
      %s346 = sphi 0, %s350
      %p347 = scmp.ge.s32.totalorder %s346, 1
      %s351 = sphi %s336, %s336
      %s352 = sphi %s337, %s337
    $region256: #{gcnlink_forward.9} parent=252 // loop_header_branch
      %349 = sbr.rel (%p347) target = $region260
    $region257: #{gcnlink_forward.9} parent=252 // loop_body
      %v353 = vld [vmem:[%s351] sm:%s344]
      %354 = vst [vmem:[%s352] sm:%s344] %v353
    $region258: #{gcnlink_forward.9} parent=252 // loop_footer
      %s350 = sadd.s32 1, %s346
    $region259: #{gcnlink_forward.9} parent=252 // loop_footer_branch
      %345 = sbr.rel target = $region255
    $region260: #{gcnlink_forward.9} parent=252 // loop_exit
      _
  $region253: #{gcnlink_forward.9} parent=0 // pred_fallthru
    _
  // Predicated region
  $region272: #{gcnlink_forward.9} parent=0 // pred_check
    _
  $region273: #{gcnlink_forward.9} parent=0 // pred_check_branch
    %371 = sbr.rel (0) target = $region275
  $region274: #{gcnlink_forward.9} parent=0 // pred_region
    %372 = vsyncadd %s338, 16
  $region275: #{gcnlink_forward.9} parent=0 // pred_fallthru
    _
  %s373 = scalar_lea.vmem %s2, %s335
  %s374 = scalar_lea.vmem [#allocation3], 4
  %s375 = scalar_lea.sflag [#allocation4], 12
  // Predicated region
  $region276: #{gcnlink_forward.9} parent=0 // pred_check
    _
  $region277: #{gcnlink_forward.9} parent=0 // pred_check_branch
    %377 = sbr.rel target = $region279
  $region278: #{gcnlink_forward.9} parent=0 // pred_region
    // Predicated region
    $region291: #{gcnlink_forward.9} parent=278 // pred_check
      _
    $region292: #{gcnlink_forward.9} parent=278 // pred_check_branch
      %393 = sbr.rel (0) target = $region294
    $region293: #{gcnlink_forward.9} parent=278 // pred_region
      %s395 = ssub.s32 2, 1
      loop: start=0, step=1, limit=1
      $region295: #{gcnlink_forward.9} parent=293 // loop_pre_header
        _
      $region296: #{gcnlink_forward.9} parent=293 // loop_header
        %s397 = sphi 0, %s401
        %p398 = scmp.ge.s32.totalorder %s397, 1
        %s402 = sphi %s373, %s373
        %s403 = sphi %s374, %s374
      $region297: #{gcnlink_forward.9} parent=293 // loop_header_branch
        %400 = sbr.rel (%p398) target = $region301
      $region298: #{gcnlink_forward.9} parent=293 // loop_body
        %v404 = vld [vmem:[%s402] sm:%s395]
        %405 = vst [vmem:[%s403] sm:%s395] %v404
      $region299: #{gcnlink_forward.9} parent=293 // loop_footer
        %s401 = sadd.s32 1, %s397
      $region300: #{gcnlink_forward.9} parent=293 // loop_footer_branch
        %396 = sbr.rel target = $region296
      $region301: #{gcnlink_forward.9} parent=293 // loop_exit
        _
    $region294: #{gcnlink_forward.9} parent=278 // pred_fallthru
      _
  $region279: #{gcnlink_forward.9} parent=0 // pred_fallthru
    _
  // Predicated region
  $region280: #{gcnlink_forward.9} parent=0 // pred_check
    _
  $region281: #{gcnlink_forward.9} parent=0 // pred_check_branch
    %379 = sbr.rel (0) target = $region283
  $region282: #{gcnlink_forward.9} parent=0 // pred_region
    %s381 = ssub.s32 2, 1
    loop: start=0, step=1, limit=1
    $region284: #{gcnlink_forward.9} parent=282 // loop_pre_header
      _
    $region285: #{gcnlink_forward.9} parent=282 // loop_header
      %s383 = sphi 0, %s387
      %p384 = scmp.ge.s32.totalorder %s383, 1
      %s388 = sphi %s373, %s373
      %s389 = sphi %s374, %s374
    $region286: #{gcnlink_forward.9} parent=282 // loop_header_branch
      %386 = sbr.rel (%p384) target = $region290
    $region287: #{gcnlink_forward.9} parent=282 // loop_body
      %v390 = vld [vmem:[%s388] sm:%s381]
      %391 = vst [vmem:[%s389] sm:%s381] %v390
    $region288: #{gcnlink_forward.9} parent=282 // loop_footer
      %s387 = sadd.s32 1, %s383
    $region289: #{gcnlink_forward.9} parent=282 // loop_footer_branch
      %382 = sbr.rel target = $region285
    $region290: #{gcnlink_forward.9} parent=282 // loop_exit
      _
  $region283: #{gcnlink_forward.9} parent=0 // pred_fallthru
    _
  // Predicated region
  $region302: #{gcnlink_forward.9} parent=0 // pred_check
    _
  $region303: #{gcnlink_forward.9} parent=0 // pred_check_branch
    %408 = sbr.rel (0) target = $region305
  $region304: #{gcnlink_forward.9} parent=0 // pred_region
    %409 = vsyncadd %s375, 16
  $region305: #{gcnlink_forward.9} parent=0 // pred_fallthru
    _
  %s410 = sadd.s32 %s18, 5
  %s411 = smul.u32 %s410, 128
  %s412 = sld [smem:[#allocation6 + %s411]]
  %s413 = sadd.s32 %s411, 1
  %s414 = sld [smem:[#allocation6 + %s413]]
  %s415 = scalar_lea.vmem %s2, %s412
  %s416 = scalar_lea.vmem [#allocation2], 5
  %s417 = scalar_lea.sflag [#allocation4], 5
  // Predicated region
  $region306: #{gcnlink_forward.9} parent=0 // pred_check
    _
  $region307: #{gcnlink_forward.9} parent=0 // pred_check_branch
    %419 = sbr.rel target = $region309
  $region308: #{gcnlink_forward.9} parent=0 // pred_region
    // Predicated region
    $region321: #{gcnlink_forward.9} parent=308 // pred_check
      _
    $region322: #{gcnlink_forward.9} parent=308 // pred_check_branch
      %435 = sbr.rel (0) target = $region324
    $region323: #{gcnlink_forward.9} parent=308 // pred_region
      %s437 = ssub.s32 2, 1
      loop: start=0, step=1, limit=1
      $region325: #{gcnlink_forward.9} parent=323 // loop_pre_header
        _
      $region326: #{gcnlink_forward.9} parent=323 // loop_header
        %s439 = sphi 0, %s443
        %p440 = scmp.ge.s32.totalorder %s439, 1
        %s444 = sphi %s415, %s415
        %s445 = sphi %s416, %s416
      $region327: #{gcnlink_forward.9} parent=323 // loop_header_branch
        %442 = sbr.rel (%p440) target = $region331
      $region328: #{gcnlink_forward.9} parent=323 // loop_body
        %v446 = vld [vmem:[%s444] sm:%s437]
        %447 = vst [vmem:[%s445] sm:%s437] %v446
      $region329: #{gcnlink_forward.9} parent=323 // loop_footer
        %s443 = sadd.s32 1, %s439
      $region330: #{gcnlink_forward.9} parent=323 // loop_footer_branch
        %438 = sbr.rel target = $region326
      $region331: #{gcnlink_forward.9} parent=323 // loop_exit
        _
    $region324: #{gcnlink_forward.9} parent=308 // pred_fallthru
      _
  $region309: #{gcnlink_forward.9} parent=0 // pred_fallthru
    _
  // Predicated region
  $region310: #{gcnlink_forward.9} parent=0 // pred_check
    _
  $region311: #{gcnlink_forward.9} parent=0 // pred_check_branch
    %421 = sbr.rel (0) target = $region313
  $region312: #{gcnlink_forward.9} parent=0 // pred_region
    %s423 = ssub.s32 2, 1
    loop: start=0, step=1, limit=1
    $region314: #{gcnlink_forward.9} parent=312 // loop_pre_header
      _
    $region315: #{gcnlink_forward.9} parent=312 // loop_header
      %s425 = sphi 0, %s429
      %p426 = scmp.ge.s32.totalorder %s425, 1
      %s430 = sphi %s415, %s415
      %s431 = sphi %s416, %s416
    $region316: #{gcnlink_forward.9} parent=312 // loop_header_branch
      %428 = sbr.rel (%p426) target = $region320
    $region317: #{gcnlink_forward.9} parent=312 // loop_body
      %v432 = vld [vmem:[%s430] sm:%s423]
      %433 = vst [vmem:[%s431] sm:%s423] %v432
    $region318: #{gcnlink_forward.9} parent=312 // loop_footer
      %s429 = sadd.s32 1, %s425
    $region319: #{gcnlink_forward.9} parent=312 // loop_footer_branch
      %424 = sbr.rel target = $region315
    $region320: #{gcnlink_forward.9} parent=312 // loop_exit
      _
  $region313: #{gcnlink_forward.9} parent=0 // pred_fallthru
    _
  // Predicated region
  $region332: #{gcnlink_forward.9} parent=0 // pred_check
    _
  $region333: #{gcnlink_forward.9} parent=0 // pred_check_branch
    %450 = sbr.rel (0) target = $region335
  $region334: #{gcnlink_forward.9} parent=0 // pred_region
    %451 = vsyncadd %s417, 16
  $region335: #{gcnlink_forward.9} parent=0 // pred_fallthru
    _
  %s452 = scalar_lea.vmem %s2, %s414
  %s453 = scalar_lea.vmem [#allocation3], 5
  %s454 = scalar_lea.sflag [#allocation4], 13
  // Predicated region
  $region336: #{gcnlink_forward.9} parent=0 // pred_check
    _
  $region337: #{gcnlink_forward.9} parent=0 // pred_check_branch
    %456 = sbr.rel target = $region339
  $region338: #{gcnlink_forward.9} parent=0 // pred_region
    // Predicated region
    $region351: #{gcnlink_forward.9} parent=338 // pred_check
      _
    $region352: #{gcnlink_forward.9} parent=338 // pred_check_branch
      %472 = sbr.rel (0) target = $region354
    $region353: #{gcnlink_forward.9} parent=338 // pred_region
      %s474 = ssub.s32 2, 1
      loop: start=0, step=1, limit=1
      $region355: #{gcnlink_forward.9} parent=353 // loop_pre_header
        _
      $region356: #{gcnlink_forward.9} parent=353 // loop_header
        %s476 = sphi 0, %s480
        %p477 = scmp.ge.s32.totalorder %s476, 1
        %s481 = sphi %s452, %s452
        %s482 = sphi %s453, %s453
      $region357: #{gcnlink_forward.9} parent=353 // loop_header_branch
        %479 = sbr.rel (%p477) target = $region361
      $region358: #{gcnlink_forward.9} parent=353 // loop_body
        %v483 = vld [vmem:[%s481] sm:%s474]
        %484 = vst [vmem:[%s482] sm:%s474] %v483
      $region359: #{gcnlink_forward.9} parent=353 // loop_footer
        %s480 = sadd.s32 1, %s476
      $region360: #{gcnlink_forward.9} parent=353 // loop_footer_branch
        %475 = sbr.rel target = $region356
      $region361: #{gcnlink_forward.9} parent=353 // loop_exit
        _
    $region354: #{gcnlink_forward.9} parent=338 // pred_fallthru
      _
  $region339: #{gcnlink_forward.9} parent=0 // pred_fallthru
    _
  // Predicated region
  $region340: #{gcnlink_forward.9} parent=0 // pred_check
    _
  $region341: #{gcnlink_forward.9} parent=0 // pred_check_branch
    %458 = sbr.rel (0) target = $region343
  $region342: #{gcnlink_forward.9} parent=0 // pred_region
    %s460 = ssub.s32 2, 1
    loop: start=0, step=1, limit=1
    $region344: #{gcnlink_forward.9} parent=342 // loop_pre_header
      _
    $region345: #{gcnlink_forward.9} parent=342 // loop_header
      %s462 = sphi 0, %s466
      %p463 = scmp.ge.s32.totalorder %s462, 1
      %s467 = sphi %s452, %s452
      %s468 = sphi %s453, %s453
    $region346: #{gcnlink_forward.9} parent=342 // loop_header_branch
      %465 = sbr.rel (%p463) target = $region350
    $region347: #{gcnlink_forward.9} parent=342 // loop_body
      %v469 = vld [vmem:[%s467] sm:%s460]
      %470 = vst [vmem:[%s468] sm:%s460] %v469
    $region348: #{gcnlink_forward.9} parent=342 // loop_footer
      %s466 = sadd.s32 1, %s462
    $region349: #{gcnlink_forward.9} parent=342 // loop_footer_branch
      %461 = sbr.rel target = $region345
    $region350: #{gcnlink_forward.9} parent=342 // loop_exit
      _
  $region343: #{gcnlink_forward.9} parent=0 // pred_fallthru
    _
  // Predicated region
  $region362: #{gcnlink_forward.9} parent=0 // pred_check
    _
  $region363: #{gcnlink_forward.9} parent=0 // pred_check_branch
    %487 = sbr.rel (0) target = $region365
  $region364: #{gcnlink_forward.9} parent=0 // pred_region
    %488 = vsyncadd %s454, 16
  $region365: #{gcnlink_forward.9} parent=0 // pred_fallthru
    _
  %s489 = sadd.s32 %s18, 6
  %s490 = smul.u32 %s489, 128
  %s491 = sld [smem:[#allocation6 + %s490]]
  %s492 = sadd.s32 %s490, 1
  %s493 = sld [smem:[#allocation6 + %s492]]
  %s494 = scalar_lea.vmem %s2, %s491
  %s495 = scalar_lea.vmem [#allocation2], 6
  %s496 = scalar_lea.sflag [#allocation4], 6
  // Predicated region
  $region366: #{gcnlink_forward.9} parent=0 // pred_check
    _
  $region367: #{gcnlink_forward.9} parent=0 // pred_check_branch
    %498 = sbr.rel target = $region369
  $region368: #{gcnlink_forward.9} parent=0 // pred_region
    // Predicated region
    $region381: #{gcnlink_forward.9} parent=368 // pred_check
      _
    $region382: #{gcnlink_forward.9} parent=368 // pred_check_branch
      %514 = sbr.rel (0) target = $region384
    $region383: #{gcnlink_forward.9} parent=368 // pred_region
      %s516 = ssub.s32 2, 1
      loop: start=0, step=1, limit=1
      $region385: #{gcnlink_forward.9} parent=383 // loop_pre_header
        _
      $region386: #{gcnlink_forward.9} parent=383 // loop_header
        %s518 = sphi 0, %s522
        %p519 = scmp.ge.s32.totalorder %s518, 1
        %s523 = sphi %s494, %s494
        %s524 = sphi %s495, %s495
      $region387: #{gcnlink_forward.9} parent=383 // loop_header_branch
        %521 = sbr.rel (%p519) target = $region391
      $region388: #{gcnlink_forward.9} parent=383 // loop_body
        %v525 = vld [vmem:[%s523] sm:%s516]
        %526 = vst [vmem:[%s524] sm:%s516] %v525
      $region389: #{gcnlink_forward.9} parent=383 // loop_footer
        %s522 = sadd.s32 1, %s518
      $region390: #{gcnlink_forward.9} parent=383 // loop_footer_branch
        %517 = sbr.rel target = $region386
      $region391: #{gcnlink_forward.9} parent=383 // loop_exit
        _
    $region384: #{gcnlink_forward.9} parent=368 // pred_fallthru
      _
  $region369: #{gcnlink_forward.9} parent=0 // pred_fallthru
    _
  // Predicated region
  $region370: #{gcnlink_forward.9} parent=0 // pred_check
    _
  $region371: #{gcnlink_forward.9} parent=0 // pred_check_branch
    %500 = sbr.rel (0) target = $region373
  $region372: #{gcnlink_forward.9} parent=0 // pred_region
    %s502 = ssub.s32 2, 1
    loop: start=0, step=1, limit=1
    $region374: #{gcnlink_forward.9} parent=372 // loop_pre_header
      _
    $region375: #{gcnlink_forward.9} parent=372 // loop_header
      %s504 = sphi 0, %s508
      %p505 = scmp.ge.s32.totalorder %s504, 1
      %s509 = sphi %s494, %s494
      %s510 = sphi %s495, %s495
    $region376: #{gcnlink_forward.9} parent=372 // loop_header_branch
      %507 = sbr.rel (%p505) target = $region380
    $region377: #{gcnlink_forward.9} parent=372 // loop_body
      %v511 = vld [vmem:[%s509] sm:%s502]
      %512 = vst [vmem:[%s510] sm:%s502] %v511
    $region378: #{gcnlink_forward.9} parent=372 // loop_footer
      %s508 = sadd.s32 1, %s504
    $region379: #{gcnlink_forward.9} parent=372 // loop_footer_branch
      %503 = sbr.rel target = $region375
    $region380: #{gcnlink_forward.9} parent=372 // loop_exit
      _
  $region373: #{gcnlink_forward.9} parent=0 // pred_fallthru
    _
  // Predicated region
  $region392: #{gcnlink_forward.9} parent=0 // pred_check
    _
  $region393: #{gcnlink_forward.9} parent=0 // pred_check_branch
    %529 = sbr.rel (0) target = $region395
  $region394: #{gcnlink_forward.9} parent=0 // pred_region
    %530 = vsyncadd %s496, 16
  $region395: #{gcnlink_forward.9} parent=0 // pred_fallthru
    _
  %s531 = scalar_lea.vmem %s2, %s493
  %s532 = scalar_lea.vmem [#allocation3], 6
  %s533 = scalar_lea.sflag [#allocation4], 14
  // Predicated region
  $region396: #{gcnlink_forward.9} parent=0 // pred_check
    _
  $region397: #{gcnlink_forward.9} parent=0 // pred_check_branch
    %535 = sbr.rel target = $region399
  $region398: #{gcnlink_forward.9} parent=0 // pred_region
    // Predicated region
    $region411: #{gcnlink_forward.9} parent=398 // pred_check
      _
    $region412: #{gcnlink_forward.9} parent=398 // pred_check_branch
      %551 = sbr.rel (0) target = $region414
    $region413: #{gcnlink_forward.9} parent=398 // pred_region
      %s553 = ssub.s32 2, 1
      loop: start=0, step=1, limit=1
      $region415: #{gcnlink_forward.9} parent=413 // loop_pre_header
        _
      $region416: #{gcnlink_forward.9} parent=413 // loop_header
        %s555 = sphi 0, %s559
        %p556 = scmp.ge.s32.totalorder %s555, 1
        %s560 = sphi %s531, %s531
        %s561 = sphi %s532, %s532
      $region417: #{gcnlink_forward.9} parent=413 // loop_header_branch
        %558 = sbr.rel (%p556) target = $region421
      $region418: #{gcnlink_forward.9} parent=413 // loop_body
        %v562 = vld [vmem:[%s560] sm:%s553]
        %563 = vst [vmem:[%s561] sm:%s553] %v562
      $region419: #{gcnlink_forward.9} parent=413 // loop_footer
        %s559 = sadd.s32 1, %s555
      $region420: #{gcnlink_forward.9} parent=413 // loop_footer_branch
        %554 = sbr.rel target = $region416
      $region421: #{gcnlink_forward.9} parent=413 // loop_exit
        _
    $region414: #{gcnlink_forward.9} parent=398 // pred_fallthru
      _
  $region399: #{gcnlink_forward.9} parent=0 // pred_fallthru
    _
  // Predicated region
  $region400: #{gcnlink_forward.9} parent=0 // pred_check
    _
  $region401: #{gcnlink_forward.9} parent=0 // pred_check_branch
    %537 = sbr.rel (0) target = $region403
  $region402: #{gcnlink_forward.9} parent=0 // pred_region
    %s539 = ssub.s32 2, 1
    loop: start=0, step=1, limit=1
    $region404: #{gcnlink_forward.9} parent=402 // loop_pre_header
      _
    $region405: #{gcnlink_forward.9} parent=402 // loop_header
      %s541 = sphi 0, %s545
      %p542 = scmp.ge.s32.totalorder %s541, 1
      %s546 = sphi %s531, %s531
      %s547 = sphi %s532, %s532
    $region406: #{gcnlink_forward.9} parent=402 // loop_header_branch
      %544 = sbr.rel (%p542) target = $region410
    $region407: #{gcnlink_forward.9} parent=402 // loop_body
      %v548 = vld [vmem:[%s546] sm:%s539]
      %549 = vst [vmem:[%s547] sm:%s539] %v548
    $region408: #{gcnlink_forward.9} parent=402 // loop_footer
      %s545 = sadd.s32 1, %s541
    $region409: #{gcnlink_forward.9} parent=402 // loop_footer_branch
      %540 = sbr.rel target = $region405
    $region410: #{gcnlink_forward.9} parent=402 // loop_exit
      _
  $region403: #{gcnlink_forward.9} parent=0 // pred_fallthru
    _
  // Predicated region
  $region422: #{gcnlink_forward.9} parent=0 // pred_check
    _
  $region423: #{gcnlink_forward.9} parent=0 // pred_check_branch
    %566 = sbr.rel (0) target = $region425
  $region424: #{gcnlink_forward.9} parent=0 // pred_region
    %567 = vsyncadd %s533, 16
  $region425: #{gcnlink_forward.9} parent=0 // pred_fallthru
    _
  %s568 = sadd.s32 %s18, 7
  %s569 = smul.u32 %s568, 128
  %s570 = sld [smem:[#allocation6 + %s569]]
  %s571 = sadd.s32 %s569, 1
  %s572 = sld [smem:[#allocation6 + %s571]]
  %s573 = scalar_lea.vmem %s2, %s570
  %s574 = scalar_lea.vmem [#allocation2], 7
  %s575 = scalar_lea.sflag [#allocation4], 7
  // Predicated region
  $region426: #{gcnlink_forward.9} parent=0 // pred_check
    _
  $region427: #{gcnlink_forward.9} parent=0 // pred_check_branch
    %577 = sbr.rel target = $region429
  $region428: #{gcnlink_forward.9} parent=0 // pred_region
    // Predicated region
    $region441: #{gcnlink_forward.9} parent=428 // pred_check
      _
    $region442: #{gcnlink_forward.9} parent=428 // pred_check_branch
      %593 = sbr.rel (0) target = $region444
    $region443: #{gcnlink_forward.9} parent=428 // pred_region
      %s595 = ssub.s32 2, 1
      loop: start=0, step=1, limit=1
      $region445: #{gcnlink_forward.9} parent=443 // loop_pre_header
        _
      $region446: #{gcnlink_forward.9} parent=443 // loop_header
        %s597 = sphi 0, %s601
        %p598 = scmp.ge.s32.totalorder %s597, 1
        %s602 = sphi %s573, %s573
        %s603 = sphi %s574, %s574
      $region447: #{gcnlink_forward.9} parent=443 // loop_header_branch
        %600 = sbr.rel (%p598) target = $region451
      $region448: #{gcnlink_forward.9} parent=443 // loop_body
        %v604 = vld [vmem:[%s602] sm:%s595]
        %605 = vst [vmem:[%s603] sm:%s595] %v604
      $region449: #{gcnlink_forward.9} parent=443 // loop_footer
        %s601 = sadd.s32 1, %s597
      $region450: #{gcnlink_forward.9} parent=443 // loop_footer_branch
        %596 = sbr.rel target = $region446
      $region451: #{gcnlink_forward.9} parent=443 // loop_exit
        _
    $region444: #{gcnlink_forward.9} parent=428 // pred_fallthru
      _
  $region429: #{gcnlink_forward.9} parent=0 // pred_fallthru
    _
  // Predicated region
  $region430: #{gcnlink_forward.9} parent=0 // pred_check
    _
  $region431: #{gcnlink_forward.9} parent=0 // pred_check_branch
    %579 = sbr.rel (0) target = $region433
  $region432: #{gcnlink_forward.9} parent=0 // pred_region
    %s581 = ssub.s32 2, 1
    loop: start=0, step=1, limit=1
    $region434: #{gcnlink_forward.9} parent=432 // loop_pre_header
      _
    $region435: #{gcnlink_forward.9} parent=432 // loop_header
      %s583 = sphi 0, %s587
      %p584 = scmp.ge.s32.totalorder %s583, 1
      %s588 = sphi %s573, %s573
      %s589 = sphi %s574, %s574
    $region436: #{gcnlink_forward.9} parent=432 // loop_header_branch
      %586 = sbr.rel (%p584) target = $region440
    $region437: #{gcnlink_forward.9} parent=432 // loop_body
      %v590 = vld [vmem:[%s588] sm:%s581]
      %591 = vst [vmem:[%s589] sm:%s581] %v590
    $region438: #{gcnlink_forward.9} parent=432 // loop_footer
      %s587 = sadd.s32 1, %s583
    $region439: #{gcnlink_forward.9} parent=432 // loop_footer_branch
      %582 = sbr.rel target = $region435
    $region440: #{gcnlink_forward.9} parent=432 // loop_exit
      _
  $region433: #{gcnlink_forward.9} parent=0 // pred_fallthru
    _
  // Predicated region
  $region452: #{gcnlink_forward.9} parent=0 // pred_check
    _
  $region453: #{gcnlink_forward.9} parent=0 // pred_check_branch
    %608 = sbr.rel (0) target = $region455
  $region454: #{gcnlink_forward.9} parent=0 // pred_region
    %609 = vsyncadd %s575, 16
  $region455: #{gcnlink_forward.9} parent=0 // pred_fallthru
    _
  %s610 = scalar_lea.vmem %s2, %s572
  %s611 = scalar_lea.vmem [#allocation3], 7
  %s612 = scalar_lea.sflag [#allocation4], 15
  // Predicated region
  $region456: #{gcnlink_forward.9} parent=0 // pred_check
    _
  $region457: #{gcnlink_forward.9} parent=0 // pred_check_branch
    %614 = sbr.rel target = $region459
  $region458: #{gcnlink_forward.9} parent=0 // pred_region
    // Predicated region
    $region471: #{gcnlink_forward.9} parent=458 // pred_check
      _
    $region472: #{gcnlink_forward.9} parent=458 // pred_check_branch
      %630 = sbr.rel (0) target = $region474
    $region473: #{gcnlink_forward.9} parent=458 // pred_region
      %s632 = ssub.s32 2, 1
      loop: start=0, step=1, limit=1
      $region475: #{gcnlink_forward.9} parent=473 // loop_pre_header
        _
      $region476: #{gcnlink_forward.9} parent=473 // loop_header
        %s634 = sphi 0, %s638
        %p635 = scmp.ge.s32.totalorder %s634, 1
        %s639 = sphi %s610, %s610
        %s640 = sphi %s611, %s611
      $region477: #{gcnlink_forward.9} parent=473 // loop_header_branch
        %637 = sbr.rel (%p635) target = $region481
      $region478: #{gcnlink_forward.9} parent=473 // loop_body
        %v641 = vld [vmem:[%s639] sm:%s632]
        %642 = vst [vmem:[%s640] sm:%s632] %v641
      $region479: #{gcnlink_forward.9} parent=473 // loop_footer
        %s638 = sadd.s32 1, %s634
      $region480: #{gcnlink_forward.9} parent=473 // loop_footer_branch
        %633 = sbr.rel target = $region476
      $region481: #{gcnlink_forward.9} parent=473 // loop_exit
        _
    $region474: #{gcnlink_forward.9} parent=458 // pred_fallthru
      _
  $region459: #{gcnlink_forward.9} parent=0 // pred_fallthru
    _
  // Predicated region
  $region460: #{gcnlink_forward.9} parent=0 // pred_check
    _
  $region461: #{gcnlink_forward.9} parent=0 // pred_check_branch
    %616 = sbr.rel (0) target = $region463
  $region462: #{gcnlink_forward.9} parent=0 // pred_region
    %s618 = ssub.s32 2, 1
    loop: start=0, step=1, limit=1
    $region464: #{gcnlink_forward.9} parent=462 // loop_pre_header
      _
    $region465: #{gcnlink_forward.9} parent=462 // loop_header
      %s620 = sphi 0, %s624
      %p621 = scmp.ge.s32.totalorder %s620, 1
      %s625 = sphi %s610, %s610
      %s626 = sphi %s611, %s611
    $region466: #{gcnlink_forward.9} parent=462 // loop_header_branch
      %623 = sbr.rel (%p621) target = $region470
    $region467: #{gcnlink_forward.9} parent=462 // loop_body
      %v627 = vld [vmem:[%s625] sm:%s618]
      %628 = vst [vmem:[%s626] sm:%s618] %v627
    $region468: #{gcnlink_forward.9} parent=462 // loop_footer
      %s624 = sadd.s32 1, %s620
    $region469: #{gcnlink_forward.9} parent=462 // loop_footer_branch
      %619 = sbr.rel target = $region465
    $region470: #{gcnlink_forward.9} parent=462 // loop_exit
      _
  $region463: #{gcnlink_forward.9} parent=0 // pred_fallthru
    _
  // Predicated region
  $region482: #{gcnlink_forward.9} parent=0 // pred_check
    _
  $region483: #{gcnlink_forward.9} parent=0 // pred_check_branch
    %645 = sbr.rel (0) target = $region485
  $region484: #{gcnlink_forward.9} parent=0 // pred_region
    %646 = vsyncadd %s612, 16
  $region485: #{gcnlink_forward.9} parent=0 // pred_fallthru
    _
  %s647 = smul.u32 1, 1
  %s648 = sshll.u32 %s647, 4
  %649 = dma.done [#allocation4], %s648
  %s650 = sshll.u32 %s647, 4
  %651 = dma.done %s59, %s650
  %s652 = sshll.u32 %s647, 4
  %653 = dma.done %s101, %s652
  %s654 = sshll.u32 %s647, 4
  %655 = dma.done %s138, %s654
  %s656 = sshll.u32 %s647, 4
  %657 = dma.done %s180, %s656
  %s658 = sshll.u32 %s647, 4
  %659 = dma.done %s217, %s658
  %s660 = sshll.u32 %s647, 4
  %661 = dma.done %s259, %s660
  %s662 = sshll.u32 %s647, 4
  %663 = dma.done %s296, %s662
  %s664 = sshll.u32 %s647, 4
  %665 = dma.done %s338, %s664
  %s666 = sshll.u32 %s647, 4
  %667 = dma.done %s375, %s666
  %s668 = sshll.u32 %s647, 4
  %669 = dma.done %s417, %s668
  %s670 = sshll.u32 %s647, 4
  %671 = dma.done %s454, %s670
  %s672 = sshll.u32 %s647, 4
  %673 = dma.done %s496, %s672
  %s674 = sshll.u32 %s647, 4
  %675 = dma.done %s533, %s674
  %s676 = sshll.u32 %s647, 4
  %677 = dma.done %s575, %s676
  %s678 = sshll.u32 %s647, 4
  %679 = dma.done %s612, %s678
  %v680 = vld [vmem:[#allocation2] sm:$0xff]
  %v681 = vld [vmem:[%s1] sm:$0x1]
  %v683 = vperm.slane %v681, 0
  %v685 = vmul.f32 %v680, %v683
  %v686 = vld [vmem:[#allocation3] sm:$0xff]
  %v687 = vmul.f32 %v685, %v686
  %688 = vadd.xlane.f32.xlu0 %v687
  %v689 = vpop.xlane.xlu0 %688
  %690 = vst [vmem:[%s3] sm:$0xff] %v689
  // Predicated region
  $region486: #{gcnlink_forward.9} parent=0 // pred_check
    _
  $region487: #{gcnlink_forward.9} parent=0 // pred_check_branch
    %692 = sbr.rel (0) target = $region489
  $region488: #{gcnlink_forward.9} parent=0 // pred_region
    _
  $region489: #{gcnlink_forward.9} parent=0 // pred_fallthru
    _
  // Predicated region
  $region490: #{gcnlink_forward.9} parent=0 // pred_check
    _
  $region491: #{gcnlink_forward.9} parent=0 // pred_check_branch
    %694 = sbr.rel (0) target = $region493
  $region492: #{gcnlink_forward.9} parent=0 // pred_region
    _
  $region493: #{gcnlink_forward.9} parent=0 // pred_fallthru
    _
  %695 = vsyncmov [#allocation4]
  %s696 = vpop.sfrf %695
  %p697 = scmp.eq.s32.totalorder %s696, 0
  %p698 = pneg %p697
  %700 = shalt.err (%p698)
  %s701 = scalar_lea.sflag [#allocation4], 1
  %702 = vsyncmov %s701
  %s703 = vpop.sfrf %702
  %p704 = scmp.eq.s32.totalorder %s703, 0
  %p705 = pneg %p704
  %707 = shalt.err (%p705)
  %s708 = scalar_lea.sflag [#allocation4], 2
  %709 = vsyncmov %s708
  %s710 = vpop.sfrf %709
  %p711 = scmp.eq.s32.totalorder %s710, 0
  %p712 = pneg %p711
  %714 = shalt.err (%p712)
  %s715 = scalar_lea.sflag [#allocation4], 3
  %716 = vsyncmov %s715
  %s717 = vpop.sfrf %716
  %p718 = scmp.eq.s32.totalorder %s717, 0
  %p719 = pneg %p718
  %721 = shalt.err (%p719)
  %s722 = scalar_lea.sflag [#allocation4], 4
  %723 = vsyncmov %s722
  %s724 = vpop.sfrf %723
  %p725 = scmp.eq.s32.totalorder %s724, 0
  %p726 = pneg %p725
  %728 = shalt.err (%p726)
  %s729 = scalar_lea.sflag [#allocation4], 5
  %730 = vsyncmov %s729
  %s731 = vpop.sfrf %730
  %p732 = scmp.eq.s32.totalorder %s731, 0
  %p733 = pneg %p732
  %735 = shalt.err (%p733)
  %s736 = scalar_lea.sflag [#allocation4], 6
  %737 = vsyncmov %s736
  %s738 = vpop.sfrf %737
  %p739 = scmp.eq.s32.totalorder %s738, 0
  %p740 = pneg %p739
  %742 = shalt.err (%p740)
  %s743 = scalar_lea.sflag [#allocation4], 7
  %744 = vsyncmov %s743
  %s745 = vpop.sfrf %744
  %p746 = scmp.eq.s32.totalorder %s745, 0
  %p747 = pneg %p746
  %749 = shalt.err (%p747)
  %s750 = scalar_lea.sflag [#allocation4], 8
  %751 = vsyncmov %s750
  %s752 = vpop.sfrf %751
  %p753 = scmp.eq.s32.totalorder %s752, 0
  %p754 = pneg %p753
  %756 = shalt.err (%p754)
  %s757 = scalar_lea.sflag [#allocation4], 9
  %758 = vsyncmov %s757
  %s759 = vpop.sfrf %758
  %p760 = scmp.eq.s32.totalorder %s759, 0
  %p761 = pneg %p760
  %763 = shalt.err (%p761)
  %s764 = scalar_lea.sflag [#allocation4], 10
  %765 = vsyncmov %s764
  %s766 = vpop.sfrf %765
  %p767 = scmp.eq.s32.totalorder %s766, 0
  %p768 = pneg %p767
  %770 = shalt.err (%p768)
  %s771 = scalar_lea.sflag [#allocation4], 11
  %772 = vsyncmov %s771
  %s773 = vpop.sfrf %772
  %p774 = scmp.eq.s32.totalorder %s773, 0
  %p775 = pneg %p774
  %777 = shalt.err (%p775)
  %s778 = scalar_lea.sflag [#allocation4], 12
  %779 = vsyncmov %s778
  %s780 = vpop.sfrf %779
  %p781 = scmp.eq.s32.totalorder %s780, 0
  %p782 = pneg %p781
  %784 = shalt.err (%p782)
  %s785 = scalar_lea.sflag [#allocation4], 13
  %786 = vsyncmov %s785
  %s787 = vpop.sfrf %786
  %p788 = scmp.eq.s32.totalorder %s787, 0
  %p789 = pneg %p788
  %791 = shalt.err (%p789)
  %s792 = scalar_lea.sflag [#allocation4], 14
  %793 = vsyncmov %s792
  %s794 = vpop.sfrf %793
  %p795 = scmp.eq.s32.totalorder %s794, 0
  %p796 = pneg %p795
  %798 = shalt.err (%p796)
  %s799 = scalar_lea.sflag [#allocation4], 15
  %800 = vsyncmov %s799
  %s801 = vpop.sfrf %800
  %p802 = scmp.eq.s32.totalorder %s801, 0
  %p803 = pneg %p802
  %805 = shalt.err (%p803)

</llo_original>
